<compile_context>
chip_gen: v7x
topology: tpu7x:2x2x1
jax: 0.10.0
libtpu: 0.0.40
codegen_flags: <defaults>
</compile_context>

<pallas_src>
import functools
import math
import numpy as np
import jax
import jax.numpy as jnp
from jax import lax
from jax.experimental import pallas as pl
from jax.experimental.pallas import tpu as pltpu


def predict_kernel(pre_layer,
                   state_in_ref, pe_ref, cs_ref, peproj_ref, wfc_ref, prm_ref,
                   w1_ref, b1_ref, w2s_ref, b2s_ref, state_out_ref):
    """Whole PredictModule forward: recurrence runs as an in-kernel loop."""
    B, _ = state_in_ref.shape
    L, D = pe_ref.shape
    H = wfc_ref.shape[0]
    HID = w1_ref.shape[2]
    scale = 1.0 / math.sqrt(D)

    pe = pe_ref[...]                      # [L, D]   (VMEM-resident constants)
    bfc = prm_ref[0]                      # [1, D]
    gamma = prm_ref[1]                    # [1, D]
    beta = prm_ref[2]                     # [1, D]
    b1 = b1_ref[...]                      # [1, HID]
    w2s = w2s_ref[...]                    # [HID, L+HOR]  (sign folded in)
    b2s = b2s_ref[...]                    # [1,  L+HOR]   (sign folded in)

    def step(_, state):                   # state = [res_x || forecast], [B, L+HOR]
        res_x = state[:, :L]                              # [B, L]
        res_col = res_x[:, :, None]                       # [B, L, 1]

        # PositionalEncoding output (needed for the residual); dropout = id.
        q3 = res_col + pe[None, :, :]                     # [B, L, D]
        q2 = q3.reshape(B * L, D)                         # [B*L, D]

        # Multi-head attention with hoisted projections (no QKV matmul).
        attn = jnp.zeros((B * L, D), jnp.float32)
        for h in range(H):                                # static unroll, tiny H
            qh = res_col * cs_ref[0, h][None, :, :] + peproj_ref[0, h][None, :, :]
            kh = res_col * cs_ref[1, h][None, :, :] + peproj_ref[1, h][None, :, :]
            vh = res_col * cs_ref[2, h][None, :, :] + peproj_ref[2, h][None, :, :]
            s = jnp.einsum('bqd,bkd->bqk', qh, kh,
                           preferred_element_type=jnp.float32) * scale
            s = s - jnp.max(s, axis=-1, keepdims=True)    # stable softmax
            p = jnp.exp(s)
            p = p * pl.reciprocal(jnp.sum(p, axis=-1, keepdims=True), approx=True)
            oh = jnp.einsum('bqk,bkd->bqd', p, vh,
                            preferred_element_type=jnp.float32)   # [B, L, D]
            # Per-head output projection accumulate (leading-dim weight slice).
            attn = attn + jnp.dot(oh.reshape(B * L, D), wfc_ref[h],
                                  preferred_element_type=jnp.float32)
        attn = attn + bfc

        # Residual + LayerNorm(d_model), eps=1e-5, biased variance.
        out = q2 + attn
        mu = jnp.mean(out, axis=-1, keepdims=True)
        var = jnp.mean((out - mu) ** 2, axis=-1, keepdims=True)
        out = (out - mu) * lax.rsqrt(var + 1e-5)
        out = out * gamma + beta                          # [B*L, D]
        out3 = out.reshape(B, L, D)

        # linear1 as L accumulated K=D dots against w1 reshaped [L, D, HID]
        # (no VMEM staging / store->load roundtrip).
        acc = jnp.zeros((B, HID), jnp.float32)
        for l in range(L):                                # static unroll, tiny L
            acc = acc + jnp.dot(out3[:, l, :], w1_ref[l],
                                preferred_element_type=jnp.float32)
        h1 = acc + b1
        h1 = jnp.where(h1 > 0, h1, 0.01 * h1)             # LeakyReLU; dropout = id

        # linear2 with the -back/+forecast sign folded into w2s/b2s:
        # one full-tile state update, no split masked writes.
        o2s = jnp.dot(h1, w2s, preferred_element_type=jnp.float32) + b2s
        return state + o2s

    state_out_ref[...] = lax.fori_loop(0, pre_layer, step,
                                       state_in_ref[...], unroll=True)


def predict_module_forward(x, p, pre_layer, look_back, horizon):
    B, L = x.shape
    D = p['pe'].shape[1]
    HD = p['wq'].shape[1]
    H = HD // D
    HID = p['w1'].shape[1]
    NT = L + horizon

    # ---- wrapper-side weight packing (pure XLA, done once per call) ----
    def hoist(w, b):
        # projection of (res_x + pe):  res_x * colsum(w) + (pe @ w + b)
        proj = (p['pe'] @ w + b).reshape(L, H, D).transpose(1, 0, 2)   # [H, L, D]
        csum = w.sum(axis=0).reshape(H, 1, D)                          # [H, 1, D]
        return proj, csum

    pq, cq = hoist(p['wq'], p['bq'])
    pk, ck = hoist(p['wk'], p['bk'])
    pv, cv = hoist(p['wv'], p['bv'])
    peproj = jnp.stack([pq, pk, pv])                                   # [3, H, L, D]
    cs = jnp.stack([cq, ck, cv])                                       # [3, H, 1, D]

    wfc3 = p['wfc'].reshape(H, D, D)                                   # [H, D, D]
    prm = jnp.stack([p['bfc'], p['gamma'], p['beta']])[:, None, :]     # [3, 1, D]
    w1_3 = p['w1'].reshape(L, D, HID)                                  # [L, D, HID]
    b1 = p['b1'][None, :]                                              # [1, HID]

    sign = jnp.concatenate([-jnp.ones((L,), jnp.float32),
                            jnp.ones((horizon,), jnp.float32)])
    w2s = p['w2'] * sign[None, :]                                      # [HID, NT]
    b2s = (p['b2'] * sign)[None, :]                                    # [1, NT]

    state_in = jnp.concatenate([x, jnp.zeros((B, horizon), jnp.float32)], axis=1)

    args = (state_in, p['pe'], cs, peproj, wfc3, prm, w1_3, b1, w2s, b2s)

    def full_block(a):
        # Whole-array block, constant index map -> fetched once, VMEM-resident.
        return pl.BlockSpec(a.shape, lambda i, nd=a.ndim: (0,) * nd)

    grid_spec = pltpu.PrefetchScalarGridSpec(
        num_scalar_prefetch=0,
        grid=(1,),
        in_specs=[full_block(a) for a in args],
        out_specs=pl.BlockSpec((B, NT), lambda i: (0, 0)),
    )

    kernel = functools.partial(predict_kernel, pre_layer)
    state = pl.pallas_call(
        kernel,
        out_shape=jax.ShapeDtypeStruct((B, NT), jnp.float32),
        grid_spec=grid_spec,
        compiler_params=pltpu.CompilerParams(
            dimension_semantics=("arbitrary",)),
    )(*args)
    return state[:, :L], state[:, L:]


def forward_ref(x, p, pre_layer, look_back, horizon):
    """Pure-JAX reference mirroring the PyTorch forward exactly."""
    B, L = x.shape
    D = p['pe'].shape[1]
    HD = p['wq'].shape[1]
    H = HD // D
    res_x = x
    forecast = jnp.zeros((B, horizon), jnp.float32)
    for _ in range(pre_layer):
        q_in = res_x[:, :, None] + p['pe'][None]
        qf = q_in.reshape(B * L, D)
        qp = (qf @ p['wq'] + p['bq']).reshape(B, L, H, D).transpose(0, 2, 1, 3)
        kp = (qf @ p['wk'] + p['bk']).reshape(B, L, H, D).transpose(0, 2, 1, 3)
        vp = (qf @ p['wv'] + p['bv']).reshape(B, L, H, D).transpose(0, 2, 1, 3)
        s = jnp.einsum('bhqd,bhkd->bhqk', qp, kp) / math.sqrt(D)
        a = jax.nn.softmax(s, axis=-1)
        o = jnp.einsum('bhqk,bhkd->bhqd', a, vp)
        o = o.transpose(0, 2, 1, 3).reshape(B, L, H * D) @ p['wfc'] + p['bfc']
        out = q_in + o
        mu = out.mean(-1, keepdims=True)
        var = ((out - mu) ** 2).mean(-1, keepdims=True)
        out = (out - mu) / jnp.sqrt(var + 1e-5) * p['gamma'] + p['beta']
        h1 = out.reshape(B, L * D) @ p['w1'] + p['b1']
        h1 = jnp.where(h1 > 0, h1, 0.01 * h1)
        o2 = h1 @ p['w2'] + p['b2']
        z_back, z_fore = o2[:, :L], o2[:, L:]
        res_x = res_x - z_back
        forecast = forecast + z_fore
    return res_x, forecast


def init_params(key, d_model, look_back, horizon, n_heads, hidden=512):
    D, L, H = d_model, look_back, n_heads
    ks = jax.random.split(key, 12)

    def w(k, shape, fan_in):
        return jax.random.normal(k, shape, jnp.float32) / math.sqrt(fan_in)

    # positional-encoding buffer (only the first L rows are ever used)
    position = jnp.arange(L, dtype=jnp.float32)[:, None]
    div_term = jnp.exp(jnp.arange(0, D, 2, dtype=jnp.float32)
                       * -(math.log(10000.0) / D))
    pe = jnp.zeros((L, D), jnp.float32)
    pe = pe.at[:, 0::2].set(jnp.sin(position * div_term))
    pe = pe.at[:, 1::2].set(jnp.cos(position * div_term))

    return dict(
        pe=pe,
        wq=w(ks[0], (D, H * D), D), bq=0.1 * w(ks[1], (H * D,), 1.0),
        wk=w(ks[2], (D, H * D), D), bk=0.1 * w(ks[3], (H * D,), 1.0),
        wv=w(ks[4], (D, H * D), D), bv=0.1 * w(ks[5], (H * D,), 1.0),
        wfc=w(ks[6], (H * D, D), H * D), bfc=0.1 * w(ks[7], (D,), 1.0),
        gamma=jnp.ones((D,), jnp.float32), beta=jnp.zeros((D,), jnp.float32),
        w1=w(ks[8], (L * D, hidden), L * D), b1=0.1 * w(ks[9], (hidden,), 1.0),
        w2=w(ks[10], (hidden, L + horizon), hidden),
        b2=0.1 * w(ks[11], (L + horizon,), 1.0),
    )


if __name__ == "__main__":
    # d_model=32, look_back=8, horizon=4, n_heads(thetas_dim)=2, pre_layer=2
    # TODO(synk): dropout layers are identity (eval/inference semantics);
    # batching more series per call (B*L >= 128) is the biggest throughput lever.
    B, D, L, HOR, H, PRE = 2, 32, 8, 4, 2, 2

    key = jax.random.PRNGKey(0)
    k_param, k_x = jax.random.split(key)
    params = init_params(k_param, D, L, HOR, H)
    x = jax.random.normal(k_x, (B, L), jnp.float32)

    res_k, fcast_k = predict_module_forward(x, params, PRE, L, HOR)
    res_k = jax.block_until_ready(res_k)
    fcast_k = jax.block_until_ready(fcast_k)

    res_r, fcast_r = forward_ref(x, params, PRE, L, HOR)
    # Tolerance covers the EUP approximate reciprocal in the softmax and the
    # fp reassociation from the hoisted (algebraically equivalent) projections.
    assert np.allclose(np.asarray(res_k), np.asarray(res_r), atol=5e-3, rtol=5e-3)
    assert np.allclose(np.asarray(fcast_k), np.asarray(fcast_r), atol=5e-3, rtol=5e-3)

    print("KERNEL_OK")
</pallas_src>

<mosaic_0001>
module attributes {stable_mosaic.version = 11 : i64} {
  func.func @predict_kernel(%arg0: i32, %arg1: memref<2x12xf32, #tpu.memory_space<vmem>>, %arg2: memref<8x32xf32, #tpu.memory_space<vmem>>, %arg3: memref<3x2x1x32xf32, #tpu.memory_space<vmem>>, %arg4: memref<3x2x8x32xf32, #tpu.memory_space<vmem>>, %arg5: memref<2x32x32xf32, #tpu.memory_space<vmem>>, %arg6: memref<3x1x32xf32, #tpu.memory_space<vmem>>, %arg7: memref<8x32x512xf32, #tpu.memory_space<vmem>>, %arg8: memref<1x512xf32, #tpu.memory_space<vmem>>, %arg9: memref<512x12xf32, #tpu.memory_space<vmem>>, %arg10: memref<1x12xf32, #tpu.memory_space<vmem>>, %arg11: memref<2x12xf32, #tpu.memory_space<vmem>>) attributes {dimension_semantics = [#tpu.dimension_semantics<arbitrary>], iteration_bounds = array<i64: 1>, scalar_prefetch = 0 : i64, scratch_operands = 0 : i64, tpu.core_type = #tpu.core_type<tc>, window_params = [{pipeline_mode = #tpu.pipeline_mode<synchronous>, transform_indices = @transform_0, window_bounds = array<i64: 2, 12>}, {pipeline_mode = #tpu.pipeline_mode<synchronous>, transform_indices = @transform_1, window_bounds = array<i64: 8, 32>}, {pipeline_mode = #tpu.pipeline_mode<synchronous>, transform_indices = @transform_2, window_bounds = array<i64: 3, 2, 1, 32>}, {pipeline_mode = #tpu.pipeline_mode<synchronous>, transform_indices = @transform_3, window_bounds = array<i64: 3, 2, 8, 32>}, {pipeline_mode = #tpu.pipeline_mode<synchronous>, transform_indices = @transform_4, window_bounds = array<i64: 2, 32, 32>}, {pipeline_mode = #tpu.pipeline_mode<synchronous>, transform_indices = @transform_5, window_bounds = array<i64: 3, 1, 32>}, {pipeline_mode = #tpu.pipeline_mode<synchronous>, transform_indices = @transform_6, window_bounds = array<i64: 8, 32, 512>}, {pipeline_mode = #tpu.pipeline_mode<synchronous>, transform_indices = @transform_7, window_bounds = array<i64: 1, 512>}, {pipeline_mode = #tpu.pipeline_mode<synchronous>, transform_indices = @transform_8, window_bounds = array<i64: 512, 12>}, {pipeline_mode = #tpu.pipeline_mode<synchronous>, transform_indices = @transform_9, window_bounds = array<i64: 1, 12>}, {pipeline_mode = #tpu.pipeline_mode<synchronous>, transform_indices = @transform_10, window_bounds = array<i64: 2, 12>}]} {
    %c0 = arith.constant 0 : index
    %c0_0 = arith.constant 0 : index
    %0 = vector.load %arg2[%c0, %c0_0] : memref<8x32xf32, #tpu.memory_space<vmem>>, vector<8x32xf32>
    %c0_1 = arith.constant 0 : index
    %c0_2 = arith.constant 0 : index
    %c0_3 = arith.constant 0 : index
    %1 = vector.load %arg6[%c0_1, %c0_2, %c0_3] : memref<3x1x32xf32, #tpu.memory_space<vmem>>, vector<1x1x32xf32>
    %2 = vector.shape_cast %1 : vector<1x1x32xf32> to vector<1x32xf32>
    %c1 = arith.constant 1 : index
    %c0_4 = arith.constant 0 : index
    %c0_5 = arith.constant 0 : index
    %3 = vector.load %arg6[%c1, %c0_4, %c0_5] : memref<3x1x32xf32, #tpu.memory_space<vmem>>, vector<1x1x32xf32>
    %4 = vector.shape_cast %3 : vector<1x1x32xf32> to vector<1x32xf32>
    %c2 = arith.constant 2 : index
    %c0_6 = arith.constant 0 : index
    %c0_7 = arith.constant 0 : index
    %5 = vector.load %arg6[%c2, %c0_6, %c0_7] : memref<3x1x32xf32, #tpu.memory_space<vmem>>, vector<1x1x32xf32>
    %6 = vector.shape_cast %5 : vector<1x1x32xf32> to vector<1x32xf32>
    %c0_8 = arith.constant 0 : index
    %c0_9 = arith.constant 0 : index
    %7 = vector.load %arg8[%c0_8, %c0_9] : memref<1x512xf32, #tpu.memory_space<vmem>>, vector<1x512xf32>
    %c0_10 = arith.constant 0 : index
    %c0_11 = arith.constant 0 : index
    %8 = vector.load %arg9[%c0_10, %c0_11] : memref<512x12xf32, #tpu.memory_space<vmem>>, vector<512x12xf32>
    %c0_12 = arith.constant 0 : index
    %c0_13 = arith.constant 0 : index
    %9 = vector.load %arg10[%c0_12, %c0_13] : memref<1x12xf32, #tpu.memory_space<vmem>>, vector<1x12xf32>
    %c0_14 = arith.constant 0 : index
    %c0_15 = arith.constant 0 : index
    %10 = vector.load %arg1[%c0_14, %c0_15] : memref<2x12xf32, #tpu.memory_space<vmem>>, vector<2x12xf32>
    %c0_i32 = arith.constant 0 : i32
    %11 = vector.extract_strided_slice %10 {offsets = [0, 0], sizes = [2, 8], strides = [1, 1]} : vector<2x12xf32> to vector<2x8xf32>
    %12 = vector.shape_cast %11 : vector<2x8xf32> to vector<2x8x1xf32>
    %13 = vector.shape_cast %0 : vector<8x32xf32> to vector<1x8x32xf32>
    %14 = vector.broadcast %12 : vector<2x8x1xf32> to vector<2x8x32xf32>
    %15 = vector.broadcast %13 : vector<1x8x32xf32> to vector<2x8x32xf32>
    %16 = arith.addf %14, %15 : vector<2x8x32xf32>
    %17 = vector.shape_cast %16 : vector<2x8x32xf32> to vector<16x32xf32>
    %cst = arith.constant 0.000000e+00 : f32
    %18 = vector.broadcast %cst : f32 to vector<16x32xf32>
    %c0_16 = arith.constant 0 : index
    %c0_17 = arith.constant 0 : index
    %c0_18 = arith.constant 0 : index
    %c0_19 = arith.constant 0 : index
    %19 = vector.load %arg3[%c0_16, %c0_17, %c0_18, %c0_19] : memref<3x2x1x32xf32, #tpu.memory_space<vmem>>, vector<1x1x1x32xf32>
    %20 = vector.shape_cast %19 : vector<1x1x1x32xf32> to vector<1x32xf32>
    %21 = vector.shape_cast %20 : vector<1x32xf32> to vector<1x1x32xf32>
    %22 = vector.broadcast %12 : vector<2x8x1xf32> to vector<2x8x32xf32>
    %23 = vector.broadcast %21 : vector<1x1x32xf32> to vector<2x8x32xf32>
    %24 = arith.mulf %22, %23 : vector<2x8x32xf32>
    %c0_20 = arith.constant 0 : index
    %c0_21 = arith.constant 0 : index
    %c0_22 = arith.constant 0 : index
    %c0_23 = arith.constant 0 : index
    %25 = vector.load %arg4[%c0_20, %c0_21, %c0_22, %c0_23] : memref<3x2x8x32xf32, #tpu.memory_space<vmem>>, vector<1x1x8x32xf32>
    %26 = vector.shape_cast %25 : vector<1x1x8x32xf32> to vector<8x32xf32>
    %27 = vector.shape_cast %26 : vector<8x32xf32> to vector<1x8x32xf32>
    %28 = vector.broadcast %27 : vector<1x8x32xf32> to vector<2x8x32xf32>
    %29 = arith.addf %24, %28 : vector<2x8x32xf32>
    %c1_24 = arith.constant 1 : index
    %c0_25 = arith.constant 0 : index
    %c0_26 = arith.constant 0 : index
    %c0_27 = arith.constant 0 : index
    %30 = vector.load %arg3[%c1_24, %c0_25, %c0_26, %c0_27] : memref<3x2x1x32xf32, #tpu.memory_space<vmem>>, vector<1x1x1x32xf32>
    %31 = vector.shape_cast %30 : vector<1x1x1x32xf32> to vector<1x32xf32>
    %32 = vector.shape_cast %31 : vector<1x32xf32> to vector<1x1x32xf32>
    %33 = vector.broadcast %12 : vector<2x8x1xf32> to vector<2x8x32xf32>
    %34 = vector.broadcast %32 : vector<1x1x32xf32> to vector<2x8x32xf32>
    %35 = arith.mulf %33, %34 : vector<2x8x32xf32>
    %c1_28 = arith.constant 1 : index
    %c0_29 = arith.constant 0 : index
    %c0_30 = arith.constant 0 : index
    %c0_31 = arith.constant 0 : index
    %36 = vector.load %arg4[%c1_28, %c0_29, %c0_30, %c0_31] : memref<3x2x8x32xf32, #tpu.memory_space<vmem>>, vector<1x1x8x32xf32>
    %37 = vector.shape_cast %36 : vector<1x1x8x32xf32> to vector<8x32xf32>
    %38 = vector.shape_cast %37 : vector<8x32xf32> to vector<1x8x32xf32>
    %39 = vector.broadcast %38 : vector<1x8x32xf32> to vector<2x8x32xf32>
    %40 = arith.addf %35, %39 : vector<2x8x32xf32>
    %c2_32 = arith.constant 2 : index
    %c0_33 = arith.constant 0 : index
    %c0_34 = arith.constant 0 : index
    %c0_35 = arith.constant 0 : index
    %41 = vector.load %arg3[%c2_32, %c0_33, %c0_34, %c0_35] : memref<3x2x1x32xf32, #tpu.memory_space<vmem>>, vector<1x1x1x32xf32>
    %42 = vector.shape_cast %41 : vector<1x1x1x32xf32> to vector<1x32xf32>
    %43 = vector.shape_cast %42 : vector<1x32xf32> to vector<1x1x32xf32>
    %44 = vector.broadcast %12 : vector<2x8x1xf32> to vector<2x8x32xf32>
    %45 = vector.broadcast %43 : vector<1x1x32xf32> to vector<2x8x32xf32>
    %46 = arith.mulf %44, %45 : vector<2x8x32xf32>
    %c2_36 = arith.constant 2 : index
    %c0_37 = arith.constant 0 : index
    %c0_38 = arith.constant 0 : index
    %c0_39 = arith.constant 0 : index
    %47 = vector.load %arg4[%c2_36, %c0_37, %c0_38, %c0_39] : memref<3x2x8x32xf32, #tpu.memory_space<vmem>>, vector<1x1x8x32xf32>
    %48 = vector.shape_cast %47 : vector<1x1x8x32xf32> to vector<8x32xf32>
    %49 = vector.shape_cast %48 : vector<8x32xf32> to vector<1x8x32xf32>
    %50 = vector.broadcast %49 : vector<1x8x32xf32> to vector<2x8x32xf32>
    %51 = arith.addf %46, %50 : vector<2x8x32xf32>
    "tpu.trace_start"() <{level = 10 : i32, message = "bqd,bkd->bqk"}> : () -> ()
    %cst_40 = arith.constant dense<0.000000e+00> : vector<2x8x8xf32>
    %52 = tpu.matmul %29, %40, %cst_40 {dimension_numbers = #tpu.dot_dimension_numbers<[2], [2], [1], [1], [0, 0, 0, 1, 1, 1], [0], [0]>} : vector<2x8x32xf32>, vector<2x8x32xf32>, vector<2x8x8xf32> -> vector<2x8x8xf32>
    "tpu.trace_stop"() : () -> ()
    %cst_41 = arith.constant 0.176776692 : f32
    %53 = vector.broadcast %cst_41 : f32 to vector<2x8x8xf32>
    %54 = arith.mulf %52, %53 : vector<2x8x8xf32>
    %cst_42 = arith.constant dense<0xFF800000> : vector<2x8xf32>
    %55 = vector.multi_reduction <maximumf>, %54, %cst_42 [2] : vector<2x8x8xf32> to vector<2x8xf32>
    %56 = vector.shape_cast %55 : vector<2x8xf32> to vector<2x8x1xf32>
    %57 = vector.broadcast %56 : vector<2x8x1xf32> to vector<2x8x8xf32>
    %58 = arith.subf %54, %57 : vector<2x8x8xf32>
    %59 = math.exp %58 : vector<2x8x8xf32>
    %cst_43 = arith.constant dense<0.000000e+00> : vector<2x8xf32>
    %60 = vector.multi_reduction <add>, %59, %cst_43 [2] : vector<2x8x8xf32> to vector<2x8xf32>
    %61 = vector.shape_cast %60 : vector<2x8xf32> to vector<2x8x1xf32>
    %62 = tpu.reciprocal %61 {approx = true} : vector<2x8x1xf32> -> vector<2x8x1xf32>
    %63 = vector.broadcast %62 : vector<2x8x1xf32> to vector<2x8x8xf32>
    %64 = arith.mulf %59, %63 : vector<2x8x8xf32>
    "tpu.trace_start"() <{level = 10 : i32, message = "bqk,bkd->bqd"}> : () -> ()
    %cst_44 = arith.constant dense<0.000000e+00> : vector<2x8x32xf32>
    %65 = tpu.matmul %64, %51, %cst_44 {dimension_numbers = #tpu.dot_dimension_numbers<[2], [1], [1], [2], [0, 0, 0, 1, 1, 2], [0], [0]>} : vector<2x8x8xf32>, vector<2x8x32xf32>, vector<2x8x32xf32> -> vector<2x8x32xf32>
    "tpu.trace_stop"() : () -> ()
    %66 = vector.shape_cast %65 : vector<2x8x32xf32> to vector<16x32xf32>
    %c0_45 = arith.constant 0 : index
    %c0_46 = arith.constant 0 : index
    %c0_47 = arith.constant 0 : index
    %67 = vector.load %arg5[%c0_45, %c0_46, %c0_47] : memref<2x32x32xf32, #tpu.memory_space<vmem>>, vector<1x32x32xf32>
    %68 = vector.shape_cast %67 : vector<1x32x32xf32> to vector<32x32xf32>
    %cst_48 = arith.constant dense<0.000000e+00> : vector<16x32xf32>
    %69 = tpu.matmul %66, %68, %cst_48 {dimension_numbers = #tpu.dot_dimension_numbers<[1], [0], [0], [1], [0, 0, 1, 1], [], []>} : vector<16x32xf32>, vector<32x32xf32>, vector<16x32xf32> -> vector<16x32xf32>
    %70 = arith.addf %18, %69 : vector<16x32xf32>
    %c0_49 = arith.constant 0 : index
    %c1_50 = arith.constant 1 : index
    %c0_51 = arith.constant 0 : index
    %c0_52 = arith.constant 0 : index
    %71 = vector.load %arg3[%c0_49, %c1_50, %c0_51, %c0_52] : memref<3x2x1x32xf32, #tpu.memory_space<vmem>>, vector<1x1x1x32xf32>
    %72 = vector.shape_cast %71 : vector<1x1x1x32xf32> to vector<1x32xf32>
    %73 = vector.shape_cast %72 : vector<1x32xf32> to vector<1x1x32xf32>
    %74 = vector.broadcast %12 : vector<2x8x1xf32> to vector<2x8x32xf32>
    %75 = vector.broadcast %73 : vector<1x1x32xf32> to vector<2x8x32xf32>
    %76 = arith.mulf %74, %75 : vector<2x8x32xf32>
    %c0_53 = arith.constant 0 : index
    %c1_54 = arith.constant 1 : index
    %c0_55 = arith.constant 0 : index
    %c0_56 = arith.constant 0 : index
    %77 = vector.load %arg4[%c0_53, %c1_54, %c0_55, %c0_56] : memref<3x2x8x32xf32, #tpu.memory_space<vmem>>, vector<1x1x8x32xf32>
    %78 = vector.shape_cast %77 : vector<1x1x8x32xf32> to vector<8x32xf32>
    %79 = vector.shape_cast %78 : vector<8x32xf32> to vector<1x8x32xf32>
    %80 = vector.broadcast %79 : vector<1x8x32xf32> to vector<2x8x32xf32>
    %81 = arith.addf %76, %80 : vector<2x8x32xf32>
    %c1_57 = arith.constant 1 : index
    %c1_58 = arith.constant 1 : index
    %c0_59 = arith.constant 0 : index
    %c0_60 = arith.constant 0 : index
    %82 = vector.load %arg3[%c1_57, %c1_58, %c0_59, %c0_60] : memref<3x2x1x32xf32, #tpu.memory_space<vmem>>, vector<1x1x1x32xf32>
    %83 = vector.shape_cast %82 : vector<1x1x1x32xf32> to vector<1x32xf32>
    %84 = vector.shape_cast %83 : vector<1x32xf32> to vector<1x1x32xf32>
    %85 = vector.broadcast %12 : vector<2x8x1xf32> to vector<2x8x32xf32>
    %86 = vector.broadcast %84 : vector<1x1x32xf32> to vector<2x8x32xf32>
    %87 = arith.mulf %85, %86 : vector<2x8x32xf32>
    %c1_61 = arith.constant 1 : index
    %c1_62 = arith.constant 1 : index
    %c0_63 = arith.constant 0 : index
    %c0_64 = arith.constant 0 : index
    %88 = vector.load %arg4[%c1_61, %c1_62, %c0_63, %c0_64] : memref<3x2x8x32xf32, #tpu.memory_space<vmem>>, vector<1x1x8x32xf32>
    %89 = vector.shape_cast %88 : vector<1x1x8x32xf32> to vector<8x32xf32>
    %90 = vector.shape_cast %89 : vector<8x32xf32> to vector<1x8x32xf32>
    %91 = vector.broadcast %90 : vector<1x8x32xf32> to vector<2x8x32xf32>
    %92 = arith.addf %87, %91 : vector<2x8x32xf32>
    %c2_65 = arith.constant 2 : index
    %c1_66 = arith.constant 1 : index
    %c0_67 = arith.constant 0 : index
    %c0_68 = arith.constant 0 : index
    %93 = vector.load %arg3[%c2_65, %c1_66, %c0_67, %c0_68] : memref<3x2x1x32xf32, #tpu.memory_space<vmem>>, vector<1x1x1x32xf32>
    %94 = vector.shape_cast %93 : vector<1x1x1x32xf32> to vector<1x32xf32>
    %95 = vector.shape_cast %94 : vector<1x32xf32> to vector<1x1x32xf32>
    %96 = vector.broadcast %12 : vector<2x8x1xf32> to vector<2x8x32xf32>
    %97 = vector.broadcast %95 : vector<1x1x32xf32> to vector<2x8x32xf32>
    %98 = arith.mulf %96, %97 : vector<2x8x32xf32>
    %c2_69 = arith.constant 2 : index
    %c1_70 = arith.constant 1 : index
    %c0_71 = arith.constant 0 : index
    %c0_72 = arith.constant 0 : index
    %99 = vector.load %arg4[%c2_69, %c1_70, %c0_71, %c0_72] : memref<3x2x8x32xf32, #tpu.memory_space<vmem>>, vector<1x1x8x32xf32>
    %100 = vector.shape_cast %99 : vector<1x1x8x32xf32> to vector<8x32xf32>
    %101 = vector.shape_cast %100 : vector<8x32xf32> to vector<1x8x32xf32>
    %102 = vector.broadcast %101 : vector<1x8x32xf32> to vector<2x8x32xf32>
    %103 = arith.addf %98, %102 : vector<2x8x32xf32>
    "tpu.trace_start"() <{level = 10 : i32, message = "bqd,bkd->bqk"}> : () -> ()
    %cst_73 = arith.constant dense<0.000000e+00> : vector<2x8x8xf32>
    %104 = tpu.matmul %81, %92, %cst_73 {dimension_numbers = #tpu.dot_dimension_numbers<[2], [2], [1], [1], [0, 0, 0, 1, 1, 1], [0], [0]>} : vector<2x8x32xf32>, vector<2x8x32xf32>, vector<2x8x8xf32> -> vector<2x8x8xf32>
    "tpu.trace_stop"() : () -> ()
    %cst_74 = arith.constant 0.176776692 : f32
    %105 = vector.broadcast %cst_74 : f32 to vector<2x8x8xf32>
    %106 = arith.mulf %104, %105 : vector<2x8x8xf32>
    %cst_75 = arith.constant dense<0xFF800000> : vector<2x8xf32>
    %107 = vector.multi_reduction <maximumf>, %106, %cst_75 [2] : vector<2x8x8xf32> to vector<2x8xf32>
    %108 = vector.shape_cast %107 : vector<2x8xf32> to vector<2x8x1xf32>
    %109 = vector.broadcast %108 : vector<2x8x1xf32> to vector<2x8x8xf32>
    %110 = arith.subf %106, %109 : vector<2x8x8xf32>
    %111 = math.exp %110 : vector<2x8x8xf32>
    %cst_76 = arith.constant dense<0.000000e+00> : vector<2x8xf32>
    %112 = vector.multi_reduction <add>, %111, %cst_76 [2] : vector<2x8x8xf32> to vector<2x8xf32>
    %113 = vector.shape_cast %112 : vector<2x8xf32> to vector<2x8x1xf32>
    %114 = tpu.reciprocal %113 {approx = true} : vector<2x8x1xf32> -> vector<2x8x1xf32>
    %115 = vector.broadcast %114 : vector<2x8x1xf32> to vector<2x8x8xf32>
    %116 = arith.mulf %111, %115 : vector<2x8x8xf32>
    "tpu.trace_start"() <{level = 10 : i32, message = "bqk,bkd->bqd"}> : () -> ()
    %cst_77 = arith.constant dense<0.000000e+00> : vector<2x8x32xf32>
    %117 = tpu.matmul %116, %103, %cst_77 {dimension_numbers = #tpu.dot_dimension_numbers<[2], [1], [1], [2], [0, 0, 0, 1, 1, 2], [0], [0]>} : vector<2x8x8xf32>, vector<2x8x32xf32>, vector<2x8x32xf32> -> vector<2x8x32xf32>
    "tpu.trace_stop"() : () -> ()
    %118 = vector.shape_cast %117 : vector<2x8x32xf32> to vector<16x32xf32>
    %c1_78 = arith.constant 1 : index
    %c0_79 = arith.constant 0 : index
    %c0_80 = arith.constant 0 : index
    %119 = vector.load %arg5[%c1_78, %c0_79, %c0_80] : memref<2x32x32xf32, #tpu.memory_space<vmem>>, vector<1x32x32xf32>
    %120 = vector.shape_cast %119 : vector<1x32x32xf32> to vector<32x32xf32>
    %cst_81 = arith.constant dense<0.000000e+00> : vector<16x32xf32>
    %121 = tpu.matmul %118, %120, %cst_81 {dimension_numbers = #tpu.dot_dimension_numbers<[1], [0], [0], [1], [0, 0, 1, 1], [], []>} : vector<16x32xf32>, vector<32x32xf32>, vector<16x32xf32> -> vector<16x32xf32>
    %122 = arith.addf %70, %121 : vector<16x32xf32>
    %123 = vector.broadcast %2 : vector<1x32xf32> to vector<16x32xf32>
    %124 = arith.addf %122, %123 : vector<16x32xf32>
    %125 = arith.addf %17, %124 : vector<16x32xf32>
    %cst_82 = arith.constant dense<0.000000e+00> : vector<16xf32>
    %126 = vector.multi_reduction <add>, %125, %cst_82 [1] : vector<16x32xf32> to vector<16xf32>
    %127 = vector.shape_cast %126 : vector<16xf32> to vector<16x1xf32>
    %cst_83 = arith.constant 3.200000e+01 : f32
    %128 = vector.broadcast %cst_83 : f32 to vector<16x1xf32>
    %129 = arith.divf %127, %128 : vector<16x1xf32>
    %130 = vector.broadcast %129 : vector<16x1xf32> to vector<16x32xf32>
    %131 = arith.subf %125, %130 : vector<16x32xf32>
    %132 = arith.mulf %131, %131 : vector<16x32xf32>
    %cst_84 = arith.constant dense<0.000000e+00> : vector<16xf32>
    %133 = vector.multi_reduction <add>, %132, %cst_84 [1] : vector<16x32xf32> to vector<16xf32>
    %134 = vector.shape_cast %133 : vector<16xf32> to vector<16x1xf32>
    %cst_85 = arith.constant 3.200000e+01 : f32
    %135 = vector.broadcast %cst_85 : f32 to vector<16x1xf32>
    %136 = arith.divf %134, %135 : vector<16x1xf32>
    %137 = vector.broadcast %129 : vector<16x1xf32> to vector<16x32xf32>
    %138 = arith.subf %125, %137 : vector<16x32xf32>
    %cst_86 = arith.constant 9.99999974E-6 : f32
    %139 = vector.broadcast %cst_86 : f32 to vector<16x1xf32>
    %140 = arith.addf %136, %139 : vector<16x1xf32>
    %141 = math.rsqrt %140 : vector<16x1xf32>
    %142 = vector.broadcast %141 : vector<16x1xf32> to vector<16x32xf32>
    %143 = arith.mulf %138, %142 : vector<16x32xf32>
    %144 = vector.broadcast %4 : vector<1x32xf32> to vector<16x32xf32>
    %145 = arith.mulf %143, %144 : vector<16x32xf32>
    %146 = vector.broadcast %6 : vector<1x32xf32> to vector<16x32xf32>
    %147 = arith.addf %145, %146 : vector<16x32xf32>
    %148 = vector.shape_cast %147 : vector<16x32xf32> to vector<2x8x32xf32>
    %cst_87 = arith.constant 0.000000e+00 : f32
    %149 = vector.broadcast %cst_87 : f32 to vector<2x512xf32>
    %150 = vector.extract_strided_slice %148 {offsets = [0, 0, 0], sizes = [2, 1, 32], strides = [1, 1, 1]} : vector<2x8x32xf32> to vector<2x1x32xf32>
    %151 = vector.shape_cast %150 : vector<2x1x32xf32> to vector<2x32xf32>
    %c0_88 = arith.constant 0 : index
    %c0_89 = arith.constant 0 : index
    %c0_90 = arith.constant 0 : index
    %152 = vector.load %arg7[%c0_88, %c0_89, %c0_90] : memref<8x32x512xf32, #tpu.memory_space<vmem>>, vector<1x32x512xf32>
    %153 = vector.shape_cast %152 : vector<1x32x512xf32> to vector<32x512xf32>
    %cst_91 = arith.constant dense<0.000000e+00> : vector<2x512xf32>
    %154 = tpu.matmul %151, %153, %cst_91 {dimension_numbers = #tpu.dot_dimension_numbers<[1], [0], [0], [1], [0, 0, 1, 1], [], []>} : vector<2x32xf32>, vector<32x512xf32>, vector<2x512xf32> -> vector<2x512xf32>
    %155 = arith.addf %149, %154 : vector<2x512xf32>
    %156 = vector.extract_strided_slice %148 {offsets = [0, 1, 0], sizes = [2, 1, 32], strides = [1, 1, 1]} : vector<2x8x32xf32> to vector<2x1x32xf32>
    %157 = vector.shape_cast %156 : vector<2x1x32xf32> to vector<2x32xf32>
    %c1_92 = arith.constant 1 : index
    %c0_93 = arith.constant 0 : index
    %c0_94 = arith.constant 0 : index
    %158 = vector.load %arg7[%c1_92, %c0_93, %c0_94] : memref<8x32x512xf32, #tpu.memory_space<vmem>>, vector<1x32x512xf32>
    %159 = vector.shape_cast %158 : vector<1x32x512xf32> to vector<32x512xf32>
    %cst_95 = arith.constant dense<0.000000e+00> : vector<2x512xf32>
    %160 = tpu.matmul %157, %159, %cst_95 {dimension_numbers = #tpu.dot_dimension_numbers<[1], [0], [0], [1], [0, 0, 1, 1], [], []>} : vector<2x32xf32>, vector<32x512xf32>, vector<2x512xf32> -> vector<2x512xf32>
    %161 = arith.addf %155, %160 : vector<2x512xf32>
    %162 = vector.extract_strided_slice %148 {offsets = [0, 2, 0], sizes = [2, 1, 32], strides = [1, 1, 1]} : vector<2x8x32xf32> to vector<2x1x32xf32>
    %163 = vector.shape_cast %162 : vector<2x1x32xf32> to vector<2x32xf32>
    %c2_96 = arith.constant 2 : index
    %c0_97 = arith.constant 0 : index
    %c0_98 = arith.constant 0 : index
    %164 = vector.load %arg7[%c2_96, %c0_97, %c0_98] : memref<8x32x512xf32, #tpu.memory_space<vmem>>, vector<1x32x512xf32>
    %165 = vector.shape_cast %164 : vector<1x32x512xf32> to vector<32x512xf32>
    %cst_99 = arith.constant dense<0.000000e+00> : vector<2x512xf32>
    %166 = tpu.matmul %163, %165, %cst_99 {dimension_numbers = #tpu.dot_dimension_numbers<[1], [0], [0], [1], [0, 0, 1, 1], [], []>} : vector<2x32xf32>, vector<32x512xf32>, vector<2x512xf32> -> vector<2x512xf32>
    %167 = arith.addf %161, %166 : vector<2x512xf32>
    %168 = vector.extract_strided_slice %148 {offsets = [0, 3, 0], sizes = [2, 1, 32], strides = [1, 1, 1]} : vector<2x8x32xf32> to vector<2x1x32xf32>
    %169 = vector.shape_cast %168 : vector<2x1x32xf32> to vector<2x32xf32>
    %c3 = arith.constant 3 : index
    %c0_100 = arith.constant 0 : index
    %c0_101 = arith.constant 0 : index
    %170 = vector.load %arg7[%c3, %c0_100, %c0_101] : memref<8x32x512xf32, #tpu.memory_space<vmem>>, vector<1x32x512xf32>
    %171 = vector.shape_cast %170 : vector<1x32x512xf32> to vector<32x512xf32>
    %cst_102 = arith.constant dense<0.000000e+00> : vector<2x512xf32>
    %172 = tpu.matmul %169, %171, %cst_102 {dimension_numbers = #tpu.dot_dimension_numbers<[1], [0], [0], [1], [0, 0, 1, 1], [], []>} : vector<2x32xf32>, vector<32x512xf32>, vector<2x512xf32> -> vector<2x512xf32>
    %173 = arith.addf %167, %172 : vector<2x512xf32>
    %174 = vector.extract_strided_slice %148 {offsets = [0, 4, 0], sizes = [2, 1, 32], strides = [1, 1, 1]} : vector<2x8x32xf32> to vector<2x1x32xf32>
    %175 = vector.shape_cast %174 : vector<2x1x32xf32> to vector<2x32xf32>
    %c4 = arith.constant 4 : index
    %c0_103 = arith.constant 0 : index
    %c0_104 = arith.constant 0 : index
    %176 = vector.load %arg7[%c4, %c0_103, %c0_104] : memref<8x32x512xf32, #tpu.memory_space<vmem>>, vector<1x32x512xf32>
    %177 = vector.shape_cast %176 : vector<1x32x512xf32> to vector<32x512xf32>
    %cst_105 = arith.constant dense<0.000000e+00> : vector<2x512xf32>
    %178 = tpu.matmul %175, %177, %cst_105 {dimension_numbers = #tpu.dot_dimension_numbers<[1], [0], [0], [1], [0, 0, 1, 1], [], []>} : vector<2x32xf32>, vector<32x512xf32>, vector<2x512xf32> -> vector<2x512xf32>
    %179 = arith.addf %173, %178 : vector<2x512xf32>
    %180 = vector.extract_strided_slice %148 {offsets = [0, 5, 0], sizes = [2, 1, 32], strides = [1, 1, 1]} : vector<2x8x32xf32> to vector<2x1x32xf32>
    %181 = vector.shape_cast %180 : vector<2x1x32xf32> to vector<2x32xf32>
    %c5 = arith.constant 5 : index
    %c0_106 = arith.constant 0 : index
    %c0_107 = arith.constant 0 : index
    %182 = vector.load %arg7[%c5, %c0_106, %c0_107] : memref<8x32x512xf32, #tpu.memory_space<vmem>>, vector<1x32x512xf32>
    %183 = vector.shape_cast %182 : vector<1x32x512xf32> to vector<32x512xf32>
    %cst_108 = arith.constant dense<0.000000e+00> : vector<2x512xf32>
    %184 = tpu.matmul %181, %183, %cst_108 {dimension_numbers = #tpu.dot_dimension_numbers<[1], [0], [0], [1], [0, 0, 1, 1], [], []>} : vector<2x32xf32>, vector<32x512xf32>, vector<2x512xf32> -> vector<2x512xf32>
    %185 = arith.addf %179, %184 : vector<2x512xf32>
    %186 = vector.extract_strided_slice %148 {offsets = [0, 6, 0], sizes = [2, 1, 32], strides = [1, 1, 1]} : vector<2x8x32xf32> to vector<2x1x32xf32>
    %187 = vector.shape_cast %186 : vector<2x1x32xf32> to vector<2x32xf32>
    %c6 = arith.constant 6 : index
    %c0_109 = arith.constant 0 : index
    %c0_110 = arith.constant 0 : index
    %188 = vector.load %arg7[%c6, %c0_109, %c0_110] : memref<8x32x512xf32, #tpu.memory_space<vmem>>, vector<1x32x512xf32>
    %189 = vector.shape_cast %188 : vector<1x32x512xf32> to vector<32x512xf32>
    %cst_111 = arith.constant dense<0.000000e+00> : vector<2x512xf32>
    %190 = tpu.matmul %187, %189, %cst_111 {dimension_numbers = #tpu.dot_dimension_numbers<[1], [0], [0], [1], [0, 0, 1, 1], [], []>} : vector<2x32xf32>, vector<32x512xf32>, vector<2x512xf32> -> vector<2x512xf32>
    %191 = arith.addf %185, %190 : vector<2x512xf32>
    %192 = vector.extract_strided_slice %148 {offsets = [0, 7, 0], sizes = [2, 1, 32], strides = [1, 1, 1]} : vector<2x8x32xf32> to vector<2x1x32xf32>
    %193 = vector.shape_cast %192 : vector<2x1x32xf32> to vector<2x32xf32>
    %c7 = arith.constant 7 : index
    %c0_112 = arith.constant 0 : index
    %c0_113 = arith.constant 0 : index
    %194 = vector.load %arg7[%c7, %c0_112, %c0_113] : memref<8x32x512xf32, #tpu.memory_space<vmem>>, vector<1x32x512xf32>
    %195 = vector.shape_cast %194 : vector<1x32x512xf32> to vector<32x512xf32>
    %cst_114 = arith.constant dense<0.000000e+00> : vector<2x512xf32>
    %196 = tpu.matmul %193, %195, %cst_114 {dimension_numbers = #tpu.dot_dimension_numbers<[1], [0], [0], [1], [0, 0, 1, 1], [], []>} : vector<2x32xf32>, vector<32x512xf32>, vector<2x512xf32> -> vector<2x512xf32>
    %197 = arith.addf %191, %196 : vector<2x512xf32>
    %198 = vector.broadcast %7 : vector<1x512xf32> to vector<2x512xf32>
    %199 = arith.addf %197, %198 : vector<2x512xf32>
    %cst_115 = arith.constant 0.000000e+00 : f32
    %200 = vector.broadcast %cst_115 : f32 to vector<2x512xf32>
    %201 = arith.cmpf ogt, %199, %200 : vector<2x512xf32>
    %cst_116 = arith.constant 0.00999999977 : f32
    %202 = vector.broadcast %cst_116 : f32 to vector<2x512xf32>
    %203 = arith.mulf %202, %199 : vector<2x512xf32>
    %204 = arith.select %201, %199, %203 : vector<2x512xi1>, vector<2x512xf32>
    %cst_117 = arith.constant dense<0.000000e+00> : vector<2x12xf32>
    %205 = tpu.matmul %204, %8, %cst_117 {dimension_numbers = #tpu.dot_dimension_numbers<[1], [0], [0], [1], [0, 0, 1, 1], [], []>} : vector<2x512xf32>, vector<512x12xf32>, vector<2x12xf32> -> vector<2x12xf32>
    %206 = vector.broadcast %9 : vector<1x12xf32> to vector<2x12xf32>
    %207 = arith.addf %205, %206 : vector<2x12xf32>
    %208 = arith.addf %10, %207 : vector<2x12xf32>
    %c1_i32 = arith.constant 1 : i32
    %209 = vector.extract_strided_slice %208 {offsets = [0, 0], sizes = [2, 8], strides = [1, 1]} : vector<2x12xf32> to vector<2x8xf32>
    %210 = vector.shape_cast %209 : vector<2x8xf32> to vector<2x8x1xf32>
    %211 = vector.shape_cast %0 : vector<8x32xf32> to vector<1x8x32xf32>
    %212 = vector.broadcast %210 : vector<2x8x1xf32> to vector<2x8x32xf32>
    %213 = vector.broadcast %211 : vector<1x8x32xf32> to vector<2x8x32xf32>
    %214 = arith.addf %212, %213 : vector<2x8x32xf32>
    %215 = vector.shape_cast %214 : vector<2x8x32xf32> to vector<16x32xf32>
    %cst_118 = arith.constant 0.000000e+00 : f32
    %216 = vector.broadcast %cst_118 : f32 to vector<16x32xf32>
    %c0_119 = arith.constant 0 : index
    %c0_120 = arith.constant 0 : index
    %c0_121 = arith.constant 0 : index
    %c0_122 = arith.constant 0 : index
    %217 = vector.load %arg3[%c0_119, %c0_120, %c0_121, %c0_122] : memref<3x2x1x32xf32, #tpu.memory_space<vmem>>, vector<1x1x1x32xf32>
    %218 = vector.shape_cast %217 : vector<1x1x1x32xf32> to vector<1x32xf32>
    %219 = vector.shape_cast %218 : vector<1x32xf32> to vector<1x1x32xf32>
    %220 = vector.broadcast %210 : vector<2x8x1xf32> to vector<2x8x32xf32>
    %221 = vector.broadcast %219 : vector<1x1x32xf32> to vector<2x8x32xf32>
    %222 = arith.mulf %220, %221 : vector<2x8x32xf32>
    %c0_123 = arith.constant 0 : index
    %c0_124 = arith.constant 0 : index
    %c0_125 = arith.constant 0 : index
    %c0_126 = arith.constant 0 : index
    %223 = vector.load %arg4[%c0_123, %c0_124, %c0_125, %c0_126] : memref<3x2x8x32xf32, #tpu.memory_space<vmem>>, vector<1x1x8x32xf32>
    %224 = vector.shape_cast %223 : vector<1x1x8x32xf32> to vector<8x32xf32>
    %225 = vector.shape_cast %224 : vector<8x32xf32> to vector<1x8x32xf32>
    %226 = vector.broadcast %225 : vector<1x8x32xf32> to vector<2x8x32xf32>
    %227 = arith.addf %222, %226 : vector<2x8x32xf32>
    %c1_127 = arith.constant 1 : index
    %c0_128 = arith.constant 0 : index
    %c0_129 = arith.constant 0 : index
    %c0_130 = arith.constant 0 : index
    %228 = vector.load %arg3[%c1_127, %c0_128, %c0_129, %c0_130] : memref<3x2x1x32xf32, #tpu.memory_space<vmem>>, vector<1x1x1x32xf32>
    %229 = vector.shape_cast %228 : vector<1x1x1x32xf32> to vector<1x32xf32>
    %230 = vector.shape_cast %229 : vector<1x32xf32> to vector<1x1x32xf32>
    %231 = vector.broadcast %210 : vector<2x8x1xf32> to vector<2x8x32xf32>
    %232 = vector.broadcast %230 : vector<1x1x32xf32> to vector<2x8x32xf32>
    %233 = arith.mulf %231, %232 : vector<2x8x32xf32>
    %c1_131 = arith.constant 1 : index
    %c0_132 = arith.constant 0 : index
    %c0_133 = arith.constant 0 : index
    %c0_134 = arith.constant 0 : index
    %234 = vector.load %arg4[%c1_131, %c0_132, %c0_133, %c0_134] : memref<3x2x8x32xf32, #tpu.memory_space<vmem>>, vector<1x1x8x32xf32>
    %235 = vector.shape_cast %234 : vector<1x1x8x32xf32> to vector<8x32xf32>
    %236 = vector.shape_cast %235 : vector<8x32xf32> to vector<1x8x32xf32>
    %237 = vector.broadcast %236 : vector<1x8x32xf32> to vector<2x8x32xf32>
    %238 = arith.addf %233, %237 : vector<2x8x32xf32>
    %c2_135 = arith.constant 2 : index
    %c0_136 = arith.constant 0 : index
    %c0_137 = arith.constant 0 : index
    %c0_138 = arith.constant 0 : index
    %239 = vector.load %arg3[%c2_135, %c0_136, %c0_137, %c0_138] : memref<3x2x1x32xf32, #tpu.memory_space<vmem>>, vector<1x1x1x32xf32>
    %240 = vector.shape_cast %239 : vector<1x1x1x32xf32> to vector<1x32xf32>
    %241 = vector.shape_cast %240 : vector<1x32xf32> to vector<1x1x32xf32>
    %242 = vector.broadcast %210 : vector<2x8x1xf32> to vector<2x8x32xf32>
    %243 = vector.broadcast %241 : vector<1x1x32xf32> to vector<2x8x32xf32>
    %244 = arith.mulf %242, %243 : vector<2x8x32xf32>
    %c2_139 = arith.constant 2 : index
    %c0_140 = arith.constant 0 : index
    %c0_141 = arith.constant 0 : index
    %c0_142 = arith.constant 0 : index
    %245 = vector.load %arg4[%c2_139, %c0_140, %c0_141, %c0_142] : memref<3x2x8x32xf32, #tpu.memory_space<vmem>>, vector<1x1x8x32xf32>
    %246 = vector.shape_cast %245 : vector<1x1x8x32xf32> to vector<8x32xf32>
    %247 = vector.shape_cast %246 : vector<8x32xf32> to vector<1x8x32xf32>
    %248 = vector.broadcast %247 : vector<1x8x32xf32> to vector<2x8x32xf32>
    %249 = arith.addf %244, %248 : vector<2x8x32xf32>
    "tpu.trace_start"() <{level = 10 : i32, message = "bqd,bkd->bqk"}> : () -> ()
    %cst_143 = arith.constant dense<0.000000e+00> : vector<2x8x8xf32>
    %250 = tpu.matmul %227, %238, %cst_143 {dimension_numbers = #tpu.dot_dimension_numbers<[2], [2], [1], [1], [0, 0, 0, 1, 1, 1], [0], [0]>} : vector<2x8x32xf32>, vector<2x8x32xf32>, vector<2x8x8xf32> -> vector<2x8x8xf32>
    "tpu.trace_stop"() : () -> ()
    %cst_144 = arith.constant 0.176776692 : f32
    %251 = vector.broadcast %cst_144 : f32 to vector<2x8x8xf32>
    %252 = arith.mulf %250, %251 : vector<2x8x8xf32>
    %cst_145 = arith.constant dense<0xFF800000> : vector<2x8xf32>
    %253 = vector.multi_reduction <maximumf>, %252, %cst_145 [2] : vector<2x8x8xf32> to vector<2x8xf32>
    %254 = vector.shape_cast %253 : vector<2x8xf32> to vector<2x8x1xf32>
    %255 = vector.broadcast %254 : vector<2x8x1xf32> to vector<2x8x8xf32>
    %256 = arith.subf %252, %255 : vector<2x8x8xf32>
    %257 = math.exp %256 : vector<2x8x8xf32>
    %cst_146 = arith.constant dense<0.000000e+00> : vector<2x8xf32>
    %258 = vector.multi_reduction <add>, %257, %cst_146 [2] : vector<2x8x8xf32> to vector<2x8xf32>
    %259 = vector.shape_cast %258 : vector<2x8xf32> to vector<2x8x1xf32>
    %260 = tpu.reciprocal %259 {approx = true} : vector<2x8x1xf32> -> vector<2x8x1xf32>
    %261 = vector.broadcast %260 : vector<2x8x1xf32> to vector<2x8x8xf32>
    %262 = arith.mulf %257, %261 : vector<2x8x8xf32>
    "tpu.trace_start"() <{level = 10 : i32, message = "bqk,bkd->bqd"}> : () -> ()
    %cst_147 = arith.constant dense<0.000000e+00> : vector<2x8x32xf32>
    %263 = tpu.matmul %262, %249, %cst_147 {dimension_numbers = #tpu.dot_dimension_numbers<[2], [1], [1], [2], [0, 0, 0, 1, 1, 2], [0], [0]>} : vector<2x8x8xf32>, vector<2x8x32xf32>, vector<2x8x32xf32> -> vector<2x8x32xf32>
    "tpu.trace_stop"() : () -> ()
    %264 = vector.shape_cast %263 : vector<2x8x32xf32> to vector<16x32xf32>
    %c0_148 = arith.constant 0 : index
    %c0_149 = arith.constant 0 : index
    %c0_150 = arith.constant 0 : index
    %265 = vector.load %arg5[%c0_148, %c0_149, %c0_150] : memref<2x32x32xf32, #tpu.memory_space<vmem>>, vector<1x32x32xf32>
    %266 = vector.shape_cast %265 : vector<1x32x32xf32> to vector<32x32xf32>
    %cst_151 = arith.constant dense<0.000000e+00> : vector<16x32xf32>
    %267 = tpu.matmul %264, %266, %cst_151 {dimension_numbers = #tpu.dot_dimension_numbers<[1], [0], [0], [1], [0, 0, 1, 1], [], []>} : vector<16x32xf32>, vector<32x32xf32>, vector<16x32xf32> -> vector<16x32xf32>
    %268 = arith.addf %216, %267 : vector<16x32xf32>
    %c0_152 = arith.constant 0 : index
    %c1_153 = arith.constant 1 : index
    %c0_154 = arith.constant 0 : index
    %c0_155 = arith.constant 0 : index
    %269 = vector.load %arg3[%c0_152, %c1_153, %c0_154, %c0_155] : memref<3x2x1x32xf32, #tpu.memory_space<vmem>>, vector<1x1x1x32xf32>
    %270 = vector.shape_cast %269 : vector<1x1x1x32xf32> to vector<1x32xf32>
    %271 = vector.shape_cast %270 : vector<1x32xf32> to vector<1x1x32xf32>
    %272 = vector.broadcast %210 : vector<2x8x1xf32> to vector<2x8x32xf32>
    %273 = vector.broadcast %271 : vector<1x1x32xf32> to vector<2x8x32xf32>
    %274 = arith.mulf %272, %273 : vector<2x8x32xf32>
    %c0_156 = arith.constant 0 : index
    %c1_157 = arith.constant 1 : index
    %c0_158 = arith.constant 0 : index
    %c0_159 = arith.constant 0 : index
    %275 = vector.load %arg4[%c0_156, %c1_157, %c0_158, %c0_159] : memref<3x2x8x32xf32, #tpu.memory_space<vmem>>, vector<1x1x8x32xf32>
    %276 = vector.shape_cast %275 : vector<1x1x8x32xf32> to vector<8x32xf32>
    %277 = vector.shape_cast %276 : vector<8x32xf32> to vector<1x8x32xf32>
    %278 = vector.broadcast %277 : vector<1x8x32xf32> to vector<2x8x32xf32>
    %279 = arith.addf %274, %278 : vector<2x8x32xf32>
    %c1_160 = arith.constant 1 : index
    %c1_161 = arith.constant 1 : index
    %c0_162 = arith.constant 0 : index
    %c0_163 = arith.constant 0 : index
    %280 = vector.load %arg3[%c1_160, %c1_161, %c0_162, %c0_163] : memref<3x2x1x32xf32, #tpu.memory_space<vmem>>, vector<1x1x1x32xf32>
    %281 = vector.shape_cast %280 : vector<1x1x1x32xf32> to vector<1x32xf32>
    %282 = vector.shape_cast %281 : vector<1x32xf32> to vector<1x1x32xf32>
    %283 = vector.broadcast %210 : vector<2x8x1xf32> to vector<2x8x32xf32>
    %284 = vector.broadcast %282 : vector<1x1x32xf32> to vector<2x8x32xf32>
    %285 = arith.mulf %283, %284 : vector<2x8x32xf32>
    %c1_164 = arith.constant 1 : index
    %c1_165 = arith.constant 1 : index
    %c0_166 = arith.constant 0 : index
    %c0_167 = arith.constant 0 : index
    %286 = vector.load %arg4[%c1_164, %c1_165, %c0_166, %c0_167] : memref<3x2x8x32xf32, #tpu.memory_space<vmem>>, vector<1x1x8x32xf32>
    %287 = vector.shape_cast %286 : vector<1x1x8x32xf32> to vector<8x32xf32>
    %288 = vector.shape_cast %287 : vector<8x32xf32> to vector<1x8x32xf32>
    %289 = vector.broadcast %288 : vector<1x8x32xf32> to vector<2x8x32xf32>
    %290 = arith.addf %285, %289 : vector<2x8x32xf32>
    %c2_168 = arith.constant 2 : index
    %c1_169 = arith.constant 1 : index
    %c0_170 = arith.constant 0 : index
    %c0_171 = arith.constant 0 : index
    %291 = vector.load %arg3[%c2_168, %c1_169, %c0_170, %c0_171] : memref<3x2x1x32xf32, #tpu.memory_space<vmem>>, vector<1x1x1x32xf32>
    %292 = vector.shape_cast %291 : vector<1x1x1x32xf32> to vector<1x32xf32>
    %293 = vector.shape_cast %292 : vector<1x32xf32> to vector<1x1x32xf32>
    %294 = vector.broadcast %210 : vector<2x8x1xf32> to vector<2x8x32xf32>
    %295 = vector.broadcast %293 : vector<1x1x32xf32> to vector<2x8x32xf32>
    %296 = arith.mulf %294, %295 : vector<2x8x32xf32>
    %c2_172 = arith.constant 2 : index
    %c1_173 = arith.constant 1 : index
    %c0_174 = arith.constant 0 : index
    %c0_175 = arith.constant 0 : index
    %297 = vector.load %arg4[%c2_172, %c1_173, %c0_174, %c0_175] : memref<3x2x8x32xf32, #tpu.memory_space<vmem>>, vector<1x1x8x32xf32>
    %298 = vector.shape_cast %297 : vector<1x1x8x32xf32> to vector<8x32xf32>
    %299 = vector.shape_cast %298 : vector<8x32xf32> to vector<1x8x32xf32>
    %300 = vector.broadcast %299 : vector<1x8x32xf32> to vector<2x8x32xf32>
    %301 = arith.addf %296, %300 : vector<2x8x32xf32>
    "tpu.trace_start"() <{level = 10 : i32, message = "bqd,bkd->bqk"}> : () -> ()
    %cst_176 = arith.constant dense<0.000000e+00> : vector<2x8x8xf32>
    %302 = tpu.matmul %279, %290, %cst_176 {dimension_numbers = #tpu.dot_dimension_numbers<[2], [2], [1], [1], [0, 0, 0, 1, 1, 1], [0], [0]>} : vector<2x8x32xf32>, vector<2x8x32xf32>, vector<2x8x8xf32> -> vector<2x8x8xf32>
    "tpu.trace_stop"() : () -> ()
    %cst_177 = arith.constant 0.176776692 : f32
    %303 = vector.broadcast %cst_177 : f32 to vector<2x8x8xf32>
    %304 = arith.mulf %302, %303 : vector<2x8x8xf32>
    %cst_178 = arith.constant dense<0xFF800000> : vector<2x8xf32>
    %305 = vector.multi_reduction <maximumf>, %304, %cst_178 [2] : vector<2x8x8xf32> to vector<2x8xf32>
    %306 = vector.shape_cast %305 : vector<2x8xf32> to vector<2x8x1xf32>
    %307 = vector.broadcast %306 : vector<2x8x1xf32> to vector<2x8x8xf32>
    %308 = arith.subf %304, %307 : vector<2x8x8xf32>
    %309 = math.exp %308 : vector<2x8x8xf32>
    %cst_179 = arith.constant dense<0.000000e+00> : vector<2x8xf32>
    %310 = vector.multi_reduction <add>, %309, %cst_179 [2] : vector<2x8x8xf32> to vector<2x8xf32>
    %311 = vector.shape_cast %310 : vector<2x8xf32> to vector<2x8x1xf32>
    %312 = tpu.reciprocal %311 {approx = true} : vector<2x8x1xf32> -> vector<2x8x1xf32>
    %313 = vector.broadcast %312 : vector<2x8x1xf32> to vector<2x8x8xf32>
    %314 = arith.mulf %309, %313 : vector<2x8x8xf32>
    "tpu.trace_start"() <{level = 10 : i32, message = "bqk,bkd->bqd"}> : () -> ()
    %cst_180 = arith.constant dense<0.000000e+00> : vector<2x8x32xf32>
    %315 = tpu.matmul %314, %301, %cst_180 {dimension_numbers = #tpu.dot_dimension_numbers<[2], [1], [1], [2], [0, 0, 0, 1, 1, 2], [0], [0]>} : vector<2x8x8xf32>, vector<2x8x32xf32>, vector<2x8x32xf32> -> vector<2x8x32xf32>
    "tpu.trace_stop"() : () -> ()
    %316 = vector.shape_cast %315 : vector<2x8x32xf32> to vector<16x32xf32>
    %c1_181 = arith.constant 1 : index
    %c0_182 = arith.constant 0 : index
    %c0_183 = arith.constant 0 : index
    %317 = vector.load %arg5[%c1_181, %c0_182, %c0_183] : memref<2x32x32xf32, #tpu.memory_space<vmem>>, vector<1x32x32xf32>
    %318 = vector.shape_cast %317 : vector<1x32x32xf32> to vector<32x32xf32>
    %cst_184 = arith.constant dense<0.000000e+00> : vector<16x32xf32>
    %319 = tpu.matmul %316, %318, %cst_184 {dimension_numbers = #tpu.dot_dimension_numbers<[1], [0], [0], [1], [0, 0, 1, 1], [], []>} : vector<16x32xf32>, vector<32x32xf32>, vector<16x32xf32> -> vector<16x32xf32>
    %320 = arith.addf %268, %319 : vector<16x32xf32>
    %321 = vector.broadcast %2 : vector<1x32xf32> to vector<16x32xf32>
    %322 = arith.addf %320, %321 : vector<16x32xf32>
    %323 = arith.addf %215, %322 : vector<16x32xf32>
    %cst_185 = arith.constant dense<0.000000e+00> : vector<16xf32>
    %324 = vector.multi_reduction <add>, %323, %cst_185 [1] : vector<16x32xf32> to vector<16xf32>
    %325 = vector.shape_cast %324 : vector<16xf32> to vector<16x1xf32>
    %cst_186 = arith.constant 3.200000e+01 : f32
    %326 = vector.broadcast %cst_186 : f32 to vector<16x1xf32>
    %327 = arith.divf %325, %326 : vector<16x1xf32>
    %328 = vector.broadcast %327 : vector<16x1xf32> to vector<16x32xf32>
    %329 = arith.subf %323, %328 : vector<16x32xf32>
    %330 = arith.mulf %329, %329 : vector<16x32xf32>
    %cst_187 = arith.constant dense<0.000000e+00> : vector<16xf32>
    %331 = vector.multi_reduction <add>, %330, %cst_187 [1] : vector<16x32xf32> to vector<16xf32>
    %332 = vector.shape_cast %331 : vector<16xf32> to vector<16x1xf32>
    %cst_188 = arith.constant 3.200000e+01 : f32
    %333 = vector.broadcast %cst_188 : f32 to vector<16x1xf32>
    %334 = arith.divf %332, %333 : vector<16x1xf32>
    %335 = vector.broadcast %327 : vector<16x1xf32> to vector<16x32xf32>
    %336 = arith.subf %323, %335 : vector<16x32xf32>
    %cst_189 = arith.constant 9.99999974E-6 : f32
    %337 = vector.broadcast %cst_189 : f32 to vector<16x1xf32>
    %338 = arith.addf %334, %337 : vector<16x1xf32>
    %339 = math.rsqrt %338 : vector<16x1xf32>
    %340 = vector.broadcast %339 : vector<16x1xf32> to vector<16x32xf32>
    %341 = arith.mulf %336, %340 : vector<16x32xf32>
    %342 = vector.broadcast %4 : vector<1x32xf32> to vector<16x32xf32>
    %343 = arith.mulf %341, %342 : vector<16x32xf32>
    %344 = vector.broadcast %6 : vector<1x32xf32> to vector<16x32xf32>
    %345 = arith.addf %343, %344 : vector<16x32xf32>
    %346 = vector.shape_cast %345 : vector<16x32xf32> to vector<2x8x32xf32>
    %cst_190 = arith.constant 0.000000e+00 : f32
    %347 = vector.broadcast %cst_190 : f32 to vector<2x512xf32>
    %348 = vector.extract_strided_slice %346 {offsets = [0, 0, 0], sizes = [2, 1, 32], strides = [1, 1, 1]} : vector<2x8x32xf32> to vector<2x1x32xf32>
    %349 = vector.shape_cast %348 : vector<2x1x32xf32> to vector<2x32xf32>
    %c0_191 = arith.constant 0 : index
    %c0_192 = arith.constant 0 : index
    %c0_193 = arith.constant 0 : index
    %350 = vector.load %arg7[%c0_191, %c0_192, %c0_193] : memref<8x32x512xf32, #tpu.memory_space<vmem>>, vector<1x32x512xf32>
    %351 = vector.shape_cast %350 : vector<1x32x512xf32> to vector<32x512xf32>
    %cst_194 = arith.constant dense<0.000000e+00> : vector<2x512xf32>
    %352 = tpu.matmul %349, %351, %cst_194 {dimension_numbers = #tpu.dot_dimension_numbers<[1], [0], [0], [1], [0, 0, 1, 1], [], []>} : vector<2x32xf32>, vector<32x512xf32>, vector<2x512xf32> -> vector<2x512xf32>
    %353 = arith.addf %347, %352 : vector<2x512xf32>
    %354 = vector.extract_strided_slice %346 {offsets = [0, 1, 0], sizes = [2, 1, 32], strides = [1, 1, 1]} : vector<2x8x32xf32> to vector<2x1x32xf32>
    %355 = vector.shape_cast %354 : vector<2x1x32xf32> to vector<2x32xf32>
    %c1_195 = arith.constant 1 : index
    %c0_196 = arith.constant 0 : index
    %c0_197 = arith.constant 0 : index
    %356 = vector.load %arg7[%c1_195, %c0_196, %c0_197] : memref<8x32x512xf32, #tpu.memory_space<vmem>>, vector<1x32x512xf32>
    %357 = vector.shape_cast %356 : vector<1x32x512xf32> to vector<32x512xf32>
    %cst_198 = arith.constant dense<0.000000e+00> : vector<2x512xf32>
    %358 = tpu.matmul %355, %357, %cst_198 {dimension_numbers = #tpu.dot_dimension_numbers<[1], [0], [0], [1], [0, 0, 1, 1], [], []>} : vector<2x32xf32>, vector<32x512xf32>, vector<2x512xf32> -> vector<2x512xf32>
    %359 = arith.addf %353, %358 : vector<2x512xf32>
    %360 = vector.extract_strided_slice %346 {offsets = [0, 2, 0], sizes = [2, 1, 32], strides = [1, 1, 1]} : vector<2x8x32xf32> to vector<2x1x32xf32>
    %361 = vector.shape_cast %360 : vector<2x1x32xf32> to vector<2x32xf32>
    %c2_199 = arith.constant 2 : index
    %c0_200 = arith.constant 0 : index
    %c0_201 = arith.constant 0 : index
    %362 = vector.load %arg7[%c2_199, %c0_200, %c0_201] : memref<8x32x512xf32, #tpu.memory_space<vmem>>, vector<1x32x512xf32>
    %363 = vector.shape_cast %362 : vector<1x32x512xf32> to vector<32x512xf32>
    %cst_202 = arith.constant dense<0.000000e+00> : vector<2x512xf32>
    %364 = tpu.matmul %361, %363, %cst_202 {dimension_numbers = #tpu.dot_dimension_numbers<[1], [0], [0], [1], [0, 0, 1, 1], [], []>} : vector<2x32xf32>, vector<32x512xf32>, vector<2x512xf32> -> vector<2x512xf32>
    %365 = arith.addf %359, %364 : vector<2x512xf32>
    %366 = vector.extract_strided_slice %346 {offsets = [0, 3, 0], sizes = [2, 1, 32], strides = [1, 1, 1]} : vector<2x8x32xf32> to vector<2x1x32xf32>
    %367 = vector.shape_cast %366 : vector<2x1x32xf32> to vector<2x32xf32>
    %c3_203 = arith.constant 3 : index
    %c0_204 = arith.constant 0 : index
    %c0_205 = arith.constant 0 : index
    %368 = vector.load %arg7[%c3_203, %c0_204, %c0_205] : memref<8x32x512xf32, #tpu.memory_space<vmem>>, vector<1x32x512xf32>
    %369 = vector.shape_cast %368 : vector<1x32x512xf32> to vector<32x512xf32>
    %cst_206 = arith.constant dense<0.000000e+00> : vector<2x512xf32>
    %370 = tpu.matmul %367, %369, %cst_206 {dimension_numbers = #tpu.dot_dimension_numbers<[1], [0], [0], [1], [0, 0, 1, 1], [], []>} : vector<2x32xf32>, vector<32x512xf32>, vector<2x512xf32> -> vector<2x512xf32>
    %371 = arith.addf %365, %370 : vector<2x512xf32>
    %372 = vector.extract_strided_slice %346 {offsets = [0, 4, 0], sizes = [2, 1, 32], strides = [1, 1, 1]} : vector<2x8x32xf32> to vector<2x1x32xf32>
    %373 = vector.shape_cast %372 : vector<2x1x32xf32> to vector<2x32xf32>
    %c4_207 = arith.constant 4 : index
    %c0_208 = arith.constant 0 : index
    %c0_209 = arith.constant 0 : index
    %374 = vector.load %arg7[%c4_207, %c0_208, %c0_209] : memref<8x32x512xf32, #tpu.memory_space<vmem>>, vector<1x32x512xf32>
    %375 = vector.shape_cast %374 : vector<1x32x512xf32> to vector<32x512xf32>
    %cst_210 = arith.constant dense<0.000000e+00> : vector<2x512xf32>
    %376 = tpu.matmul %373, %375, %cst_210 {dimension_numbers = #tpu.dot_dimension_numbers<[1], [0], [0], [1], [0, 0, 1, 1], [], []>} : vector<2x32xf32>, vector<32x512xf32>, vector<2x512xf32> -> vector<2x512xf32>
    %377 = arith.addf %371, %376 : vector<2x512xf32>
    %378 = vector.extract_strided_slice %346 {offsets = [0, 5, 0], sizes = [2, 1, 32], strides = [1, 1, 1]} : vector<2x8x32xf32> to vector<2x1x32xf32>
    %379 = vector.shape_cast %378 : vector<2x1x32xf32> to vector<2x32xf32>
    %c5_211 = arith.constant 5 : index
    %c0_212 = arith.constant 0 : index
    %c0_213 = arith.constant 0 : index
    %380 = vector.load %arg7[%c5_211, %c0_212, %c0_213] : memref<8x32x512xf32, #tpu.memory_space<vmem>>, vector<1x32x512xf32>
    %381 = vector.shape_cast %380 : vector<1x32x512xf32> to vector<32x512xf32>
    %cst_214 = arith.constant dense<0.000000e+00> : vector<2x512xf32>
    %382 = tpu.matmul %379, %381, %cst_214 {dimension_numbers = #tpu.dot_dimension_numbers<[1], [0], [0], [1], [0, 0, 1, 1], [], []>} : vector<2x32xf32>, vector<32x512xf32>, vector<2x512xf32> -> vector<2x512xf32>
    %383 = arith.addf %377, %382 : vector<2x512xf32>
    %384 = vector.extract_strided_slice %346 {offsets = [0, 6, 0], sizes = [2, 1, 32], strides = [1, 1, 1]} : vector<2x8x32xf32> to vector<2x1x32xf32>
    %385 = vector.shape_cast %384 : vector<2x1x32xf32> to vector<2x32xf32>
    %c6_215 = arith.constant 6 : index
    %c0_216 = arith.constant 0 : index
    %c0_217 = arith.constant 0 : index
    %386 = vector.load %arg7[%c6_215, %c0_216, %c0_217] : memref<8x32x512xf32, #tpu.memory_space<vmem>>, vector<1x32x512xf32>
    %387 = vector.shape_cast %386 : vector<1x32x512xf32> to vector<32x512xf32>
    %cst_218 = arith.constant dense<0.000000e+00> : vector<2x512xf32>
    %388 = tpu.matmul %385, %387, %cst_218 {dimension_numbers = #tpu.dot_dimension_numbers<[1], [0], [0], [1], [0, 0, 1, 1], [], []>} : vector<2x32xf32>, vector<32x512xf32>, vector<2x512xf32> -> vector<2x512xf32>
    %389 = arith.addf %383, %388 : vector<2x512xf32>
    %390 = vector.extract_strided_slice %346 {offsets = [0, 7, 0], sizes = [2, 1, 32], strides = [1, 1, 1]} : vector<2x8x32xf32> to vector<2x1x32xf32>
    %391 = vector.shape_cast %390 : vector<2x1x32xf32> to vector<2x32xf32>
    %c7_219 = arith.constant 7 : index
    %c0_220 = arith.constant 0 : index
    %c0_221 = arith.constant 0 : index
    %392 = vector.load %arg7[%c7_219, %c0_220, %c0_221] : memref<8x32x512xf32, #tpu.memory_space<vmem>>, vector<1x32x512xf32>
    %393 = vector.shape_cast %392 : vector<1x32x512xf32> to vector<32x512xf32>
    %cst_222 = arith.constant dense<0.000000e+00> : vector<2x512xf32>
    %394 = tpu.matmul %391, %393, %cst_222 {dimension_numbers = #tpu.dot_dimension_numbers<[1], [0], [0], [1], [0, 0, 1, 1], [], []>} : vector<2x32xf32>, vector<32x512xf32>, vector<2x512xf32> -> vector<2x512xf32>
    %395 = arith.addf %389, %394 : vector<2x512xf32>
    %396 = vector.broadcast %7 : vector<1x512xf32> to vector<2x512xf32>
    %397 = arith.addf %395, %396 : vector<2x512xf32>
    %cst_223 = arith.constant 0.000000e+00 : f32
    %398 = vector.broadcast %cst_223 : f32 to vector<2x512xf32>
    %399 = arith.cmpf ogt, %397, %398 : vector<2x512xf32>
    %cst_224 = arith.constant 0.00999999977 : f32
    %400 = vector.broadcast %cst_224 : f32 to vector<2x512xf32>
    %401 = arith.mulf %400, %397 : vector<2x512xf32>
    %402 = arith.select %399, %397, %401 : vector<2x512xi1>, vector<2x512xf32>
    %cst_225 = arith.constant dense<0.000000e+00> : vector<2x12xf32>
    %403 = tpu.matmul %402, %8, %cst_225 {dimension_numbers = #tpu.dot_dimension_numbers<[1], [0], [0], [1], [0, 0, 1, 1], [], []>} : vector<2x512xf32>, vector<512x12xf32>, vector<2x12xf32> -> vector<2x12xf32>
    %404 = vector.broadcast %9 : vector<1x12xf32> to vector<2x12xf32>
    %405 = arith.addf %403, %404 : vector<2x12xf32>
    %406 = arith.addf %208, %405 : vector<2x12xf32>
    %c0_226 = arith.constant 0 : index
    %c0_227 = arith.constant 0 : index
    %407 = vector.load %arg11[%c0_226, %c0_227] : memref<2x12xf32, #tpu.memory_space<vmem>>, vector<2x12xf32>
    tpu.vector_store %arg11[%c0_226, %c0_227], %406 {strides = array<i32>} : memref<2x12xf32, #tpu.memory_space<vmem>>, vector<2x12xf32>,
    return
  }
  func.func @transform_0(%arg0: i32) -> (i32, i32) {
    %c0_i32 = arith.constant 0 : i32
    %c0_i32_0 = arith.constant 0 : i32
    %c0_i32_1 = arith.constant 0 : i32
    return %c0_i32, %c0_i32_0 : i32, i32
  }
  func.func @transform_1(%arg0: i32) -> (i32, i32) {
    %c0_i32 = arith.constant 0 : i32
    %c0_i32_0 = arith.constant 0 : i32
    %c0_i32_1 = arith.constant 0 : i32
    return %c0_i32, %c0_i32_0 : i32, i32
  }
  func.func @transform_2(%arg0: i32) -> (i32, i32, i32, i32) {
    %c0_i32 = arith.constant 0 : i32
    %c0_i32_0 = arith.constant 0 : i32
    %c0_i32_1 = arith.constant 0 : i32
    %c0_i32_2 = arith.constant 0 : i32
    %c0_i32_3 = arith.constant 0 : i32
    return %c0_i32, %c0_i32_0, %c0_i32_1, %c0_i32_2 : i32, i32, i32, i32
  }
  func.func @transform_3(%arg0: i32) -> (i32, i32, i32, i32) {
    %c0_i32 = arith.constant 0 : i32
    %c0_i32_0 = arith.constant 0 : i32
    %c0_i32_1 = arith.constant 0 : i32
    %c0_i32_2 = arith.constant 0 : i32
    %c0_i32_3 = arith.constant 0 : i32
    return %c0_i32, %c0_i32_0, %c0_i32_1, %c0_i32_2 : i32, i32, i32, i32
  }
  func.func @transform_4(%arg0: i32) -> (i32, i32, i32) {
    %c0_i32 = arith.constant 0 : i32
    %c0_i32_0 = arith.constant 0 : i32
    %c0_i32_1 = arith.constant 0 : i32
    %c0_i32_2 = arith.constant 0 : i32
    return %c0_i32, %c0_i32_0, %c0_i32_1 : i32, i32, i32
  }
  func.func @transform_5(%arg0: i32) -> (i32, i32, i32) {
    %c0_i32 = arith.constant 0 : i32
    %c0_i32_0 = arith.constant 0 : i32
    %c0_i32_1 = arith.constant 0 : i32
    %c0_i32_2 = arith.constant 0 : i32
    return %c0_i32, %c0_i32_0, %c0_i32_1 : i32, i32, i32
  }
  func.func @transform_6(%arg0: i32) -> (i32, i32, i32) {
    %c0_i32 = arith.constant 0 : i32
    %c0_i32_0 = arith.constant 0 : i32
    %c0_i32_1 = arith.constant 0 : i32
    %c0_i32_2 = arith.constant 0 : i32
    return %c0_i32, %c0_i32_0, %c0_i32_1 : i32, i32, i32
  }
  func.func @transform_7(%arg0: i32) -> (i32, i32) {
    %c0_i32 = arith.constant 0 : i32
    %c0_i32_0 = arith.constant 0 : i32
    %c0_i32_1 = arith.constant 0 : i32
    return %c0_i32, %c0_i32_0 : i32, i32
  }
  func.func @transform_8(%arg0: i32) -> (i32, i32) {
    %c0_i32 = arith.constant 0 : i32
    %c0_i32_0 = arith.constant 0 : i32
    %c0_i32_1 = arith.constant 0 : i32
    return %c0_i32, %c0_i32_0 : i32, i32
  }
  func.func @transform_9(%arg0: i32) -> (i32, i32) {
    %c0_i32 = arith.constant 0 : i32
    %c0_i32_0 = arith.constant 0 : i32
    %c0_i32_1 = arith.constant 0 : i32
    return %c0_i32, %c0_i32_0 : i32, i32
  }
  func.func @transform_10(%arg0: i32) -> (i32, i32) {
    %c0_i32 = arith.constant 0 : i32
    %c0_i32_0 = arith.constant 0 : i32
    %c0_i32_1 = arith.constant 0 : i32
    return %c0_i32, %c0_i32_0 : i32, i32
  }
}

</mosaic_0001>

<llo_original>
// kernel: tpu_custom_call.1
$region0: #{tpu_custom_call.1}
  #allocation0 [shape = 'u32[]', space=smem, size = 0x4, offset = 0x4, fixed_abs, tag = 'smem constant byte address 0x4 - core index']
  #allocation1 [shape = 'u32[144,128]{1,0:T(1,128)}', space=vmem, size = 0x12000, scoped, tag = 'internal scratch']
  %s0 = inlined_call_operand.vmem [shape: f32[2,12], index: 0, kind: input, shape index: {}]
  %s1 = inlined_call_operand.vmem [shape: f32[8,32], index: 1, kind: input, shape index: {}]
  %s2 = inlined_call_operand.vmem [shape: f32[3,2,1,32], index: 2, kind: input, shape index: {}]
  %s3 = inlined_call_operand.vmem [shape: f32[3,2,8,32], index: 3, kind: input, shape index: {}]
  %s4 = inlined_call_operand.vmem [shape: f32[2,32,32], index: 4, kind: input, shape index: {}]
  %s5 = inlined_call_operand.vmem [shape: f32[3,1,32], index: 5, kind: input, shape index: {}]
  %s6 = inlined_call_operand.hbm [shape: f32[8,32,512], index: 6, kind: input, shape index: {}]
  %s7 = inlined_call_operand.vmem [shape: f32[1,512], index: 7, kind: input, shape index: {}]
  %s8 = inlined_call_operand.vmem [shape: f32[512,12], index: 8, kind: input, shape index: {}]
  %s9 = inlined_call_operand.vmem [shape: f32[1,12], index: 9, kind: input, shape index: {}]
  %s10 = inlined_call_operand.hbm [shape: f32[2,12], index: 10, kind: output, shape index: {}]
  %s11 = sld [smem:[#allocation0]]
  $region54: #{tpu_custom_call.1} parent=0
    _
  %s13 = ssub.s32 1, %s11
  %s14 = scalar_select 0, %s13, %s11
  $region1: #{tpu_custom_call.1} parent=0
    #allocation2 [shape = 'u8[524288]{0}', space=vmem, size = 0x80000, scoped, tag = 'input window, operand 6, single buffered']
    #allocation3 [shape = 's32[1]{0}', space=sflag, size = 0x4, scoped, tag = 'scoped memory for tpu_custom_call.1']
    #allocation4 [shape = 's32[1]{0}', space=sflag, size = 0x4, scoped, tag = 'scoped memory for tpu_custom_call.1']
    #allocation5 [shape = 'u8[1024]{0}', space=vmem, size = 0x400, scoped, tag = 'output window, operand 0, single buffered']
    %15 = vsyncpa [#allocation3], 0
    %16 = vsyncpa [#allocation4], 0
    // Predicated region
    $region2: #{tpu_custom_call.1} parent=1 // pred_check
      _
    $region3: #{tpu_custom_call.1} parent=1 // pred_check_branch
      %18 = sbr.rel (0) target = $region5
    $region4: #{tpu_custom_call.1} parent=1 // pred_region
      _
    $region5: #{tpu_custom_call.1} parent=1 // pred_fallthru
      _
    // Predicated region
    $region6: #{tpu_custom_call.1} parent=1 // pred_check
      _
    $region7: #{tpu_custom_call.1} parent=1 // pred_check_branch
      %20 = sbr.rel (0) target = $region9
    $region8: #{tpu_custom_call.1} parent=1 // pred_region
      _
    $region9: #{tpu_custom_call.1} parent=1 // pred_fallthru
      _
    // Predicated region
    $region10: #{tpu_custom_call.1} parent=1 // pred_check
      _
    $region11: #{tpu_custom_call.1} parent=1 // pred_check_branch
      %22 = sbr.rel (0) target = $region13
    $region12: #{tpu_custom_call.1} parent=1 // pred_region
      _
    $region13: #{tpu_custom_call.1} parent=1 // pred_fallthru
      _
    // Predicated region
    $region14: #{tpu_custom_call.1} parent=1 // pred_check
      _
    $region15: #{tpu_custom_call.1} parent=1 // pred_check_branch
      %24 = sbr.rel (0) target = $region17
    $region16: #{tpu_custom_call.1} parent=1 // pred_region
      _
    $region17: #{tpu_custom_call.1} parent=1 // pred_fallthru
      _
    // Predicated region
    $region18: #{tpu_custom_call.1} parent=1 // pred_check
      _
    $region19: #{tpu_custom_call.1} parent=1 // pred_check_branch
      %26 = sbr.rel (0) target = $region21
    $region20: #{tpu_custom_call.1} parent=1 // pred_region
      _
    $region21: #{tpu_custom_call.1} parent=1 // pred_fallthru
      _
    // Predicated region
    $region22: #{tpu_custom_call.1} parent=1 // pred_check
      _
    $region23: #{tpu_custom_call.1} parent=1 // pred_check_branch
      %28 = sbr.rel (0) target = $region25
    $region24: #{tpu_custom_call.1} parent=1 // pred_region
      _
    $region25: #{tpu_custom_call.1} parent=1 // pred_fallthru
      _
    // Predicated region
    $region26: #{tpu_custom_call.1} parent=1 // pred_check
      _
    $region27: #{tpu_custom_call.1} parent=1 // pred_check_branch
      %30 = sbr.rel (0) target = $region29
    $region28: #{tpu_custom_call.1} parent=1 // pred_region
      %s32 = ssub.s32 16384, 16384
      %33 = vsyncadd [#allocation3], %s32
      %s34 = sshll.u32 [#allocation2], 4
      %s35 = int_to_ptr.vmem [resolvable:$true] %s34
      %40 = dma.hbm_to_vmem [thread:$0]  %s6, 16384, %s35, [#allocation3], 512, 512, 32
    $region29: #{tpu_custom_call.1} parent=1 // pred_fallthru
      _
    // Predicated region
    $region30: #{tpu_custom_call.1} parent=1 // pred_check
      _
    $region31: #{tpu_custom_call.1} parent=1 // pred_check_branch
      %42 = sbr.rel (0) target = $region33
    $region32: #{tpu_custom_call.1} parent=1 // pred_region
      _
    $region33: #{tpu_custom_call.1} parent=1 // pred_fallthru
      _
    // Predicated region
    $region34: #{tpu_custom_call.1} parent=1 // pred_check
      _
    $region35: #{tpu_custom_call.1} parent=1 // pred_check_branch
      %44 = sbr.rel (0) target = $region37
    $region36: #{tpu_custom_call.1} parent=1 // pred_region
      _
    $region37: #{tpu_custom_call.1} parent=1 // pred_fallthru
      _
    // Predicated region
    $region38: #{tpu_custom_call.1} parent=1 // pred_check
      _
    $region39: #{tpu_custom_call.1} parent=1 // pred_check_branch
      %46 = sbr.rel (0) target = $region41
    $region40: #{tpu_custom_call.1} parent=1 // pred_region
      _
    $region41: #{tpu_custom_call.1} parent=1 // pred_fallthru
      _
    // Predicated region
    $region42: #{tpu_custom_call.1} parent=1 // pred_check
      _
    $region43: #{tpu_custom_call.1} parent=1 // pred_check_branch
      %48 = sbr.rel (0) target = $region45
    $region44: #{tpu_custom_call.1} parent=1 // pred_region
      %49 = dma.done [#allocation3], 16384
    $region45: #{tpu_custom_call.1} parent=1 // pred_fallthru
      _
    %v50 = vld [vmem:[%s1] sm:$0xff]
    %v51 = vld [vmem:[%s5] sm:$0x1]
    %s52 = scalar_lea.vmem %s5, 1
    %v53 = vld [vmem:[%s52] sm:$0x1]
    %s54 = scalar_lea.vmem %s5, 2
    %v55 = vld [vmem:[%s54] sm:$0x1]
    %v56 = vld [vmem:[%s7] sm:$0xf]
    %v57 = vld [vmem:[%s8] sm:$0xff]
    %v58 = vld [vmem:[%s8 + $0x8] sm:$0xff]
    %v59 = vld [vmem:[%s8 + $0x10] sm:$0xff]
    %v60 = vld [vmem:[%s8 + $0x18] sm:$0xff]
    %v61 = vld [vmem:[%s8 + $0x20] sm:$0xff]
    %v62 = vld [vmem:[%s8 + $0x28] sm:$0xff]
    %v63 = vld [vmem:[%s8 + $0x30] sm:$0xff]
    %v64 = vld [vmem:[%s8 + $0x38] sm:$0xff]
    %v65 = vld [vmem:[%s8 + $0x40] sm:$0xff]
    %v66 = vld [vmem:[%s8 + $0x48] sm:$0xff]
    %v67 = vld [vmem:[%s8 + $0x50] sm:$0xff]
    %v68 = vld [vmem:[%s8 + $0x58] sm:$0xff]
    %v69 = vld [vmem:[%s8 + $0x60] sm:$0xff]
    %v70 = vld [vmem:[%s8 + $0x68] sm:$0xff]
    %v71 = vld [vmem:[%s8 + $0x70] sm:$0xff]
    %v72 = vld [vmem:[%s8 + $0x78] sm:$0xff]
    %v73 = vld [vmem:[%s8 + $0x80] sm:$0xff]
    %v74 = vld [vmem:[%s8 + $0x88] sm:$0xff]
    %v75 = vld [vmem:[%s8 + $0x90] sm:$0xff]
    %v76 = vld [vmem:[%s8 + $0x98] sm:$0xff]
    %v77 = vld [vmem:[%s8 + $0xa0] sm:$0xff]
    %v78 = vld [vmem:[%s8 + $0xa8] sm:$0xff]
    %v79 = vld [vmem:[%s8 + $0xb0] sm:$0xff]
    %v80 = vld [vmem:[%s8 + $0xb8] sm:$0xff]
    %v81 = vld [vmem:[%s8 + $0xc0] sm:$0xff]
    %v82 = vld [vmem:[%s8 + $0xc8] sm:$0xff]
    %v83 = vld [vmem:[%s8 + $0xd0] sm:$0xff]
    %v84 = vld [vmem:[%s8 + $0xd8] sm:$0xff]
    %v85 = vld [vmem:[%s8 + $0xe0] sm:$0xff]
    %v86 = vld [vmem:[%s8 + $0xe8] sm:$0xff]
    %v87 = vld [vmem:[%s8 + $0xf0] sm:$0xff]
    %v88 = vld [vmem:[%s8 + $0xf8] sm:$0xff]
    %v89 = vld [vmem:[%s8 + $0x100] sm:$0xff]
    %v90 = vld [vmem:[%s8 + $0x108] sm:$0xff]
    %v91 = vld [vmem:[%s8 + $0x110] sm:$0xff]
    %v92 = vld [vmem:[%s8 + $0x118] sm:$0xff]
    %v93 = vld [vmem:[%s8 + $0x120] sm:$0xff]
    %v94 = vld [vmem:[%s8 + $0x128] sm:$0xff]
    %v95 = vld [vmem:[%s8 + $0x130] sm:$0xff]
    %v96 = vld [vmem:[%s8 + $0x138] sm:$0xff]
    %v97 = vld [vmem:[%s8 + $0x140] sm:$0xff]
    %v98 = vld [vmem:[%s8 + $0x148] sm:$0xff]
    %v99 = vld [vmem:[%s8 + $0x150] sm:$0xff]
    %v100 = vld [vmem:[%s8 + $0x158] sm:$0xff]
    %v101 = vld [vmem:[%s8 + $0x160] sm:$0xff]
    %v102 = vld [vmem:[%s8 + $0x168] sm:$0xff]
    %v103 = vld [vmem:[%s8 + $0x170] sm:$0xff]
    %v104 = vld [vmem:[%s8 + $0x178] sm:$0xff]
    %v105 = vld [vmem:[%s8 + $0x180] sm:$0xff]
    %v106 = vld [vmem:[%s8 + $0x188] sm:$0xff]
    %v107 = vld [vmem:[%s8 + $0x190] sm:$0xff]
    %v108 = vld [vmem:[%s8 + $0x198] sm:$0xff]
    %v109 = vld [vmem:[%s8 + $0x1a0] sm:$0xff]
    %v110 = vld [vmem:[%s8 + $0x1a8] sm:$0xff]
    %v111 = vld [vmem:[%s8 + $0x1b0] sm:$0xff]
    %v112 = vld [vmem:[%s8 + $0x1b8] sm:$0xff]
    %v113 = vld [vmem:[%s8 + $0x1c0] sm:$0xff]
    %v114 = vld [vmem:[%s8 + $0x1c8] sm:$0xff]
    %v115 = vld [vmem:[%s8 + $0x1d0] sm:$0xff]
    %v116 = vld [vmem:[%s8 + $0x1d8] sm:$0xff]
    %v117 = vld [vmem:[%s8 + $0x1e0] sm:$0xff]
    %v118 = vld [vmem:[%s8 + $0x1e8] sm:$0xff]
    %v119 = vld [vmem:[%s8 + $0x1f0] sm:$0xff]
    %v120 = vld [vmem:[%s8 + $0x1f8] sm:$0xff]
    %v121 = vld [vmem:[%s9] sm:$0x1]
    %v122 = vld [vmem:[%s0] sm:$0x3]
    %v123 = vlaneseq
    %v124 = vshrl.u32 %v123, 7
    %v125 = vsub.s32 0, %v124
    %v126 = vrot.slane %v122, %v125
    %128 = vbcast.lane.b32.xlu0 %v126, 256
    %v129 = vpop.permute.xlu0 %128
    %v130 = vlaneseq
    %v131 = vshrl.u32 %v130, 7
    %v132 = vsub.s32 1, %v131
    %v133 = vrot.slane %v122, %v132
    %135 = vbcast.lane.b32.xlu0 %v133, 256
    %v136 = vpop.permute.xlu0 %135
    %v137 = vadd.f32 %v129, %v50
    %v138 = vadd.f32 %v136, %v50
    %v139 = vld [vmem:[%s2] sm:$0x1]
    %v141 = vlaneseq
    %v142 = vshrl.u32 %v141, 7
    %v143 = vsub.s32 0, %v142
    %v144 = vrot.slane %v139, %v143
    %v146 = vmul.f32 %v129, %v144
    %v147 = vmul.f32 %v136, %v144
    %v148 = vld [vmem:[%s3] sm:$0xff]
    %v149 = vadd.f32 %v146, %v148
    %v150 = vadd.f32 %v147, %v148
    %s151 = scalar_lea.vmem %s2, 2
    %v152 = vld [vmem:[%s151] sm:$0x1]
    %v154 = vlaneseq
    %v155 = vshrl.u32 %v154, 7
    %v156 = vsub.s32 0, %v155
    %v157 = vrot.slane %v152, %v156
    %v159 = vmul.f32 %v129, %v157
    %v160 = vmul.f32 %v136, %v157
    %s161 = scalar_lea.vmem %s3, 16
    %v162 = vld [vmem:[%s161] sm:$0xff]
    %v163 = vadd.f32 %v159, %v162
    %v164 = vadd.f32 %v160, %v162
    %s165 = scalar_lea.vmem %s2, 4
    %v166 = vld [vmem:[%s165] sm:$0x1]
    %v168 = vlaneseq
    %v169 = vshrl.u32 %v168, 7
    %v170 = vsub.s32 0, %v169
    %v171 = vrot.slane %v166, %v170
    %v173 = vmul.f32 %v129, %v171
    %v174 = vmul.f32 %v136, %v171
    %s175 = scalar_lea.vmem %s3, 32
    %v176 = vld [vmem:[%s175] sm:$0xff]
    %v177 = vadd.f32 %v173, %v176
    %v178 = vadd.f32 %v174, %v176
    %vm179 = vcmask 261120
    %v181 = vsel %vm179, %v149, 0
    %v184 = vsel %vm179, %v163, 0
    %186 = vmatprep.subr.mxu0 0.0
    %187 = vmatpush1.xpose.msra.mxu0 %v184
    %188 = vmatprep.subr.mxu0 0.0
    %189 = vmatpush1.xpose.msra.mxu0 0.0
    %190 = vmatprep.subr.mxu0 0.0
    %191 = vmatpush1.xpose.msra.mxu0 0.0
    %192 = vmatprep.subr.mxu0 0.0
    %193 = vmatpush1.xpose.msra.mxu0 0.0
    %194 = vmatprep.subr.mxu0 0.0
    %195 = vmatpush1.xpose.msra.mxu0 0.0
    %196 = vmatprep.subr.mxu0 0.0
    %197 = vmatpush1.xpose.msra.mxu0 0.0
    %198 = vmatprep.subr.mxu0 0.0
    %199 = vmatpush1.xpose.msra.mxu0 0.0
    %200 = vmatprep.subr.mxu0 0.0
    %201 = vmatpush1.xpose.msra.mxu0 0.0
    %202 = vmatprep.subr.mxu0 0.0
    %203 = vmatpush1.xpose.msra.mxu0 0.0
    %204 = vmatprep.subr.mxu0 0.0
    %205 = vmatpush1.xpose.msra.mxu0 0.0
    %206 = vmatprep.subr.mxu0 0.0
    %207 = vmatpush1.xpose.msra.mxu0 0.0
    %208 = vmatprep.subr.mxu0 0.0
    %209 = vmatpush1.xpose.msra.mxu0 0.0
    %210 = vmatprep.subr.mxu0 0.0
    %211 = vmatpush1.xpose.msra.mxu0 0.0
    %212 = vmatprep.subr.mxu0 0.0
    %213 = vmatpush1.xpose.msra.mxu0 0.0
    %214 = vmatprep.subr.mxu0 0.0
    %215 = vmatpush1.xpose.msra.mxu0 0.0
    %216 = vmatprep.subr.mxu0 0.0
    %217 = vmatpush1.xpose.msra.mxu0 0.0
    %218 = vmatprep.subr.mxu0 0.0
    %219 = vmatpush1.xpose.msra.mxu0 0.0
    %220 = vmatprep.subr.mxu0 0.0
    %221 = vmatpush1.xpose.msra.mxu0 0.0
    %222 = vmatprep.subr.mxu0 0.0
    %223 = vmatpush1.xpose.msra.mxu0 0.0
    %224 = vmatprep.subr.mxu0 0.0
    %225 = vmatpush1.xpose.msra.mxu0 0.0
    %226 = vmatprep.subr.mxu0 0.0
    %227 = vmatpush1.xpose.msra.mxu0 0.0
    %228 = vmatprep.subr.mxu0 0.0
    %229 = vmatpush1.xpose.msra.mxu0 0.0
    %230 = vmatprep.subr.mxu0 0.0
    %231 = vmatpush1.xpose.msra.mxu0 0.0
    %232 = vmatprep.subr.mxu0 0.0
    %233 = vmatpush1.xpose.msra.mxu0 0.0
    %234 = vmatprep.subr.mxu0 0.0
    %235 = vmatpush1.xpose.msra.mxu0 0.0
    %236 = vmatprep.subr.mxu0 0.0
    %237 = vmatpush1.xpose.msra.mxu0 0.0
    %238 = vmatprep.subr.mxu0 0.0
    %239 = vmatpush1.xpose.msra.mxu0 0.0
    %240 = vmatprep.subr.mxu0 0.0
    %241 = vmatpush1.xpose.msra.mxu0 0.0
    %242 = vmatprep.subr.mxu0 0.0
    %243 = vmatpush1.xpose.msra.mxu0 0.0
    %244 = vmatprep.subr.mxu0 0.0
    %245 = vmatpush1.xpose.msra.mxu0 0.0
    %246 = vmatprep.subr.mxu0 0.0
    %247 = vmatpush1.xpose.msra.mxu0 0.0
    %248 = vmatprep.subr.mxu0 0.0
    %249 = vmatpush1.xpose.msra.mxu0 0.0
    %250 = vmatprep.mubr.f32.mxu0 0.0
    %251 = vmatmul.mubr.f32.gmra.mrb[0].mxu0 %v181
    %v252 = vpop.f32.mrb[0].mxu0
    %v253 = vadd.f32 0.0, %v252
    %v254 = vpop.f32.mrb[0].mxu0
    %255 = vdwg.mxu0
    %v257 = vsel %vm179, %v150, 0
    %v260 = vsel %vm179, %v164, 0
    %262 = vmatprep.subr.mxu0 0.0
    %263 = vmatpush1.xpose.msra.mxu0 %v260
    %264 = vmatprep.subr.mxu0 0.0
    %265 = vmatpush1.xpose.msra.mxu0 0.0
    %266 = vmatprep.subr.mxu0 0.0
    %267 = vmatpush1.xpose.msra.mxu0 0.0
    %268 = vmatprep.subr.mxu0 0.0
    %269 = vmatpush1.xpose.msra.mxu0 0.0
    %270 = vmatprep.subr.mxu0 0.0
    %271 = vmatpush1.xpose.msra.mxu0 0.0
    %272 = vmatprep.subr.mxu0 0.0
    %273 = vmatpush1.xpose.msra.mxu0 0.0
    %274 = vmatprep.subr.mxu0 0.0
    %275 = vmatpush1.xpose.msra.mxu0 0.0
    %276 = vmatprep.subr.mxu0 0.0
    %277 = vmatpush1.xpose.msra.mxu0 0.0
    %278 = vmatprep.subr.mxu0 0.0
    %279 = vmatpush1.xpose.msra.mxu0 0.0
    %280 = vmatprep.subr.mxu0 0.0
    %281 = vmatpush1.xpose.msra.mxu0 0.0
    %282 = vmatprep.subr.mxu0 0.0
    %283 = vmatpush1.xpose.msra.mxu0 0.0
    %284 = vmatprep.subr.mxu0 0.0
    %285 = vmatpush1.xpose.msra.mxu0 0.0
    %286 = vmatprep.subr.mxu0 0.0
    %287 = vmatpush1.xpose.msra.mxu0 0.0
    %288 = vmatprep.subr.mxu0 0.0
    %289 = vmatpush1.xpose.msra.mxu0 0.0
    %290 = vmatprep.subr.mxu0 0.0
    %291 = vmatpush1.xpose.msra.mxu0 0.0
    %292 = vmatprep.subr.mxu0 0.0
    %293 = vmatpush1.xpose.msra.mxu0 0.0
    %294 = vmatprep.subr.mxu0 0.0
    %295 = vmatpush1.xpose.msra.mxu0 0.0
    %296 = vmatprep.subr.mxu0 0.0
    %297 = vmatpush1.xpose.msra.mxu0 0.0
    %298 = vmatprep.subr.mxu0 0.0
    %299 = vmatpush1.xpose.msra.mxu0 0.0
    %300 = vmatprep.subr.mxu0 0.0
    %301 = vmatpush1.xpose.msra.mxu0 0.0
    %302 = vmatprep.subr.mxu0 0.0
    %303 = vmatpush1.xpose.msra.mxu0 0.0
    %304 = vmatprep.subr.mxu0 0.0
    %305 = vmatpush1.xpose.msra.mxu0 0.0
    %306 = vmatprep.subr.mxu0 0.0
    %307 = vmatpush1.xpose.msra.mxu0 0.0
    %308 = vmatprep.subr.mxu0 0.0
    %309 = vmatpush1.xpose.msra.mxu0 0.0
    %310 = vmatprep.subr.mxu0 0.0
    %311 = vmatpush1.xpose.msra.mxu0 0.0
    %312 = vmatprep.subr.mxu0 0.0
    %313 = vmatpush1.xpose.msra.mxu0 0.0
    %314 = vmatprep.subr.mxu0 0.0
    %315 = vmatpush1.xpose.msra.mxu0 0.0
    %316 = vmatprep.subr.mxu0 0.0
    %317 = vmatpush1.xpose.msra.mxu0 0.0
    %318 = vmatprep.subr.mxu0 0.0
    %319 = vmatpush1.xpose.msra.mxu0 0.0
    %320 = vmatprep.subr.mxu0 0.0
    %321 = vmatpush1.xpose.msra.mxu0 0.0
    %322 = vmatprep.subr.mxu0 0.0
    %323 = vmatpush1.xpose.msra.mxu0 0.0
    %324 = vmatprep.subr.mxu0 0.0
    %325 = vmatpush1.xpose.msra.mxu0 0.0
    %326 = vmatprep.mubr.f32.mxu0 0.0
    %327 = vmatmul.mubr.f32.gmra.mrb[0].mxu0 %v257
    %v328 = vpop.f32.mrb[0].mxu0
    %v329 = vadd.f32 0.0, %v328
    %v330 = vpop.f32.mrb[0].mxu0
    %331 = vdwg.mxu0
    %v332 = vmul.f32 %v253, 0.17677669
    %v333 = vmul.f32 %v329, 0.17677669
    %vm334 = vcmask 64512
    %v335 = vsel %vm334, %v332, -inf
    %336 = vmax.xlane.f32.xlu0 %v335
    %v337 = vpop.xlane.xlu0 %336
    %v338 = vsel %vm334, %v333, -inf
    %339 = vmax.xlane.f32.xlu0 %v338
    %v340 = vpop.xlane.xlu0 %339
    %v341 = vsub.f32 %v332, %v337
    %v342 = vsub.f32 %v333, %v340
    %v343 = vmul.f32 %v341, 1.442695
    %v344 = vpow.pop %v343
    %v345 = vmul.f32 %v342, 1.442695
    %v346 = vpow.pop %v345
    %v347 = vsel %vm334, %v344, 0.0
    %348 = vadd.xlane.f32.xlu0 %v347
    %v349 = vpop.xlane.xlu0 %348
    %v350 = vsel %vm334, %v346, 0.0
    %351 = vadd.xlane.f32.xlu0 %v350
    %v352 = vpop.xlane.xlu0 %351
    %v353 = vrcp.pop %v349
    %v354 = vrcp.pop %v352
    %v355 = vmul.f32 %v344, %v353
    %v356 = vmul.f32 %v346, %v354
    %v358 = vsel %vm334, %v355, 0
    %360 = vmatprep.subr.mxu0 0.0
    %361 = vmatpush1.msra.mxu0 %v177
    %362 = vmatprep.subr.mxu0 0.0
    %363 = vmatpush1.msra.mxu0 0.0
    %364 = vmatprep.subr.mxu0 0.0
    %365 = vmatpush1.msra.mxu0 0.0
    %366 = vmatprep.subr.mxu0 0.0
    %367 = vmatpush1.msra.mxu0 0.0
    %368 = vmatprep.subr.mxu0 0.0
    %369 = vmatpush1.msra.mxu0 0.0
    %370 = vmatprep.subr.mxu0 0.0
    %371 = vmatpush1.msra.mxu0 0.0
    %372 = vmatprep.subr.mxu0 0.0
    %373 = vmatpush1.msra.mxu0 0.0
    %374 = vmatprep.subr.mxu0 0.0
    %375 = vmatpush1.msra.mxu0 0.0
    %376 = vmatprep.subr.mxu0 0.0
    %377 = vmatpush1.msra.mxu0 0.0
    %378 = vmatprep.subr.mxu0 0.0
    %379 = vmatpush1.msra.mxu0 0.0
    %380 = vmatprep.subr.mxu0 0.0
    %381 = vmatpush1.msra.mxu0 0.0
    %382 = vmatprep.subr.mxu0 0.0
    %383 = vmatpush1.msra.mxu0 0.0
    %384 = vmatprep.subr.mxu0 0.0
    %385 = vmatpush1.msra.mxu0 0.0
    %386 = vmatprep.subr.mxu0 0.0
    %387 = vmatpush1.msra.mxu0 0.0
    %388 = vmatprep.subr.mxu0 0.0
    %389 = vmatpush1.msra.mxu0 0.0
    %390 = vmatprep.subr.mxu0 0.0
    %391 = vmatpush1.msra.mxu0 0.0
    %392 = vmatprep.subr.mxu0 0.0
    %393 = vmatpush1.msra.mxu0 0.0
    %394 = vmatprep.subr.mxu0 0.0
    %395 = vmatpush1.msra.mxu0 0.0
    %396 = vmatprep.subr.mxu0 0.0
    %397 = vmatpush1.msra.mxu0 0.0
    %398 = vmatprep.subr.mxu0 0.0
    %399 = vmatpush1.msra.mxu0 0.0
    %400 = vmatprep.subr.mxu0 0.0
    %401 = vmatpush1.msra.mxu0 0.0
    %402 = vmatprep.subr.mxu0 0.0
    %403 = vmatpush1.msra.mxu0 0.0
    %404 = vmatprep.subr.mxu0 0.0
    %405 = vmatpush1.msra.mxu0 0.0
    %406 = vmatprep.subr.mxu0 0.0
    %407 = vmatpush1.msra.mxu0 0.0
    %408 = vmatprep.subr.mxu0 0.0
    %409 = vmatpush1.msra.mxu0 0.0
    %410 = vmatprep.subr.mxu0 0.0
    %411 = vmatpush1.msra.mxu0 0.0
    %412 = vmatprep.subr.mxu0 0.0
    %413 = vmatpush1.msra.mxu0 0.0
    %414 = vmatprep.subr.mxu0 0.0
    %415 = vmatpush1.msra.mxu0 0.0
    %416 = vmatprep.subr.mxu0 0.0
    %417 = vmatpush1.msra.mxu0 0.0
    %418 = vmatprep.subr.mxu0 0.0
    %419 = vmatpush1.msra.mxu0 0.0
    %420 = vmatprep.subr.mxu0 0.0
    %421 = vmatpush1.msra.mxu0 0.0
    %422 = vmatprep.subr.mxu0 0.0
    %423 = vmatpush1.msra.mxu0 0.0
    %424 = vmatprep.mubr.f32.mxu0 0.0
    %425 = vmatmul.mubr.f32.gmra.mrb[0].mxu0 %v358
    %v426 = vpop.f32.mrb[0].mxu0
    %v427 = vadd.f32 0.0, %v426
    %v428 = vpop.f32.mrb[0].mxu0
    %429 = vdwg.mxu0
    %v431 = vsel %vm334, %v356, 0
    %433 = vmatprep.subr.mxu0 0.0
    %434 = vmatpush1.msra.mxu0 %v178
    %435 = vmatprep.subr.mxu0 0.0
    %436 = vmatpush1.msra.mxu0 0.0
    %437 = vmatprep.subr.mxu0 0.0
    %438 = vmatpush1.msra.mxu0 0.0
    %439 = vmatprep.subr.mxu0 0.0
    %440 = vmatpush1.msra.mxu0 0.0
    %441 = vmatprep.subr.mxu0 0.0
    %442 = vmatpush1.msra.mxu0 0.0
    %443 = vmatprep.subr.mxu0 0.0
    %444 = vmatpush1.msra.mxu0 0.0
    %445 = vmatprep.subr.mxu0 0.0
    %446 = vmatpush1.msra.mxu0 0.0
    %447 = vmatprep.subr.mxu0 0.0
    %448 = vmatpush1.msra.mxu0 0.0
    %449 = vmatprep.subr.mxu0 0.0
    %450 = vmatpush1.msra.mxu0 0.0
    %451 = vmatprep.subr.mxu0 0.0
    %452 = vmatpush1.msra.mxu0 0.0
    %453 = vmatprep.subr.mxu0 0.0
    %454 = vmatpush1.msra.mxu0 0.0
    %455 = vmatprep.subr.mxu0 0.0
    %456 = vmatpush1.msra.mxu0 0.0
    %457 = vmatprep.subr.mxu0 0.0
    %458 = vmatpush1.msra.mxu0 0.0
    %459 = vmatprep.subr.mxu0 0.0
    %460 = vmatpush1.msra.mxu0 0.0
    %461 = vmatprep.subr.mxu0 0.0
    %462 = vmatpush1.msra.mxu0 0.0
    %463 = vmatprep.subr.mxu0 0.0
    %464 = vmatpush1.msra.mxu0 0.0
    %465 = vmatprep.subr.mxu0 0.0
    %466 = vmatpush1.msra.mxu0 0.0
    %467 = vmatprep.subr.mxu0 0.0
    %468 = vmatpush1.msra.mxu0 0.0
    %469 = vmatprep.subr.mxu0 0.0
    %470 = vmatpush1.msra.mxu0 0.0
    %471 = vmatprep.subr.mxu0 0.0
    %472 = vmatpush1.msra.mxu0 0.0
    %473 = vmatprep.subr.mxu0 0.0
    %474 = vmatpush1.msra.mxu0 0.0
    %475 = vmatprep.subr.mxu0 0.0
    %476 = vmatpush1.msra.mxu0 0.0
    %477 = vmatprep.subr.mxu0 0.0
    %478 = vmatpush1.msra.mxu0 0.0
    %479 = vmatprep.subr.mxu0 0.0
    %480 = vmatpush1.msra.mxu0 0.0
    %481 = vmatprep.subr.mxu0 0.0
    %482 = vmatpush1.msra.mxu0 0.0
    %483 = vmatprep.subr.mxu0 0.0
    %484 = vmatpush1.msra.mxu0 0.0
    %485 = vmatprep.subr.mxu0 0.0
    %486 = vmatpush1.msra.mxu0 0.0
    %487 = vmatprep.subr.mxu0 0.0
    %488 = vmatpush1.msra.mxu0 0.0
    %489 = vmatprep.subr.mxu0 0.0
    %490 = vmatpush1.msra.mxu0 0.0
    %491 = vmatprep.subr.mxu0 0.0
    %492 = vmatpush1.msra.mxu0 0.0
    %493 = vmatprep.subr.mxu0 0.0
    %494 = vmatpush1.msra.mxu0 0.0
    %495 = vmatprep.subr.mxu0 0.0
    %496 = vmatpush1.msra.mxu0 0.0
    %497 = vmatprep.mubr.f32.mxu0 0.0
    %498 = vmatmul.mubr.f32.gmra.mrb[0].mxu0 %v431
    %v499 = vpop.f32.mrb[0].mxu0
    %v500 = vadd.f32 0.0, %v499
    %v501 = vpop.f32.mrb[0].mxu0
    %502 = vdwg.mxu0
    %v503 = vld [vmem:[%s4] sm:$0xff]
    %v504 = vld [vmem:[%s4 + $0x8] sm:$0xff]
    %v505 = vld [vmem:[%s4 + $0x10] sm:$0xff]
    %v506 = vld [vmem:[%s4 + $0x18] sm:$0xff]
    %s507 = scalar_lea.vmem %s2, 1
    %v508 = vld [vmem:[%s507] sm:$0x1]
    %v510 = vlaneseq
    %v511 = vshrl.u32 %v510, 7
    %v512 = vsub.s32 0, %v511
    %v513 = vrot.slane %v508, %v512
    %v515 = vmul.f32 %v129, %v513
    %v516 = vmul.f32 %v136, %v513
    %s517 = scalar_lea.vmem %s3, 8
    %v518 = vld [vmem:[%s517] sm:$0xff]
    %v519 = vadd.f32 %v515, %v518
    %v520 = vadd.f32 %v516, %v518
    %s521 = scalar_lea.vmem %s2, 3
    %v522 = vld [vmem:[%s521] sm:$0x1]
    %v524 = vlaneseq
    %v525 = vshrl.u32 %v524, 7
    %v526 = vsub.s32 0, %v525
    %v527 = vrot.slane %v522, %v526
    %v529 = vmul.f32 %v129, %v527
    %v530 = vmul.f32 %v136, %v527
    %s531 = scalar_lea.vmem %s3, 24
    %v532 = vld [vmem:[%s531] sm:$0xff]
    %v533 = vadd.f32 %v529, %v532
    %v534 = vadd.f32 %v530, %v532
    %s535 = scalar_lea.vmem %s2, 5
    %v536 = vld [vmem:[%s535] sm:$0x1]
    %v538 = vlaneseq
    %v539 = vshrl.u32 %v538, 7
    %v540 = vsub.s32 0, %v539
    %v541 = vrot.slane %v536, %v540
    %v543 = vmul.f32 %v129, %v541
    %v544 = vmul.f32 %v136, %v541
    %s545 = scalar_lea.vmem %s3, 40
    %v546 = vld [vmem:[%s545] sm:$0xff]
    %v547 = vadd.f32 %v543, %v546
    %v548 = vadd.f32 %v544, %v546
    %v550 = vsel %vm179, %v519, 0
    %v553 = vsel %vm179, %v533, 0
    %555 = vmatprep.subr.mxu0 0.0
    %556 = vmatpush1.xpose.msra.mxu0 %v553
    %557 = vmatprep.subr.mxu0 0.0
    %558 = vmatpush1.xpose.msra.mxu0 0.0
    %559 = vmatprep.subr.mxu0 0.0
    %560 = vmatpush1.xpose.msra.mxu0 0.0
    %561 = vmatprep.subr.mxu0 0.0
    %562 = vmatpush1.xpose.msra.mxu0 0.0
    %563 = vmatprep.subr.mxu0 0.0
    %564 = vmatpush1.xpose.msra.mxu0 0.0
    %565 = vmatprep.subr.mxu0 0.0
    %566 = vmatpush1.xpose.msra.mxu0 0.0
    %567 = vmatprep.subr.mxu0 0.0
    %568 = vmatpush1.xpose.msra.mxu0 0.0
    %569 = vmatprep.subr.mxu0 0.0
    %570 = vmatpush1.xpose.msra.mxu0 0.0
    %571 = vmatprep.subr.mxu0 0.0
    %572 = vmatpush1.xpose.msra.mxu0 0.0
    %573 = vmatprep.subr.mxu0 0.0
    %574 = vmatpush1.xpose.msra.mxu0 0.0
    %575 = vmatprep.subr.mxu0 0.0
    %576 = vmatpush1.xpose.msra.mxu0 0.0
    %577 = vmatprep.subr.mxu0 0.0
    %578 = vmatpush1.xpose.msra.mxu0 0.0
    %579 = vmatprep.subr.mxu0 0.0
    %580 = vmatpush1.xpose.msra.mxu0 0.0
    %581 = vmatprep.subr.mxu0 0.0
    %582 = vmatpush1.xpose.msra.mxu0 0.0
    %583 = vmatprep.subr.mxu0 0.0
    %584 = vmatpush1.xpose.msra.mxu0 0.0
    %585 = vmatprep.subr.mxu0 0.0
    %586 = vmatpush1.xpose.msra.mxu0 0.0
    %587 = vmatprep.subr.mxu0 0.0
    %588 = vmatpush1.xpose.msra.mxu0 0.0
    %589 = vmatprep.subr.mxu0 0.0
    %590 = vmatpush1.xpose.msra.mxu0 0.0
    %591 = vmatprep.subr.mxu0 0.0
    %592 = vmatpush1.xpose.msra.mxu0 0.0
    %593 = vmatprep.subr.mxu0 0.0
    %594 = vmatpush1.xpose.msra.mxu0 0.0
    %595 = vmatprep.subr.mxu0 0.0
    %596 = vmatpush1.xpose.msra.mxu0 0.0
    %597 = vmatprep.subr.mxu0 0.0
    %598 = vmatpush1.xpose.msra.mxu0 0.0
    %599 = vmatprep.subr.mxu0 0.0
    %600 = vmatpush1.xpose.msra.mxu0 0.0
    %601 = vmatprep.subr.mxu0 0.0
    %602 = vmatpush1.xpose.msra.mxu0 0.0
    %603 = vmatprep.subr.mxu0 0.0
    %604 = vmatpush1.xpose.msra.mxu0 0.0
    %605 = vmatprep.subr.mxu0 0.0
    %606 = vmatpush1.xpose.msra.mxu0 0.0
    %607 = vmatprep.subr.mxu0 0.0
    %608 = vmatpush1.xpose.msra.mxu0 0.0
    %609 = vmatprep.subr.mxu0 0.0
    %610 = vmatpush1.xpose.msra.mxu0 0.0
    %611 = vmatprep.subr.mxu0 0.0
    %612 = vmatpush1.xpose.msra.mxu0 0.0
    %613 = vmatprep.subr.mxu0 0.0
    %614 = vmatpush1.xpose.msra.mxu0 0.0
    %615 = vmatprep.subr.mxu0 0.0
    %616 = vmatpush1.xpose.msra.mxu0 0.0
    %617 = vmatprep.subr.mxu0 0.0
    %618 = vmatpush1.xpose.msra.mxu0 0.0
    %619 = vmatprep.mubr.f32.mxu0 0.0
    %620 = vmatmul.mubr.f32.gmra.mrb[0].mxu0 %v550
    %v621 = vpop.f32.mrb[0].mxu0
    %v622 = vadd.f32 0.0, %v621
    %v623 = vpop.f32.mrb[0].mxu0
    %624 = vdwg.mxu0
    %v626 = vsel %vm179, %v520, 0
    %v629 = vsel %vm179, %v534, 0
    %631 = vmatprep.subr.mxu0 0.0
    %632 = vmatpush1.xpose.msra.mxu0 %v629
    %633 = vmatprep.subr.mxu0 0.0
    %634 = vmatpush1.xpose.msra.mxu0 0.0
    %635 = vmatprep.subr.mxu0 0.0
    %636 = vmatpush1.xpose.msra.mxu0 0.0
    %637 = vmatprep.subr.mxu0 0.0
    %638 = vmatpush1.xpose.msra.mxu0 0.0
    %639 = vmatprep.subr.mxu0 0.0
    %640 = vmatpush1.xpose.msra.mxu0 0.0
    %641 = vmatprep.subr.mxu0 0.0
    %642 = vmatpush1.xpose.msra.mxu0 0.0
    %643 = vmatprep.subr.mxu0 0.0
    %644 = vmatpush1.xpose.msra.mxu0 0.0
    %645 = vmatprep.subr.mxu0 0.0
    %646 = vmatpush1.xpose.msra.mxu0 0.0
    %647 = vmatprep.subr.mxu0 0.0
    %648 = vmatpush1.xpose.msra.mxu0 0.0
    %649 = vmatprep.subr.mxu0 0.0
    %650 = vmatpush1.xpose.msra.mxu0 0.0
    %651 = vmatprep.subr.mxu0 0.0
    %652 = vmatpush1.xpose.msra.mxu0 0.0
    %653 = vmatprep.subr.mxu0 0.0
    %654 = vmatpush1.xpose.msra.mxu0 0.0
    %655 = vmatprep.subr.mxu0 0.0
    %656 = vmatpush1.xpose.msra.mxu0 0.0
    %657 = vmatprep.subr.mxu0 0.0
    %658 = vmatpush1.xpose.msra.mxu0 0.0
    %659 = vmatprep.subr.mxu0 0.0
    %660 = vmatpush1.xpose.msra.mxu0 0.0
    %661 = vmatprep.subr.mxu0 0.0
    %662 = vmatpush1.xpose.msra.mxu0 0.0
    %663 = vmatprep.subr.mxu0 0.0
    %664 = vmatpush1.xpose.msra.mxu0 0.0
    %665 = vmatprep.subr.mxu0 0.0
    %666 = vmatpush1.xpose.msra.mxu0 0.0
    %667 = vmatprep.subr.mxu0 0.0
    %668 = vmatpush1.xpose.msra.mxu0 0.0
    %669 = vmatprep.subr.mxu0 0.0
    %670 = vmatpush1.xpose.msra.mxu0 0.0
    %671 = vmatprep.subr.mxu0 0.0
    %672 = vmatpush1.xpose.msra.mxu0 0.0
    %673 = vmatprep.subr.mxu0 0.0
    %674 = vmatpush1.xpose.msra.mxu0 0.0
    %675 = vmatprep.subr.mxu0 0.0
    %676 = vmatpush1.xpose.msra.mxu0 0.0
    %677 = vmatprep.subr.mxu0 0.0
    %678 = vmatpush1.xpose.msra.mxu0 0.0
    %679 = vmatprep.subr.mxu0 0.0
    %680 = vmatpush1.xpose.msra.mxu0 0.0
    %681 = vmatprep.subr.mxu0 0.0
    %682 = vmatpush1.xpose.msra.mxu0 0.0
    %683 = vmatprep.subr.mxu0 0.0
    %684 = vmatpush1.xpose.msra.mxu0 0.0
    %685 = vmatprep.subr.mxu0 0.0
    %686 = vmatpush1.xpose.msra.mxu0 0.0
    %687 = vmatprep.subr.mxu0 0.0
    %688 = vmatpush1.xpose.msra.mxu0 0.0
    %689 = vmatprep.subr.mxu0 0.0
    %690 = vmatpush1.xpose.msra.mxu0 0.0
    %691 = vmatprep.subr.mxu0 0.0
    %692 = vmatpush1.xpose.msra.mxu0 0.0
    %693 = vmatprep.subr.mxu0 0.0
    %694 = vmatpush1.xpose.msra.mxu0 0.0
    %695 = vmatprep.mubr.f32.mxu0 0.0
    %696 = vmatmul.mubr.f32.gmra.mrb[0].mxu0 %v626
    %v697 = vpop.f32.mrb[0].mxu0
    %v698 = vadd.f32 0.0, %v697
    %v699 = vpop.f32.mrb[0].mxu0
    %700 = vdwg.mxu0
    %v701 = vmul.f32 %v622, 0.17677669
    %v702 = vmul.f32 %v698, 0.17677669
    %v703 = vsel %vm334, %v701, -inf
    %704 = vmax.xlane.f32.xlu0 %v703
    %v705 = vpop.xlane.xlu0 %704
    %v706 = vsel %vm334, %v702, -inf
    %707 = vmax.xlane.f32.xlu0 %v706
    %v708 = vpop.xlane.xlu0 %707
    %v709 = vsub.f32 %v701, %v705
    %v710 = vsub.f32 %v702, %v708
    %v711 = vmul.f32 %v709, 1.442695
    %v712 = vpow.pop %v711
    %v713 = vmul.f32 %v710, 1.442695
    %v714 = vpow.pop %v713
    %v715 = vsel %vm334, %v712, 0.0
    %716 = vadd.xlane.f32.xlu0 %v715
    %v717 = vpop.xlane.xlu0 %716
    %v718 = vsel %vm334, %v714, 0.0
    %719 = vadd.xlane.f32.xlu0 %v718
    %v720 = vpop.xlane.xlu0 %719
    %v721 = vrcp.pop %v717
    %v722 = vrcp.pop %v720
    %v723 = vmul.f32 %v712, %v721
    %v724 = vmul.f32 %v714, %v722
    %v726 = vsel %vm334, %v723, 0
    %728 = vmatprep.subr.mxu0 0.0
    %729 = vmatpush1.msra.mxu0 %v547
    %730 = vmatprep.subr.mxu0 0.0
    %731 = vmatpush1.msra.mxu0 0.0
    %732 = vmatprep.subr.mxu0 0.0
    %733 = vmatpush1.msra.mxu0 0.0
    %734 = vmatprep.subr.mxu0 0.0
    %735 = vmatpush1.msra.mxu0 0.0
    %736 = vmatprep.subr.mxu0 0.0
    %737 = vmatpush1.msra.mxu0 0.0
    %738 = vmatprep.subr.mxu0 0.0
    %739 = vmatpush1.msra.mxu0 0.0
    %740 = vmatprep.subr.mxu0 0.0
    %741 = vmatpush1.msra.mxu0 0.0
    %742 = vmatprep.subr.mxu0 0.0
    %743 = vmatpush1.msra.mxu0 0.0
    %744 = vmatprep.subr.mxu0 0.0
    %745 = vmatpush1.msra.mxu0 0.0
    %746 = vmatprep.subr.mxu0 0.0
    %747 = vmatpush1.msra.mxu0 0.0
    %748 = vmatprep.subr.mxu0 0.0
    %749 = vmatpush1.msra.mxu0 0.0
    %750 = vmatprep.subr.mxu0 0.0
    %751 = vmatpush1.msra.mxu0 0.0
    %752 = vmatprep.subr.mxu0 0.0
    %753 = vmatpush1.msra.mxu0 0.0
    %754 = vmatprep.subr.mxu0 0.0
    %755 = vmatpush1.msra.mxu0 0.0
    %756 = vmatprep.subr.mxu0 0.0
    %757 = vmatpush1.msra.mxu0 0.0
    %758 = vmatprep.subr.mxu0 0.0
    %759 = vmatpush1.msra.mxu0 0.0
    %760 = vmatprep.subr.mxu0 0.0
    %761 = vmatpush1.msra.mxu0 0.0
    %762 = vmatprep.subr.mxu0 0.0
    %763 = vmatpush1.msra.mxu0 0.0
    %764 = vmatprep.subr.mxu0 0.0
    %765 = vmatpush1.msra.mxu0 0.0
    %766 = vmatprep.subr.mxu0 0.0
    %767 = vmatpush1.msra.mxu0 0.0
    %768 = vmatprep.subr.mxu0 0.0
    %769 = vmatpush1.msra.mxu0 0.0
    %770 = vmatprep.subr.mxu0 0.0
    %771 = vmatpush1.msra.mxu0 0.0
    %772 = vmatprep.subr.mxu0 0.0
    %773 = vmatpush1.msra.mxu0 0.0
    %774 = vmatprep.subr.mxu0 0.0
    %775 = vmatpush1.msra.mxu0 0.0
    %776 = vmatprep.subr.mxu0 0.0
    %777 = vmatpush1.msra.mxu0 0.0
    %778 = vmatprep.subr.mxu0 0.0
    %779 = vmatpush1.msra.mxu0 0.0
    %780 = vmatprep.subr.mxu0 0.0
    %781 = vmatpush1.msra.mxu0 0.0
    %782 = vmatprep.subr.mxu0 0.0
    %783 = vmatpush1.msra.mxu0 0.0
    %784 = vmatprep.subr.mxu0 0.0
    %785 = vmatpush1.msra.mxu0 0.0
    %786 = vmatprep.subr.mxu0 0.0
    %787 = vmatpush1.msra.mxu0 0.0
    %788 = vmatprep.subr.mxu0 0.0
    %789 = vmatpush1.msra.mxu0 0.0
    %790 = vmatprep.subr.mxu0 0.0
    %791 = vmatpush1.msra.mxu0 0.0
    %792 = vmatprep.mubr.f32.mxu0 0.0
    %793 = vmatmul.mubr.f32.gmra.mrb[0].mxu0 %v726
    %v794 = vpop.f32.mrb[0].mxu0
    %v795 = vadd.f32 0.0, %v794
    %v796 = vpop.f32.mrb[0].mxu0
    %797 = vdwg.mxu0
    %v799 = vsel %vm334, %v724, 0
    %801 = vmatprep.subr.mxu0 0.0
    %802 = vmatpush1.msra.mxu0 %v548
    %803 = vmatprep.subr.mxu0 0.0
    %804 = vmatpush1.msra.mxu0 0.0
    %805 = vmatprep.subr.mxu0 0.0
    %806 = vmatpush1.msra.mxu0 0.0
    %807 = vmatprep.subr.mxu0 0.0
    %808 = vmatpush1.msra.mxu0 0.0
    %809 = vmatprep.subr.mxu0 0.0
    %810 = vmatpush1.msra.mxu0 0.0
    %811 = vmatprep.subr.mxu0 0.0
    %812 = vmatpush1.msra.mxu0 0.0
    %813 = vmatprep.subr.mxu0 0.0
    %814 = vmatpush1.msra.mxu0 0.0
    %815 = vmatprep.subr.mxu0 0.0
    %816 = vmatpush1.msra.mxu0 0.0
    %817 = vmatprep.subr.mxu0 0.0
    %818 = vmatpush1.msra.mxu0 0.0
    %819 = vmatprep.subr.mxu0 0.0
    %820 = vmatpush1.msra.mxu0 0.0
    %821 = vmatprep.subr.mxu0 0.0
    %822 = vmatpush1.msra.mxu0 0.0
    %823 = vmatprep.subr.mxu0 0.0
    %824 = vmatpush1.msra.mxu0 0.0
    %825 = vmatprep.subr.mxu0 0.0
    %826 = vmatpush1.msra.mxu0 0.0
    %827 = vmatprep.subr.mxu0 0.0
    %828 = vmatpush1.msra.mxu0 0.0
    %829 = vmatprep.subr.mxu0 0.0
    %830 = vmatpush1.msra.mxu0 0.0
    %831 = vmatprep.subr.mxu0 0.0
    %832 = vmatpush1.msra.mxu0 0.0
    %833 = vmatprep.subr.mxu0 0.0
    %834 = vmatpush1.msra.mxu0 0.0
    %835 = vmatprep.subr.mxu0 0.0
    %836 = vmatpush1.msra.mxu0 0.0
    %837 = vmatprep.subr.mxu0 0.0
    %838 = vmatpush1.msra.mxu0 0.0
    %839 = vmatprep.subr.mxu0 0.0
    %840 = vmatpush1.msra.mxu0 0.0
    %841 = vmatprep.subr.mxu0 0.0
    %842 = vmatpush1.msra.mxu0 0.0
    %843 = vmatprep.subr.mxu0 0.0
    %844 = vmatpush1.msra.mxu0 0.0
    %845 = vmatprep.subr.mxu0 0.0
    %846 = vmatpush1.msra.mxu0 0.0
    %847 = vmatprep.subr.mxu0 0.0
    %848 = vmatpush1.msra.mxu0 0.0
    %849 = vmatprep.subr.mxu0 0.0
    %850 = vmatpush1.msra.mxu0 0.0
    %851 = vmatprep.subr.mxu0 0.0
    %852 = vmatpush1.msra.mxu0 0.0
    %853 = vmatprep.subr.mxu0 0.0
    %854 = vmatpush1.msra.mxu0 0.0
    %855 = vmatprep.subr.mxu0 0.0
    %856 = vmatpush1.msra.mxu0 0.0
    %857 = vmatprep.subr.mxu0 0.0
    %858 = vmatpush1.msra.mxu0 0.0
    %859 = vmatprep.subr.mxu0 0.0
    %860 = vmatpush1.msra.mxu0 0.0
    %861 = vmatprep.subr.mxu0 0.0
    %862 = vmatpush1.msra.mxu0 0.0
    %863 = vmatprep.subr.mxu0 0.0
    %864 = vmatpush1.msra.mxu0 0.0
    %865 = vmatprep.mubr.f32.mxu0 0.0
    %866 = vmatmul.mubr.f32.gmra.mrb[0].mxu0 %v799
    %v867 = vpop.f32.mrb[0].mxu0
    %v868 = vadd.f32 0.0, %v867
    %v869 = vpop.f32.mrb[0].mxu0
    %870 = vdwg.mxu0
    %s871 = scalar_lea.vmem %s4, 32
    %v872 = vld [vmem:[%s871] sm:$0xff]
    %v873 = vld [vmem:[%s871 + $0x8] sm:$0xff]
    %v874 = vld [vmem:[%s871 + $0x10] sm:$0xff]
    %v875 = vld [vmem:[%s871 + $0x18] sm:$0xff]
    %v877 = vsel %vm179, %v795, 0
    %v880 = vsel %vm179, %v868, 0
    %882 = vmatprep.subr.mxu0 0.0
    %883 = vmatpush1.msra.mxu0 %v872
    %884 = vmatprep.subr.mxu0 0.0
    %885 = vmatpush1.msra.mxu0 %v873
    %886 = vmatprep.subr.mxu0 0.0
    %887 = vmatpush1.msra.mxu0 %v874
    %888 = vmatprep.subr.mxu0 0.0
    %889 = vmatpush1.msra.mxu0 %v875
    %890 = vmatprep.subr.mxu0 0.0
    %891 = vmatpush1.msra.mxu0 0.0
    %892 = vmatprep.subr.mxu0 0.0
    %893 = vmatpush1.msra.mxu0 0.0
    %894 = vmatprep.subr.mxu0 0.0
    %895 = vmatpush1.msra.mxu0 0.0
    %896 = vmatprep.subr.mxu0 0.0
    %897 = vmatpush1.msra.mxu0 0.0
    %898 = vmatprep.subr.mxu0 0.0
    %899 = vmatpush1.msra.mxu0 0.0
    %900 = vmatprep.subr.mxu0 0.0
    %901 = vmatpush1.msra.mxu0 0.0
    %902 = vmatprep.subr.mxu0 0.0
    %903 = vmatpush1.msra.mxu0 0.0
    %904 = vmatprep.subr.mxu0 0.0
    %905 = vmatpush1.msra.mxu0 0.0
    %906 = vmatprep.subr.mxu0 0.0
    %907 = vmatpush1.msra.mxu0 0.0
    %908 = vmatprep.subr.mxu0 0.0
    %909 = vmatpush1.msra.mxu0 0.0
    %910 = vmatprep.subr.mxu0 0.0
    %911 = vmatpush1.msra.mxu0 0.0
    %912 = vmatprep.subr.mxu0 0.0
    %913 = vmatpush1.msra.mxu0 0.0
    %914 = vmatprep.subr.mxu0 0.0
    %915 = vmatpush1.msra.mxu0 0.0
    %916 = vmatprep.subr.mxu0 0.0
    %917 = vmatpush1.msra.mxu0 0.0
    %918 = vmatprep.subr.mxu0 0.0
    %919 = vmatpush1.msra.mxu0 0.0
    %920 = vmatprep.subr.mxu0 0.0
    %921 = vmatpush1.msra.mxu0 0.0
    %922 = vmatprep.subr.mxu0 0.0
    %923 = vmatpush1.msra.mxu0 0.0
    %924 = vmatprep.subr.mxu0 0.0
    %925 = vmatpush1.msra.mxu0 0.0
    %926 = vmatprep.subr.mxu0 0.0
    %927 = vmatpush1.msra.mxu0 0.0
    %928 = vmatprep.subr.mxu0 0.0
    %929 = vmatpush1.msra.mxu0 0.0
    %930 = vmatprep.subr.mxu0 0.0
    %931 = vmatpush1.msra.mxu0 0.0
    %932 = vmatprep.subr.mxu0 0.0
    %933 = vmatpush1.msra.mxu0 0.0
    %934 = vmatprep.subr.mxu0 0.0
    %935 = vmatpush1.msra.mxu0 0.0
    %936 = vmatprep.subr.mxu0 0.0
    %937 = vmatpush1.msra.mxu0 0.0
    %938 = vmatprep.subr.mxu0 0.0
    %939 = vmatpush1.msra.mxu0 0.0
    %940 = vmatprep.subr.mxu0 0.0
    %941 = vmatpush1.msra.mxu0 0.0
    %942 = vmatprep.subr.mxu0 0.0
    %943 = vmatpush1.msra.mxu0 0.0
    %944 = vmatprep.subr.mxu0 0.0
    %945 = vmatpush1.msra.mxu0 0.0
    %946 = vmatprep.mubr.f32.mxu0 0.0
    %947 = vmatmul.mubr.f32.gmra.mrb[0].mxu0 %v877
    %v948 = vpop.f32.mrb[0].mxu0
    %v949 = vadd.f32 0.0, %v948
    %v950 = vpop.f32.mrb[0].mxu0
    %951 = vmatprep.mubr.f32.mxu0 0.0
    %952 = vmatmul.mubr.f32.gmra.mrb[0].mxu0 %v880
    %v953 = vpop.f32.mrb[0].mxu0
    %v954 = vadd.f32 0.0, %v953
    %v955 = vpop.f32.mrb[0].mxu0
    %956 = vdwg.mxu0
    %v958 = vsel %vm179, %v427, 0
    %v961 = vsel %vm179, %v500, 0
    %963 = vmatprep.subr.mxu0 0.0
    %964 = vmatpush1.msra.mxu0 %v503
    %965 = vmatprep.subr.mxu0 0.0
    %966 = vmatpush1.msra.mxu0 %v504
    %967 = vmatprep.subr.mxu0 0.0
    %968 = vmatpush1.msra.mxu0 %v505
    %969 = vmatprep.subr.mxu0 0.0
    %970 = vmatpush1.msra.mxu0 %v506
    %971 = vmatprep.subr.mxu0 0.0
    %972 = vmatpush1.msra.mxu0 0.0
    %973 = vmatprep.subr.mxu0 0.0
    %974 = vmatpush1.msra.mxu0 0.0
    %975 = vmatprep.subr.mxu0 0.0
    %976 = vmatpush1.msra.mxu0 0.0
    %977 = vmatprep.subr.mxu0 0.0
    %978 = vmatpush1.msra.mxu0 0.0
    %979 = vmatprep.subr.mxu0 0.0
    %980 = vmatpush1.msra.mxu0 0.0
    %981 = vmatprep.subr.mxu0 0.0
    %982 = vmatpush1.msra.mxu0 0.0
    %983 = vmatprep.subr.mxu0 0.0
    %984 = vmatpush1.msra.mxu0 0.0
    %985 = vmatprep.subr.mxu0 0.0
    %986 = vmatpush1.msra.mxu0 0.0
    %987 = vmatprep.subr.mxu0 0.0
    %988 = vmatpush1.msra.mxu0 0.0
    %989 = vmatprep.subr.mxu0 0.0
    %990 = vmatpush1.msra.mxu0 0.0
    %991 = vmatprep.subr.mxu0 0.0
    %992 = vmatpush1.msra.mxu0 0.0
    %993 = vmatprep.subr.mxu0 0.0
    %994 = vmatpush1.msra.mxu0 0.0
    %995 = vmatprep.subr.mxu0 0.0
    %996 = vmatpush1.msra.mxu0 0.0
    %997 = vmatprep.subr.mxu0 0.0
    %998 = vmatpush1.msra.mxu0 0.0
    %999 = vmatprep.subr.mxu0 0.0
    %1000 = vmatpush1.msra.mxu0 0.0
    %1001 = vmatprep.subr.mxu0 0.0
    %1002 = vmatpush1.msra.mxu0 0.0
    %1003 = vmatprep.subr.mxu0 0.0
    %1004 = vmatpush1.msra.mxu0 0.0
    %1005 = vmatprep.subr.mxu0 0.0
    %1006 = vmatpush1.msra.mxu0 0.0
    %1007 = vmatprep.subr.mxu0 0.0
    %1008 = vmatpush1.msra.mxu0 0.0
    %1009 = vmatprep.subr.mxu0 0.0
    %1010 = vmatpush1.msra.mxu0 0.0
    %1011 = vmatprep.subr.mxu0 0.0
    %1012 = vmatpush1.msra.mxu0 0.0
    %1013 = vmatprep.subr.mxu0 0.0
    %1014 = vmatpush1.msra.mxu0 0.0
    %1015 = vmatprep.subr.mxu0 0.0
    %1016 = vmatpush1.msra.mxu0 0.0
    %1017 = vmatprep.subr.mxu0 0.0
    %1018 = vmatpush1.msra.mxu0 0.0
    %1019 = vmatprep.subr.mxu0 0.0
    %1020 = vmatpush1.msra.mxu0 0.0
    %1021 = vmatprep.subr.mxu0 0.0
    %1022 = vmatpush1.msra.mxu0 0.0
    %1023 = vmatprep.subr.mxu0 0.0
    %1024 = vmatpush1.msra.mxu0 0.0
    %1025 = vmatprep.subr.mxu0 0.0
    %1026 = vmatpush1.msra.mxu0 0.0
    %1027 = vmatprep.mubr.f32.mxu0 0.0
    %1028 = vmatmul.mubr.f32.gmra.mrb[0].mxu0 %v958
    %v1029 = vpop.f32.mrb[0].mxu0
    %v1030 = vadd.f32 %v949, %v1029
    %v1031 = vpop.f32.mrb[0].mxu0
    %1032 = vmatprep.mubr.f32.mxu0 0.0
    %1033 = vmatmul.mubr.f32.gmra.mrb[0].mxu0 %v961
    %v1034 = vpop.f32.mrb[0].mxu0
    %v1035 = vadd.f32 %v954, %v1034
    %v1036 = vpop.f32.mrb[0].mxu0
    %1037 = vdwg.mxu0
    %v1039 = vlaneseq
    %v1040 = vshrl.u32 %v1039, 7
    %v1041 = vsub.s32 0, %v1040
    %v1042 = vrot.slane %v51, %v1041
    %v1044 = vadd.f32 %v1030, %v1042
    %v1045 = vadd.f32 %v1035, %v1042
    %v1046 = vadd.f32 %v137, %v1044
    %v1047 = vadd.f32 %v138, %v1045
    %v1048 = vsel %vm179, %v1046, 0.0
    %1049 = vadd.xlane.f32.xlu0 %v1048
    %v1050 = vpop.xlane.xlu0 %1049
    %v1051 = vsel %vm179, %v1047, 0.0
    %1052 = vadd.xlane.f32.xlu0 %v1051
    %v1053 = vpop.xlane.xlu0 %1052
    %v1054 = vrcp.pop 32.0
    %v1055 = vmul.f32 %v1050, %v1054
    %v1056 = vmul.f32 %v1053, %v1054
    %v1057 = vsub.f32 %v1046, %v1055
    %v1058 = vsub.f32 %v1047, %v1056
    %v1059 = vmul.f32 %v1057, %v1057
    %v1060 = vmul.f32 %v1058, %v1058
    %v1061 = vsel %vm179, %v1059, 0.0
    %1062 = vadd.xlane.f32.xlu0 %v1061
    %v1063 = vpop.xlane.xlu0 %1062
    %v1064 = vsel %vm179, %v1060, 0.0
    %1065 = vadd.xlane.f32.xlu0 %v1064
    %v1066 = vpop.xlane.xlu0 %1065
    %v1067 = vmul.f32 %v1063, %v1054
    %v1068 = vmul.f32 %v1066, %v1054
    %v1069 = vadd.f32 %v1067, 1e-05
    %v1070 = vadd.f32 %v1068, 1e-05
    %v1071 = vrsqrt.pop %v1069
    %v1072 = vrsqrt.pop %v1070
    %v1073 = vmul.f32 %v1057, %v1071
    %v1074 = vmul.f32 %v1058, %v1072
    %v1076 = vlaneseq
    %v1077 = vshrl.u32 %v1076, 7
    %v1078 = vsub.s32 0, %v1077
    %v1079 = vrot.slane %v53, %v1078
    %v1081 = vmul.f32 %v1073, %v1079
    %v1082 = vmul.f32 %v1074, %v1079
    %v1084 = vlaneseq
    %v1085 = vshrl.u32 %v1084, 7
    %v1086 = vsub.s32 0, %v1085
    %v1087 = vrot.slane %v55, %v1086
    %v1089 = vadd.f32 %v1081, %v1087
    %v1090 = vadd.f32 %v1082, %v1087
    %v1091 = vld [vmem:[#allocation2] sm:$0xff]
    %v1092 = vld [vmem:[#allocation2 + $0x8] sm:$0xff]
    %v1093 = vld [vmem:[#allocation2 + $0x10] sm:$0xff]
    %v1094 = vld [vmem:[#allocation2 + $0x18] sm:$0xff]
    %v1095 = vld [vmem:[#allocation2 + $0x20] sm:$0xff]
    %v1096 = vld [vmem:[#allocation2 + $0x28] sm:$0xff]
    %v1097 = vld [vmem:[#allocation2 + $0x30] sm:$0xff]
    %v1098 = vld [vmem:[#allocation2 + $0x38] sm:$0xff]
    %v1099 = vld [vmem:[#allocation2 + $0x40] sm:$0xff]
    %v1100 = vld [vmem:[#allocation2 + $0x48] sm:$0xff]
    %v1101 = vld [vmem:[#allocation2 + $0x50] sm:$0xff]
    %v1102 = vld [vmem:[#allocation2 + $0x58] sm:$0xff]
    %v1103 = vld [vmem:[#allocation2 + $0x60] sm:$0xff]
    %v1104 = vld [vmem:[#allocation2 + $0x68] sm:$0xff]
    %v1105 = vld [vmem:[#allocation2 + $0x70] sm:$0xff]
    %v1106 = vld [vmem:[#allocation2 + $0x78] sm:$0xff]
    %s1107 = scalar_lea.vmem [#allocation2], 128
    %v1108 = vld [vmem:[%s1107] sm:$0xff]
    %v1109 = vld [vmem:[%s1107 + $0x8] sm:$0xff]
    %v1110 = vld [vmem:[%s1107 + $0x10] sm:$0xff]
    %v1111 = vld [vmem:[%s1107 + $0x18] sm:$0xff]
    %v1112 = vld [vmem:[%s1107 + $0x20] sm:$0xff]
    %v1113 = vld [vmem:[%s1107 + $0x28] sm:$0xff]
    %v1114 = vld [vmem:[%s1107 + $0x30] sm:$0xff]
    %v1115 = vld [vmem:[%s1107 + $0x38] sm:$0xff]
    %v1116 = vld [vmem:[%s1107 + $0x40] sm:$0xff]
    %v1117 = vld [vmem:[%s1107 + $0x48] sm:$0xff]
    %v1118 = vld [vmem:[%s1107 + $0x50] sm:$0xff]
    %v1119 = vld [vmem:[%s1107 + $0x58] sm:$0xff]
    %v1120 = vld [vmem:[%s1107 + $0x60] sm:$0xff]
    %v1121 = vld [vmem:[%s1107 + $0x68] sm:$0xff]
    %v1122 = vld [vmem:[%s1107 + $0x70] sm:$0xff]
    %v1123 = vld [vmem:[%s1107 + $0x78] sm:$0xff]
    %v1126 = vrot.slane %v1089, 1
    %vm1127 = vcmask 1041409
    %v1128 = vsel %vm1127, %v1090, %v1126
    %v1129 = vsel %vm179, %v1128, 0
    %1131 = vmatprep.subr.mxu0 %v1109
    %1132 = vmatpush1.msra.mxu0 %v1108
    %1133 = vmatprep.subr.mxu0 %v1113
    %1134 = vmatpush1.msra.mxu0 %v1112
    %1135 = vmatprep.subr.mxu0 %v1117
    %1136 = vmatpush1.msra.mxu0 %v1116
    %1137 = vmatprep.subr.mxu0 %v1121
    %1138 = vmatpush1.msra.mxu0 %v1120
    %1139 = vmatprep.subr.mxu0 0.0
    %1140 = vmatpush1.msra.mxu0 0.0
    %1141 = vmatprep.subr.mxu0 0.0
    %1142 = vmatpush1.msra.mxu0 0.0
    %1143 = vmatprep.subr.mxu0 0.0
    %1144 = vmatpush1.msra.mxu0 0.0
    %1145 = vmatprep.subr.mxu0 0.0
    %1146 = vmatpush1.msra.mxu0 0.0
    %1147 = vmatprep.subr.mxu0 0.0
    %1148 = vmatpush1.msra.mxu0 0.0
    %1149 = vmatprep.subr.mxu0 0.0
    %1150 = vmatpush1.msra.mxu0 0.0
    %1151 = vmatprep.subr.mxu0 0.0
    %1152 = vmatpush1.msra.mxu0 0.0
    %1153 = vmatprep.subr.mxu0 0.0
    %1154 = vmatpush1.msra.mxu0 0.0
    %1155 = vmatprep.subr.mxu0 0.0
    %1156 = vmatpush1.msra.mxu0 0.0
    %1157 = vmatprep.subr.mxu0 0.0
    %1158 = vmatpush1.msra.mxu0 0.0
    %1159 = vmatprep.subr.mxu0 0.0
    %1160 = vmatpush1.msra.mxu0 0.0
    %1161 = vmatprep.subr.mxu0 0.0
    %1162 = vmatpush1.msra.mxu0 0.0
    %1163 = vmatprep.subr.mxu0 0.0
    %1164 = vmatpush1.msra.mxu0 0.0
    %1165 = vmatprep.subr.mxu0 0.0
    %1166 = vmatpush1.msra.mxu0 0.0
    %1167 = vmatprep.subr.mxu0 0.0
    %1168 = vmatpush1.msra.mxu0 0.0
    %1169 = vmatprep.subr.mxu0 0.0
    %1170 = vmatpush1.msra.mxu0 0.0
    %1171 = vmatprep.subr.mxu0 0.0
    %1172 = vmatpush1.msra.mxu0 0.0
    %1173 = vmatprep.subr.mxu0 0.0
    %1174 = vmatpush1.msra.mxu0 0.0
    %1175 = vmatprep.subr.mxu0 0.0
    %1176 = vmatpush1.msra.mxu0 0.0
    %1177 = vmatprep.subr.mxu0 0.0
    %1178 = vmatpush1.msra.mxu0 0.0
    %1179 = vmatprep.subr.mxu0 0.0
    %1180 = vmatpush1.msra.mxu0 0.0
    %1181 = vmatprep.subr.mxu0 0.0
    %1182 = vmatpush1.msra.mxu0 0.0
    %1183 = vmatprep.subr.mxu0 0.0
    %1184 = vmatpush1.msra.mxu0 0.0
    %1185 = vmatprep.subr.mxu0 0.0
    %1186 = vmatpush1.msra.mxu0 0.0
    %1187 = vmatprep.subr.mxu0 0.0
    %1188 = vmatpush1.msra.mxu0 0.0
    %1189 = vmatprep.subr.mxu0 0.0
    %1190 = vmatpush1.msra.mxu0 0.0
    %1191 = vmatprep.subr.mxu0 0.0
    %1192 = vmatpush1.msra.mxu0 0.0
    %1193 = vmatprep.subr.mxu0 0.0
    %1194 = vmatpush1.msra.mxu0 0.0
    %1195 = vmatprep.mubr.f32.mxu0 0.0
    %1196 = vmatmul.mubr.f32.gmra.mrb[0].mxu0 %v1129
    %v1197 = vpop.f32.mrb[0].mxu0
    %v1198 = vadd.f32 0.0, %v1197
    %v1199 = vpop.f32.mrb[0].mxu0
    %v1200 = vadd.f32 0.0, %v1199
    %1201 = vdwg.mxu0
    %1202 = vmatprep.subr.mxu0 %v1111
    %1203 = vmatpush1.msra.mxu0 %v1110
    %1204 = vmatprep.subr.mxu0 %v1115
    %1205 = vmatpush1.msra.mxu0 %v1114
    %1206 = vmatprep.subr.mxu0 %v1119
    %1207 = vmatpush1.msra.mxu0 %v1118
    %1208 = vmatprep.subr.mxu0 %v1123
    %1209 = vmatpush1.msra.mxu0 %v1122
    %1210 = vmatprep.subr.mxu0 0.0
    %1211 = vmatpush1.msra.mxu0 0.0
    %1212 = vmatprep.subr.mxu0 0.0
    %1213 = vmatpush1.msra.mxu0 0.0
    %1214 = vmatprep.subr.mxu0 0.0
    %1215 = vmatpush1.msra.mxu0 0.0
    %1216 = vmatprep.subr.mxu0 0.0
    %1217 = vmatpush1.msra.mxu0 0.0
    %1218 = vmatprep.subr.mxu0 0.0
    %1219 = vmatpush1.msra.mxu0 0.0
    %1220 = vmatprep.subr.mxu0 0.0
    %1221 = vmatpush1.msra.mxu0 0.0
    %1222 = vmatprep.subr.mxu0 0.0
    %1223 = vmatpush1.msra.mxu0 0.0
    %1224 = vmatprep.subr.mxu0 0.0
    %1225 = vmatpush1.msra.mxu0 0.0
    %1226 = vmatprep.subr.mxu0 0.0
    %1227 = vmatpush1.msra.mxu0 0.0
    %1228 = vmatprep.subr.mxu0 0.0
    %1229 = vmatpush1.msra.mxu0 0.0
    %1230 = vmatprep.subr.mxu0 0.0
    %1231 = vmatpush1.msra.mxu0 0.0
    %1232 = vmatprep.subr.mxu0 0.0
    %1233 = vmatpush1.msra.mxu0 0.0
    %1234 = vmatprep.subr.mxu0 0.0
    %1235 = vmatpush1.msra.mxu0 0.0
    %1236 = vmatprep.subr.mxu0 0.0
    %1237 = vmatpush1.msra.mxu0 0.0
    %1238 = vmatprep.subr.mxu0 0.0
    %1239 = vmatpush1.msra.mxu0 0.0
    %1240 = vmatprep.subr.mxu0 0.0
    %1241 = vmatpush1.msra.mxu0 0.0
    %1242 = vmatprep.subr.mxu0 0.0
    %1243 = vmatpush1.msra.mxu0 0.0
    %1244 = vmatprep.subr.mxu0 0.0
    %1245 = vmatpush1.msra.mxu0 0.0
    %1246 = vmatprep.subr.mxu0 0.0
    %1247 = vmatpush1.msra.mxu0 0.0
    %1248 = vmatprep.subr.mxu0 0.0
    %1249 = vmatpush1.msra.mxu0 0.0
    %1250 = vmatprep.subr.mxu0 0.0
    %1251 = vmatpush1.msra.mxu0 0.0
    %1252 = vmatprep.subr.mxu0 0.0
    %1253 = vmatpush1.msra.mxu0 0.0
    %1254 = vmatprep.subr.mxu0 0.0
    %1255 = vmatpush1.msra.mxu0 0.0
    %1256 = vmatprep.subr.mxu0 0.0
    %1257 = vmatpush1.msra.mxu0 0.0
    %1258 = vmatprep.subr.mxu0 0.0
    %1259 = vmatpush1.msra.mxu0 0.0
    %1260 = vmatprep.subr.mxu0 0.0
    %1261 = vmatpush1.msra.mxu0 0.0
    %1262 = vmatprep.subr.mxu0 0.0
    %1263 = vmatpush1.msra.mxu0 0.0
    %1264 = vmatprep.subr.mxu0 0.0
    %1265 = vmatpush1.msra.mxu0 0.0
    %1266 = vmatprep.mubr.f32.mxu0 0.0
    %1267 = vmatmul.mubr.f32.gmra.mrb[0].mxu0 %v1129
    %v1268 = vpop.f32.mrb[0].mxu0
    %v1269 = vadd.f32 0.0, %v1268
    %v1270 = vpop.f32.mrb[0].mxu0
    %v1271 = vadd.f32 0.0, %v1270
    %1272 = vdwg.mxu0
    %v1273 = vrot.slane %v1090, 7
    %v1274 = vsel %vm1127, %v1273, %v1089
    %v1275 = vsel %vm179, %v1274, 0
    %1277 = vmatprep.subr.mxu0 %v1092
    %1278 = vmatpush1.msra.mxu0 %v1091
    %1279 = vmatprep.subr.mxu0 %v1096
    %1280 = vmatpush1.msra.mxu0 %v1095
    %1281 = vmatprep.subr.mxu0 %v1100
    %1282 = vmatpush1.msra.mxu0 %v1099
    %1283 = vmatprep.subr.mxu0 %v1104
    %1284 = vmatpush1.msra.mxu0 %v1103
    %1285 = vmatprep.subr.mxu0 0.0
    %1286 = vmatpush1.msra.mxu0 0.0
    %1287 = vmatprep.subr.mxu0 0.0
    %1288 = vmatpush1.msra.mxu0 0.0
    %1289 = vmatprep.subr.mxu0 0.0
    %1290 = vmatpush1.msra.mxu0 0.0
    %1291 = vmatprep.subr.mxu0 0.0
    %1292 = vmatpush1.msra.mxu0 0.0
    %1293 = vmatprep.subr.mxu0 0.0
    %1294 = vmatpush1.msra.mxu0 0.0
    %1295 = vmatprep.subr.mxu0 0.0
    %1296 = vmatpush1.msra.mxu0 0.0
    %1297 = vmatprep.subr.mxu0 0.0
    %1298 = vmatpush1.msra.mxu0 0.0
    %1299 = vmatprep.subr.mxu0 0.0
    %1300 = vmatpush1.msra.mxu0 0.0
    %1301 = vmatprep.subr.mxu0 0.0
    %1302 = vmatpush1.msra.mxu0 0.0
    %1303 = vmatprep.subr.mxu0 0.0
    %1304 = vmatpush1.msra.mxu0 0.0
    %1305 = vmatprep.subr.mxu0 0.0
    %1306 = vmatpush1.msra.mxu0 0.0
    %1307 = vmatprep.subr.mxu0 0.0
    %1308 = vmatpush1.msra.mxu0 0.0
    %1309 = vmatprep.subr.mxu0 0.0
    %1310 = vmatpush1.msra.mxu0 0.0
    %1311 = vmatprep.subr.mxu0 0.0
    %1312 = vmatpush1.msra.mxu0 0.0
    %1313 = vmatprep.subr.mxu0 0.0
    %1314 = vmatpush1.msra.mxu0 0.0
    %1315 = vmatprep.subr.mxu0 0.0
    %1316 = vmatpush1.msra.mxu0 0.0
    %1317 = vmatprep.subr.mxu0 0.0
    %1318 = vmatpush1.msra.mxu0 0.0
    %1319 = vmatprep.subr.mxu0 0.0
    %1320 = vmatpush1.msra.mxu0 0.0
    %1321 = vmatprep.subr.mxu0 0.0
    %1322 = vmatpush1.msra.mxu0 0.0
    %1323 = vmatprep.subr.mxu0 0.0
    %1324 = vmatpush1.msra.mxu0 0.0
    %1325 = vmatprep.subr.mxu0 0.0
    %1326 = vmatpush1.msra.mxu0 0.0
    %1327 = vmatprep.subr.mxu0 0.0
    %1328 = vmatpush1.msra.mxu0 0.0
    %1329 = vmatprep.subr.mxu0 0.0
    %1330 = vmatpush1.msra.mxu0 0.0
    %1331 = vmatprep.subr.mxu0 0.0
    %1332 = vmatpush1.msra.mxu0 0.0
    %1333 = vmatprep.subr.mxu0 0.0
    %1334 = vmatpush1.msra.mxu0 0.0
    %1335 = vmatprep.subr.mxu0 0.0
    %1336 = vmatpush1.msra.mxu0 0.0
    %1337 = vmatprep.subr.mxu0 0.0
    %1338 = vmatpush1.msra.mxu0 0.0
    %1339 = vmatprep.subr.mxu0 0.0
    %1340 = vmatpush1.msra.mxu0 0.0
    %1341 = vmatprep.mubr.f32.mxu0 0.0
    %1342 = vmatmul.mubr.f32.gmra.mrb[0].mxu0 %v1275
    %v1343 = vpop.f32.mrb[0].mxu0
    %v1344 = vadd.f32 %v1198, %v1343
    %v1345 = vpop.f32.mrb[0].mxu0
    %v1346 = vadd.f32 %v1200, %v1345
    %1347 = vdwg.mxu0
    %1348 = vmatprep.subr.mxu0 %v1094
    %1349 = vmatpush1.msra.mxu0 %v1093
    %1350 = vmatprep.subr.mxu0 %v1098
    %1351 = vmatpush1.msra.mxu0 %v1097
    %1352 = vmatprep.subr.mxu0 %v1102
    %1353 = vmatpush1.msra.mxu0 %v1101
    %1354 = vmatprep.subr.mxu0 %v1106
    %1355 = vmatpush1.msra.mxu0 %v1105
    %1356 = vmatprep.subr.mxu0 0.0
    %1357 = vmatpush1.msra.mxu0 0.0
    %1358 = vmatprep.subr.mxu0 0.0
    %1359 = vmatpush1.msra.mxu0 0.0
    %1360 = vmatprep.subr.mxu0 0.0
    %1361 = vmatpush1.msra.mxu0 0.0
    %1362 = vmatprep.subr.mxu0 0.0
    %1363 = vmatpush1.msra.mxu0 0.0
    %1364 = vmatprep.subr.mxu0 0.0
    %1365 = vmatpush1.msra.mxu0 0.0
    %1366 = vmatprep.subr.mxu0 0.0
    %1367 = vmatpush1.msra.mxu0 0.0
    %1368 = vmatprep.subr.mxu0 0.0
    %1369 = vmatpush1.msra.mxu0 0.0
    %1370 = vmatprep.subr.mxu0 0.0
    %1371 = vmatpush1.msra.mxu0 0.0
    %1372 = vmatprep.subr.mxu0 0.0
    %1373 = vmatpush1.msra.mxu0 0.0
    %1374 = vmatprep.subr.mxu0 0.0
    %1375 = vmatpush1.msra.mxu0 0.0
    %1376 = vmatprep.subr.mxu0 0.0
    %1377 = vmatpush1.msra.mxu0 0.0
    %1378 = vmatprep.subr.mxu0 0.0
    %1379 = vmatpush1.msra.mxu0 0.0
    %1380 = vmatprep.subr.mxu0 0.0
    %1381 = vmatpush1.msra.mxu0 0.0
    %1382 = vmatprep.subr.mxu0 0.0
    %1383 = vmatpush1.msra.mxu0 0.0
    %1384 = vmatprep.subr.mxu0 0.0
    %1385 = vmatpush1.msra.mxu0 0.0
    %1386 = vmatprep.subr.mxu0 0.0
    %1387 = vmatpush1.msra.mxu0 0.0
    %1388 = vmatprep.subr.mxu0 0.0
    %1389 = vmatpush1.msra.mxu0 0.0
    %1390 = vmatprep.subr.mxu0 0.0
    %1391 = vmatpush1.msra.mxu0 0.0
    %1392 = vmatprep.subr.mxu0 0.0
    %1393 = vmatpush1.msra.mxu0 0.0
    %1394 = vmatprep.subr.mxu0 0.0
    %1395 = vmatpush1.msra.mxu0 0.0
    %1396 = vmatprep.subr.mxu0 0.0
    %1397 = vmatpush1.msra.mxu0 0.0
    %1398 = vmatprep.subr.mxu0 0.0
    %1399 = vmatpush1.msra.mxu0 0.0
    %1400 = vmatprep.subr.mxu0 0.0
    %1401 = vmatpush1.msra.mxu0 0.0
    %1402 = vmatprep.subr.mxu0 0.0
    %1403 = vmatpush1.msra.mxu0 0.0
    %1404 = vmatprep.subr.mxu0 0.0
    %1405 = vmatpush1.msra.mxu0 0.0
    %1406 = vmatprep.subr.mxu0 0.0
    %1407 = vmatpush1.msra.mxu0 0.0
    %1408 = vmatprep.subr.mxu0 0.0
    %1409 = vmatpush1.msra.mxu0 0.0
    %1410 = vmatprep.subr.mxu0 0.0
    %1411 = vmatpush1.msra.mxu0 0.0
    %1412 = vmatprep.mubr.f32.mxu0 0.0
    %1413 = vmatmul.mubr.f32.gmra.mrb[0].mxu0 %v1275
    %v1414 = vpop.f32.mrb[0].mxu0
    %v1415 = vadd.f32 %v1269, %v1414
    %v1416 = vpop.f32.mrb[0].mxu0
    %v1417 = vadd.f32 %v1271, %v1416
    %1418 = vdwg.mxu0
    %s1419 = scalar_lea.vmem [#allocation2], 256
    %v1420 = vld [vmem:[%s1419] sm:$0xff]
    %v1421 = vld [vmem:[%s1419 + $0x8] sm:$0xff]
    %v1422 = vld [vmem:[%s1419 + $0x10] sm:$0xff]
    %v1423 = vld [vmem:[%s1419 + $0x18] sm:$0xff]
    %v1424 = vld [vmem:[%s1419 + $0x20] sm:$0xff]
    %v1425 = vld [vmem:[%s1419 + $0x28] sm:$0xff]
    %v1426 = vld [vmem:[%s1419 + $0x30] sm:$0xff]
    %v1427 = vld [vmem:[%s1419 + $0x38] sm:$0xff]
    %v1428 = vld [vmem:[%s1419 + $0x40] sm:$0xff]
    %v1429 = vld [vmem:[%s1419 + $0x48] sm:$0xff]
    %v1430 = vld [vmem:[%s1419 + $0x50] sm:$0xff]
    %v1431 = vld [vmem:[%s1419 + $0x58] sm:$0xff]
    %v1432 = vld [vmem:[%s1419 + $0x60] sm:$0xff]
    %v1433 = vld [vmem:[%s1419 + $0x68] sm:$0xff]
    %v1434 = vld [vmem:[%s1419 + $0x70] sm:$0xff]
    %v1435 = vld [vmem:[%s1419 + $0x78] sm:$0xff]
    %v1436 = vrot.slane %v1089, 2
    %v1437 = vrot.slane %v1090, 1
    %v1438 = vsel %vm1127, %v1437, %v1436
    %v1439 = vsel %vm179, %v1438, 0
    %1441 = vmatprep.subr.mxu0 %v1421
    %1442 = vmatpush1.msra.mxu0 %v1420
    %1443 = vmatprep.subr.mxu0 %v1425
    %1444 = vmatpush1.msra.mxu0 %v1424
    %1445 = vmatprep.subr.mxu0 %v1429
    %1446 = vmatpush1.msra.mxu0 %v1428
    %1447 = vmatprep.subr.mxu0 %v1433
    %1448 = vmatpush1.msra.mxu0 %v1432
    %1449 = vmatprep.subr.mxu0 0.0
    %1450 = vmatpush1.msra.mxu0 0.0
    %1451 = vmatprep.subr.mxu0 0.0
    %1452 = vmatpush1.msra.mxu0 0.0
    %1453 = vmatprep.subr.mxu0 0.0
    %1454 = vmatpush1.msra.mxu0 0.0
    %1455 = vmatprep.subr.mxu0 0.0
    %1456 = vmatpush1.msra.mxu0 0.0
    %1457 = vmatprep.subr.mxu0 0.0
    %1458 = vmatpush1.msra.mxu0 0.0
    %1459 = vmatprep.subr.mxu0 0.0
    %1460 = vmatpush1.msra.mxu0 0.0
    %1461 = vmatprep.subr.mxu0 0.0
    %1462 = vmatpush1.msra.mxu0 0.0
    %1463 = vmatprep.subr.mxu0 0.0
    %1464 = vmatpush1.msra.mxu0 0.0
    %1465 = vmatprep.subr.mxu0 0.0
    %1466 = vmatpush1.msra.mxu0 0.0
    %1467 = vmatprep.subr.mxu0 0.0
    %1468 = vmatpush1.msra.mxu0 0.0
    %1469 = vmatprep.subr.mxu0 0.0
    %1470 = vmatpush1.msra.mxu0 0.0
    %1471 = vmatprep.subr.mxu0 0.0
    %1472 = vmatpush1.msra.mxu0 0.0
    %1473 = vmatprep.subr.mxu0 0.0
    %1474 = vmatpush1.msra.mxu0 0.0
    %1475 = vmatprep.subr.mxu0 0.0
    %1476 = vmatpush1.msra.mxu0 0.0
    %1477 = vmatprep.subr.mxu0 0.0
    %1478 = vmatpush1.msra.mxu0 0.0
    %1479 = vmatprep.subr.mxu0 0.0
    %1480 = vmatpush1.msra.mxu0 0.0
    %1481 = vmatprep.subr.mxu0 0.0
    %1482 = vmatpush1.msra.mxu0 0.0
    %1483 = vmatprep.subr.mxu0 0.0
    %1484 = vmatpush1.msra.mxu0 0.0
    %1485 = vmatprep.subr.mxu0 0.0
    %1486 = vmatpush1.msra.mxu0 0.0
    %1487 = vmatprep.subr.mxu0 0.0
    %1488 = vmatpush1.msra.mxu0 0.0
    %1489 = vmatprep.subr.mxu0 0.0
    %1490 = vmatpush1.msra.mxu0 0.0
    %1491 = vmatprep.subr.mxu0 0.0
    %1492 = vmatpush1.msra.mxu0 0.0
    %1493 = vmatprep.subr.mxu0 0.0
    %1494 = vmatpush1.msra.mxu0 0.0
    %1495 = vmatprep.subr.mxu0 0.0
    %1496 = vmatpush1.msra.mxu0 0.0
    %1497 = vmatprep.subr.mxu0 0.0
    %1498 = vmatpush1.msra.mxu0 0.0
    %1499 = vmatprep.subr.mxu0 0.0
    %1500 = vmatpush1.msra.mxu0 0.0
    %1501 = vmatprep.subr.mxu0 0.0
    %1502 = vmatpush1.msra.mxu0 0.0
    %1503 = vmatprep.subr.mxu0 0.0
    %1504 = vmatpush1.msra.mxu0 0.0
    %1505 = vmatprep.mubr.f32.mxu0 0.0
    %1506 = vmatmul.mubr.f32.gmra.mrb[0].mxu0 %v1439
    %v1507 = vpop.f32.mrb[0].mxu0
    %v1508 = vadd.f32 0.0, %v1507
    %v1509 = vpop.f32.mrb[0].mxu0
    %v1510 = vadd.f32 0.0, %v1509
    %1511 = vdwg.mxu0
    %1512 = vmatprep.subr.mxu0 %v1423
    %1513 = vmatpush1.msra.mxu0 %v1422
    %1514 = vmatprep.subr.mxu0 %v1427
    %1515 = vmatpush1.msra.mxu0 %v1426
    %1516 = vmatprep.subr.mxu0 %v1431
    %1517 = vmatpush1.msra.mxu0 %v1430
    %1518 = vmatprep.subr.mxu0 %v1435
    %1519 = vmatpush1.msra.mxu0 %v1434
    %1520 = vmatprep.subr.mxu0 0.0
    %1521 = vmatpush1.msra.mxu0 0.0
    %1522 = vmatprep.subr.mxu0 0.0
    %1523 = vmatpush1.msra.mxu0 0.0
    %1524 = vmatprep.subr.mxu0 0.0
    %1525 = vmatpush1.msra.mxu0 0.0
    %1526 = vmatprep.subr.mxu0 0.0
    %1527 = vmatpush1.msra.mxu0 0.0
    %1528 = vmatprep.subr.mxu0 0.0
    %1529 = vmatpush1.msra.mxu0 0.0
    %1530 = vmatprep.subr.mxu0 0.0
    %1531 = vmatpush1.msra.mxu0 0.0
    %1532 = vmatprep.subr.mxu0 0.0
    %1533 = vmatpush1.msra.mxu0 0.0
    %1534 = vmatprep.subr.mxu0 0.0
    %1535 = vmatpush1.msra.mxu0 0.0
    %1536 = vmatprep.subr.mxu0 0.0
    %1537 = vmatpush1.msra.mxu0 0.0
    %1538 = vmatprep.subr.mxu0 0.0
    %1539 = vmatpush1.msra.mxu0 0.0
    %1540 = vmatprep.subr.mxu0 0.0
    %1541 = vmatpush1.msra.mxu0 0.0
    %1542 = vmatprep.subr.mxu0 0.0
    %1543 = vmatpush1.msra.mxu0 0.0
    %1544 = vmatprep.subr.mxu0 0.0
    %1545 = vmatpush1.msra.mxu0 0.0
    %1546 = vmatprep.subr.mxu0 0.0
    %1547 = vmatpush1.msra.mxu0 0.0
    %1548 = vmatprep.subr.mxu0 0.0
    %1549 = vmatpush1.msra.mxu0 0.0
    %1550 = vmatprep.subr.mxu0 0.0
    %1551 = vmatpush1.msra.mxu0 0.0
    %1552 = vmatprep.subr.mxu0 0.0
    %1553 = vmatpush1.msra.mxu0 0.0
    %1554 = vmatprep.subr.mxu0 0.0
    %1555 = vmatpush1.msra.mxu0 0.0
    %1556 = vmatprep.subr.mxu0 0.0
    %1557 = vmatpush1.msra.mxu0 0.0
    %1558 = vmatprep.subr.mxu0 0.0
    %1559 = vmatpush1.msra.mxu0 0.0
    %1560 = vmatprep.subr.mxu0 0.0
    %1561 = vmatpush1.msra.mxu0 0.0
    %1562 = vmatprep.subr.mxu0 0.0
    %1563 = vmatpush1.msra.mxu0 0.0
    %1564 = vmatprep.subr.mxu0 0.0
    %1565 = vmatpush1.msra.mxu0 0.0
    %1566 = vmatprep.subr.mxu0 0.0
    %1567 = vmatpush1.msra.mxu0 0.0
    %1568 = vmatprep.subr.mxu0 0.0
    %1569 = vmatpush1.msra.mxu0 0.0
    %1570 = vmatprep.subr.mxu0 0.0
    %1571 = vmatpush1.msra.mxu0 0.0
    %1572 = vmatprep.subr.mxu0 0.0
    %1573 = vmatpush1.msra.mxu0 0.0
    %1574 = vmatprep.subr.mxu0 0.0
    %1575 = vmatpush1.msra.mxu0 0.0
    %1576 = vmatprep.mubr.f32.mxu0 0.0
    %1577 = vmatmul.mubr.f32.gmra.mrb[0].mxu0 %v1439
    %v1578 = vpop.f32.mrb[0].mxu0
    %v1579 = vadd.f32 0.0, %v1578
    %v1580 = vpop.f32.mrb[0].mxu0
    %v1581 = vadd.f32 0.0, %v1580
    %1582 = vdwg.mxu0
    %v1583 = vadd.f32 %v1344, %v1508
    %v1584 = vadd.f32 %v1346, %v1510
    %v1585 = vadd.f32 %v1415, %v1579
    %v1586 = vadd.f32 %v1417, %v1581
    %s1587 = scalar_lea.vmem [#allocation2], 384
    %v1588 = vld [vmem:[%s1587] sm:$0xff]
    %v1589 = vld [vmem:[%s1587 + $0x8] sm:$0xff]
    %v1590 = vld [vmem:[%s1587 + $0x10] sm:$0xff]
    %v1591 = vld [vmem:[%s1587 + $0x18] sm:$0xff]
    %v1592 = vld [vmem:[%s1587 + $0x20] sm:$0xff]
    %v1593 = vld [vmem:[%s1587 + $0x28] sm:$0xff]
    %v1594 = vld [vmem:[%s1587 + $0x30] sm:$0xff]
    %v1595 = vld [vmem:[%s1587 + $0x38] sm:$0xff]
    %v1596 = vld [vmem:[%s1587 + $0x40] sm:$0xff]
    %v1597 = vld [vmem:[%s1587 + $0x48] sm:$0xff]
    %v1598 = vld [vmem:[%s1587 + $0x50] sm:$0xff]
    %v1599 = vld [vmem:[%s1587 + $0x58] sm:$0xff]
    %v1600 = vld [vmem:[%s1587 + $0x60] sm:$0xff]
    %v1601 = vld [vmem:[%s1587 + $0x68] sm:$0xff]
    %v1602 = vld [vmem:[%s1587 + $0x70] sm:$0xff]
    %v1603 = vld [vmem:[%s1587 + $0x78] sm:$0xff]
    %v1604 = vrot.slane %v1089, 3
    %v1605 = vrot.slane %v1090, 2
    %v1606 = vsel %vm1127, %v1605, %v1604
    %v1607 = vsel %vm179, %v1606, 0
    %1609 = vmatprep.subr.mxu0 %v1589
    %1610 = vmatpush1.msra.mxu0 %v1588
    %1611 = vmatprep.subr.mxu0 %v1593
    %1612 = vmatpush1.msra.mxu0 %v1592
    %1613 = vmatprep.subr.mxu0 %v1597
    %1614 = vmatpush1.msra.mxu0 %v1596
    %1615 = vmatprep.subr.mxu0 %v1601
    %1616 = vmatpush1.msra.mxu0 %v1600
    %1617 = vmatprep.subr.mxu0 0.0
    %1618 = vmatpush1.msra.mxu0 0.0
    %1619 = vmatprep.subr.mxu0 0.0
    %1620 = vmatpush1.msra.mxu0 0.0
    %1621 = vmatprep.subr.mxu0 0.0
    %1622 = vmatpush1.msra.mxu0 0.0
    %1623 = vmatprep.subr.mxu0 0.0
    %1624 = vmatpush1.msra.mxu0 0.0
    %1625 = vmatprep.subr.mxu0 0.0
    %1626 = vmatpush1.msra.mxu0 0.0
    %1627 = vmatprep.subr.mxu0 0.0
    %1628 = vmatpush1.msra.mxu0 0.0
    %1629 = vmatprep.subr.mxu0 0.0
    %1630 = vmatpush1.msra.mxu0 0.0
    %1631 = vmatprep.subr.mxu0 0.0
    %1632 = vmatpush1.msra.mxu0 0.0
    %1633 = vmatprep.subr.mxu0 0.0
    %1634 = vmatpush1.msra.mxu0 0.0
    %1635 = vmatprep.subr.mxu0 0.0
    %1636 = vmatpush1.msra.mxu0 0.0
    %1637 = vmatprep.subr.mxu0 0.0
    %1638 = vmatpush1.msra.mxu0 0.0
    %1639 = vmatprep.subr.mxu0 0.0
    %1640 = vmatpush1.msra.mxu0 0.0
    %1641 = vmatprep.subr.mxu0 0.0
    %1642 = vmatpush1.msra.mxu0 0.0
    %1643 = vmatprep.subr.mxu0 0.0
    %1644 = vmatpush1.msra.mxu0 0.0
    %1645 = vmatprep.subr.mxu0 0.0
    %1646 = vmatpush1.msra.mxu0 0.0
    %1647 = vmatprep.subr.mxu0 0.0
    %1648 = vmatpush1.msra.mxu0 0.0
    %1649 = vmatprep.subr.mxu0 0.0
    %1650 = vmatpush1.msra.mxu0 0.0
    %1651 = vmatprep.subr.mxu0 0.0
    %1652 = vmatpush1.msra.mxu0 0.0
    %1653 = vmatprep.subr.mxu0 0.0
    %1654 = vmatpush1.msra.mxu0 0.0
    %1655 = vmatprep.subr.mxu0 0.0
    %1656 = vmatpush1.msra.mxu0 0.0
    %1657 = vmatprep.subr.mxu0 0.0
    %1658 = vmatpush1.msra.mxu0 0.0
    %1659 = vmatprep.subr.mxu0 0.0
    %1660 = vmatpush1.msra.mxu0 0.0
    %1661 = vmatprep.subr.mxu0 0.0
    %1662 = vmatpush1.msra.mxu0 0.0
    %1663 = vmatprep.subr.mxu0 0.0
    %1664 = vmatpush1.msra.mxu0 0.0
    %1665 = vmatprep.subr.mxu0 0.0
    %1666 = vmatpush1.msra.mxu0 0.0
    %1667 = vmatprep.subr.mxu0 0.0
    %1668 = vmatpush1.msra.mxu0 0.0
    %1669 = vmatprep.subr.mxu0 0.0
    %1670 = vmatpush1.msra.mxu0 0.0
    %1671 = vmatprep.subr.mxu0 0.0
    %1672 = vmatpush1.msra.mxu0 0.0
    %1673 = vmatprep.mubr.f32.mxu0 0.0
    %1674 = vmatmul.mubr.f32.gmra.mrb[0].mxu0 %v1607
    %v1675 = vpop.f32.mrb[0].mxu0
    %v1676 = vadd.f32 0.0, %v1675
    %v1677 = vpop.f32.mrb[0].mxu0
    %v1678 = vadd.f32 0.0, %v1677
    %1679 = vdwg.mxu0
    %1680 = vmatprep.subr.mxu0 %v1591
    %1681 = vmatpush1.msra.mxu0 %v1590
    %1682 = vmatprep.subr.mxu0 %v1595
    %1683 = vmatpush1.msra.mxu0 %v1594
    %1684 = vmatprep.subr.mxu0 %v1599
    %1685 = vmatpush1.msra.mxu0 %v1598
    %1686 = vmatprep.subr.mxu0 %v1603
    %1687 = vmatpush1.msra.mxu0 %v1602
    %1688 = vmatprep.subr.mxu0 0.0
    %1689 = vmatpush1.msra.mxu0 0.0
    %1690 = vmatprep.subr.mxu0 0.0
    %1691 = vmatpush1.msra.mxu0 0.0
    %1692 = vmatprep.subr.mxu0 0.0
    %1693 = vmatpush1.msra.mxu0 0.0
    %1694 = vmatprep.subr.mxu0 0.0
    %1695 = vmatpush1.msra.mxu0 0.0
    %1696 = vmatprep.subr.mxu0 0.0
    %1697 = vmatpush1.msra.mxu0 0.0
    %1698 = vmatprep.subr.mxu0 0.0
    %1699 = vmatpush1.msra.mxu0 0.0
    %1700 = vmatprep.subr.mxu0 0.0
    %1701 = vmatpush1.msra.mxu0 0.0
    %1702 = vmatprep.subr.mxu0 0.0
    %1703 = vmatpush1.msra.mxu0 0.0
    %1704 = vmatprep.subr.mxu0 0.0
    %1705 = vmatpush1.msra.mxu0 0.0
    %1706 = vmatprep.subr.mxu0 0.0
    %1707 = vmatpush1.msra.mxu0 0.0
    %1708 = vmatprep.subr.mxu0 0.0
    %1709 = vmatpush1.msra.mxu0 0.0
    %1710 = vmatprep.subr.mxu0 0.0
    %1711 = vmatpush1.msra.mxu0 0.0
    %1712 = vmatprep.subr.mxu0 0.0
    %1713 = vmatpush1.msra.mxu0 0.0
    %1714 = vmatprep.subr.mxu0 0.0
    %1715 = vmatpush1.msra.mxu0 0.0
    %1716 = vmatprep.subr.mxu0 0.0
    %1717 = vmatpush1.msra.mxu0 0.0
    %1718 = vmatprep.subr.mxu0 0.0
    %1719 = vmatpush1.msra.mxu0 0.0
    %1720 = vmatprep.subr.mxu0 0.0
    %1721 = vmatpush1.msra.mxu0 0.0
    %1722 = vmatprep.subr.mxu0 0.0
    %1723 = vmatpush1.msra.mxu0 0.0
    %1724 = vmatprep.subr.mxu0 0.0
    %1725 = vmatpush1.msra.mxu0 0.0
    %1726 = vmatprep.subr.mxu0 0.0
    %1727 = vmatpush1.msra.mxu0 0.0
    %1728 = vmatprep.subr.mxu0 0.0
    %1729 = vmatpush1.msra.mxu0 0.0
    %1730 = vmatprep.subr.mxu0 0.0
    %1731 = vmatpush1.msra.mxu0 0.0
    %1732 = vmatprep.subr.mxu0 0.0
    %1733 = vmatpush1.msra.mxu0 0.0
    %1734 = vmatprep.subr.mxu0 0.0
    %1735 = vmatpush1.msra.mxu0 0.0
    %1736 = vmatprep.subr.mxu0 0.0
    %1737 = vmatpush1.msra.mxu0 0.0
    %1738 = vmatprep.subr.mxu0 0.0
    %1739 = vmatpush1.msra.mxu0 0.0
    %1740 = vmatprep.subr.mxu0 0.0
    %1741 = vmatpush1.msra.mxu0 0.0
    %1742 = vmatprep.subr.mxu0 0.0
    %1743 = vmatpush1.msra.mxu0 0.0
    %1744 = vmatprep.mubr.f32.mxu0 0.0
    %1745 = vmatmul.mubr.f32.gmra.mrb[0].mxu0 %v1607
    %v1746 = vpop.f32.mrb[0].mxu0
    %v1747 = vadd.f32 0.0, %v1746
    %v1748 = vpop.f32.mrb[0].mxu0
    %v1749 = vadd.f32 0.0, %v1748
    %1750 = vdwg.mxu0
    %v1751 = vadd.f32 %v1583, %v1676
    %v1752 = vadd.f32 %v1584, %v1678
    %v1753 = vadd.f32 %v1585, %v1747
    %v1754 = vadd.f32 %v1586, %v1749
    %s1755 = scalar_lea.vmem [#allocation2], 512
    %v1756 = vld [vmem:[%s1755] sm:$0xff]
    %v1757 = vld [vmem:[%s1755 + $0x8] sm:$0xff]
    %v1758 = vld [vmem:[%s1755 + $0x10] sm:$0xff]
    %v1759 = vld [vmem:[%s1755 + $0x18] sm:$0xff]
    %v1760 = vld [vmem:[%s1755 + $0x20] sm:$0xff]
    %v1761 = vld [vmem:[%s1755 + $0x28] sm:$0xff]
    %v1762 = vld [vmem:[%s1755 + $0x30] sm:$0xff]
    %v1763 = vld [vmem:[%s1755 + $0x38] sm:$0xff]
    %v1764 = vld [vmem:[%s1755 + $0x40] sm:$0xff]
    %v1765 = vld [vmem:[%s1755 + $0x48] sm:$0xff]
    %v1766 = vld [vmem:[%s1755 + $0x50] sm:$0xff]
    %v1767 = vld [vmem:[%s1755 + $0x58] sm:$0xff]
    %v1768 = vld [vmem:[%s1755 + $0x60] sm:$0xff]
    %v1769 = vld [vmem:[%s1755 + $0x68] sm:$0xff]
    %v1770 = vld [vmem:[%s1755 + $0x70] sm:$0xff]
    %v1771 = vld [vmem:[%s1755 + $0x78] sm:$0xff]
    %v1772 = vrot.slane %v1089, 4
    %v1773 = vrot.slane %v1090, 3
    %v1774 = vsel %vm1127, %v1773, %v1772
    %v1775 = vsel %vm179, %v1774, 0
    %1777 = vmatprep.subr.mxu0 %v1757
    %1778 = vmatpush1.msra.mxu0 %v1756
    %1779 = vmatprep.subr.mxu0 %v1761
    %1780 = vmatpush1.msra.mxu0 %v1760
    %1781 = vmatprep.subr.mxu0 %v1765
    %1782 = vmatpush1.msra.mxu0 %v1764
    %1783 = vmatprep.subr.mxu0 %v1769
    %1784 = vmatpush1.msra.mxu0 %v1768
    %1785 = vmatprep.subr.mxu0 0.0
    %1786 = vmatpush1.msra.mxu0 0.0
    %1787 = vmatprep.subr.mxu0 0.0
    %1788 = vmatpush1.msra.mxu0 0.0
    %1789 = vmatprep.subr.mxu0 0.0
    %1790 = vmatpush1.msra.mxu0 0.0
    %1791 = vmatprep.subr.mxu0 0.0
    %1792 = vmatpush1.msra.mxu0 0.0
    %1793 = vmatprep.subr.mxu0 0.0
    %1794 = vmatpush1.msra.mxu0 0.0
    %1795 = vmatprep.subr.mxu0 0.0
    %1796 = vmatpush1.msra.mxu0 0.0
    %1797 = vmatprep.subr.mxu0 0.0
    %1798 = vmatpush1.msra.mxu0 0.0
    %1799 = vmatprep.subr.mxu0 0.0
    %1800 = vmatpush1.msra.mxu0 0.0
    %1801 = vmatprep.subr.mxu0 0.0
    %1802 = vmatpush1.msra.mxu0 0.0
    %1803 = vmatprep.subr.mxu0 0.0
    %1804 = vmatpush1.msra.mxu0 0.0
    %1805 = vmatprep.subr.mxu0 0.0
    %1806 = vmatpush1.msra.mxu0 0.0
    %1807 = vmatprep.subr.mxu0 0.0
    %1808 = vmatpush1.msra.mxu0 0.0
    %1809 = vmatprep.subr.mxu0 0.0
    %1810 = vmatpush1.msra.mxu0 0.0
    %1811 = vmatprep.subr.mxu0 0.0
    %1812 = vmatpush1.msra.mxu0 0.0
    %1813 = vmatprep.subr.mxu0 0.0
    %1814 = vmatpush1.msra.mxu0 0.0
    %1815 = vmatprep.subr.mxu0 0.0
    %1816 = vmatpush1.msra.mxu0 0.0
    %1817 = vmatprep.subr.mxu0 0.0
    %1818 = vmatpush1.msra.mxu0 0.0
    %1819 = vmatprep.subr.mxu0 0.0
    %1820 = vmatpush1.msra.mxu0 0.0
    %1821 = vmatprep.subr.mxu0 0.0
    %1822 = vmatpush1.msra.mxu0 0.0
    %1823 = vmatprep.subr.mxu0 0.0
    %1824 = vmatpush1.msra.mxu0 0.0
    %1825 = vmatprep.subr.mxu0 0.0
    %1826 = vmatpush1.msra.mxu0 0.0
    %1827 = vmatprep.subr.mxu0 0.0
    %1828 = vmatpush1.msra.mxu0 0.0
    %1829 = vmatprep.subr.mxu0 0.0
    %1830 = vmatpush1.msra.mxu0 0.0
    %1831 = vmatprep.subr.mxu0 0.0
    %1832 = vmatpush1.msra.mxu0 0.0
    %1833 = vmatprep.subr.mxu0 0.0
    %1834 = vmatpush1.msra.mxu0 0.0
    %1835 = vmatprep.subr.mxu0 0.0
    %1836 = vmatpush1.msra.mxu0 0.0
    %1837 = vmatprep.subr.mxu0 0.0
    %1838 = vmatpush1.msra.mxu0 0.0
    %1839 = vmatprep.subr.mxu0 0.0
    %1840 = vmatpush1.msra.mxu0 0.0
    %1841 = vmatprep.mubr.f32.mxu0 0.0
    %1842 = vmatmul.mubr.f32.gmra.mrb[0].mxu0 %v1775
    %v1843 = vpop.f32.mrb[0].mxu0
    %v1844 = vadd.f32 0.0, %v1843
    %v1845 = vpop.f32.mrb[0].mxu0
    %v1846 = vadd.f32 0.0, %v1845
    %1847 = vdwg.mxu0
    %1848 = vmatprep.subr.mxu0 %v1759
    %1849 = vmatpush1.msra.mxu0 %v1758
    %1850 = vmatprep.subr.mxu0 %v1763
    %1851 = vmatpush1.msra.mxu0 %v1762
    %1852 = vmatprep.subr.mxu0 %v1767
    %1853 = vmatpush1.msra.mxu0 %v1766
    %1854 = vmatprep.subr.mxu0 %v1771
    %1855 = vmatpush1.msra.mxu0 %v1770
    %1856 = vmatprep.subr.mxu0 0.0
    %1857 = vmatpush1.msra.mxu0 0.0
    %1858 = vmatprep.subr.mxu0 0.0
    %1859 = vmatpush1.msra.mxu0 0.0
    %1860 = vmatprep.subr.mxu0 0.0
    %1861 = vmatpush1.msra.mxu0 0.0
    %1862 = vmatprep.subr.mxu0 0.0
    %1863 = vmatpush1.msra.mxu0 0.0
    %1864 = vmatprep.subr.mxu0 0.0
    %1865 = vmatpush1.msra.mxu0 0.0
    %1866 = vmatprep.subr.mxu0 0.0
    %1867 = vmatpush1.msra.mxu0 0.0
    %1868 = vmatprep.subr.mxu0 0.0
    %1869 = vmatpush1.msra.mxu0 0.0
    %1870 = vmatprep.subr.mxu0 0.0
    %1871 = vmatpush1.msra.mxu0 0.0
    %1872 = vmatprep.subr.mxu0 0.0
    %1873 = vmatpush1.msra.mxu0 0.0
    %1874 = vmatprep.subr.mxu0 0.0
    %1875 = vmatpush1.msra.mxu0 0.0
    %1876 = vmatprep.subr.mxu0 0.0
    %1877 = vmatpush1.msra.mxu0 0.0
    %1878 = vmatprep.subr.mxu0 0.0
    %1879 = vmatpush1.msra.mxu0 0.0
    %1880 = vmatprep.subr.mxu0 0.0
    %1881 = vmatpush1.msra.mxu0 0.0
    %1882 = vmatprep.subr.mxu0 0.0
    %1883 = vmatpush1.msra.mxu0 0.0
    %1884 = vmatprep.subr.mxu0 0.0
    %1885 = vmatpush1.msra.mxu0 0.0
    %1886 = vmatprep.subr.mxu0 0.0
    %1887 = vmatpush1.msra.mxu0 0.0
    %1888 = vmatprep.subr.mxu0 0.0
    %1889 = vmatpush1.msra.mxu0 0.0
    %1890 = vmatprep.subr.mxu0 0.0
    %1891 = vmatpush1.msra.mxu0 0.0
    %1892 = vmatprep.subr.mxu0 0.0
    %1893 = vmatpush1.msra.mxu0 0.0
    %1894 = vmatprep.subr.mxu0 0.0
    %1895 = vmatpush1.msra.mxu0 0.0
    %1896 = vmatprep.subr.mxu0 0.0
    %1897 = vmatpush1.msra.mxu0 0.0
    %1898 = vmatprep.subr.mxu0 0.0
    %1899 = vmatpush1.msra.mxu0 0.0
    %1900 = vmatprep.subr.mxu0 0.0
    %1901 = vmatpush1.msra.mxu0 0.0
    %1902 = vmatprep.subr.mxu0 0.0
    %1903 = vmatpush1.msra.mxu0 0.0
    %1904 = vmatprep.subr.mxu0 0.0
    %1905 = vmatpush1.msra.mxu0 0.0
    %1906 = vmatprep.subr.mxu0 0.0
    %1907 = vmatpush1.msra.mxu0 0.0
    %1908 = vmatprep.subr.mxu0 0.0
    %1909 = vmatpush1.msra.mxu0 0.0
    %1910 = vmatprep.subr.mxu0 0.0
    %1911 = vmatpush1.msra.mxu0 0.0
    %1912 = vmatprep.mubr.f32.mxu0 0.0
    %1913 = vmatmul.mubr.f32.gmra.mrb[0].mxu0 %v1775
    %v1914 = vpop.f32.mrb[0].mxu0
    %v1915 = vadd.f32 0.0, %v1914
    %v1916 = vpop.f32.mrb[0].mxu0
    %v1917 = vadd.f32 0.0, %v1916
    %1918 = vdwg.mxu0
    %v1919 = vadd.f32 %v1751, %v1844
    %v1920 = vadd.f32 %v1752, %v1846
    %v1921 = vadd.f32 %v1753, %v1915
    %v1922 = vadd.f32 %v1754, %v1917
    %s1923 = scalar_lea.vmem [#allocation2], 640
    %v1924 = vld [vmem:[%s1923] sm:$0xff]
    %v1925 = vld [vmem:[%s1923 + $0x8] sm:$0xff]
    %v1926 = vld [vmem:[%s1923 + $0x10] sm:$0xff]
    %v1927 = vld [vmem:[%s1923 + $0x18] sm:$0xff]
    %v1928 = vld [vmem:[%s1923 + $0x20] sm:$0xff]
    %v1929 = vld [vmem:[%s1923 + $0x28] sm:$0xff]
    %v1930 = vld [vmem:[%s1923 + $0x30] sm:$0xff]
    %v1931 = vld [vmem:[%s1923 + $0x38] sm:$0xff]
    %v1932 = vld [vmem:[%s1923 + $0x40] sm:$0xff]
    %v1933 = vld [vmem:[%s1923 + $0x48] sm:$0xff]
    %v1934 = vld [vmem:[%s1923 + $0x50] sm:$0xff]
    %v1935 = vld [vmem:[%s1923 + $0x58] sm:$0xff]
    %v1936 = vld [vmem:[%s1923 + $0x60] sm:$0xff]
    %v1937 = vld [vmem:[%s1923 + $0x68] sm:$0xff]
    %v1938 = vld [vmem:[%s1923 + $0x70] sm:$0xff]
    %v1939 = vld [vmem:[%s1923 + $0x78] sm:$0xff]
    %v1940 = vrot.slane %v1089, 5
    %v1941 = vrot.slane %v1090, 4
    %v1942 = vsel %vm1127, %v1941, %v1940
    %v1943 = vsel %vm179, %v1942, 0
    %1945 = vmatprep.subr.mxu0 %v1925
    %1946 = vmatpush1.msra.mxu0 %v1924
    %1947 = vmatprep.subr.mxu0 %v1929
    %1948 = vmatpush1.msra.mxu0 %v1928
    %1949 = vmatprep.subr.mxu0 %v1933
    %1950 = vmatpush1.msra.mxu0 %v1932
    %1951 = vmatprep.subr.mxu0 %v1937
    %1952 = vmatpush1.msra.mxu0 %v1936
    %1953 = vmatprep.subr.mxu0 0.0
    %1954 = vmatpush1.msra.mxu0 0.0
    %1955 = vmatprep.subr.mxu0 0.0
    %1956 = vmatpush1.msra.mxu0 0.0
    %1957 = vmatprep.subr.mxu0 0.0
    %1958 = vmatpush1.msra.mxu0 0.0
    %1959 = vmatprep.subr.mxu0 0.0
    %1960 = vmatpush1.msra.mxu0 0.0
    %1961 = vmatprep.subr.mxu0 0.0
    %1962 = vmatpush1.msra.mxu0 0.0
    %1963 = vmatprep.subr.mxu0 0.0
    %1964 = vmatpush1.msra.mxu0 0.0
    %1965 = vmatprep.subr.mxu0 0.0
    %1966 = vmatpush1.msra.mxu0 0.0
    %1967 = vmatprep.subr.mxu0 0.0
    %1968 = vmatpush1.msra.mxu0 0.0
    %1969 = vmatprep.subr.mxu0 0.0
    %1970 = vmatpush1.msra.mxu0 0.0
    %1971 = vmatprep.subr.mxu0 0.0
    %1972 = vmatpush1.msra.mxu0 0.0
    %1973 = vmatprep.subr.mxu0 0.0
    %1974 = vmatpush1.msra.mxu0 0.0
    %1975 = vmatprep.subr.mxu0 0.0
    %1976 = vmatpush1.msra.mxu0 0.0
    %1977 = vmatprep.subr.mxu0 0.0
    %1978 = vmatpush1.msra.mxu0 0.0
    %1979 = vmatprep.subr.mxu0 0.0
    %1980 = vmatpush1.msra.mxu0 0.0
    %1981 = vmatprep.subr.mxu0 0.0
    %1982 = vmatpush1.msra.mxu0 0.0
    %1983 = vmatprep.subr.mxu0 0.0
    %1984 = vmatpush1.msra.mxu0 0.0
    %1985 = vmatprep.subr.mxu0 0.0
    %1986 = vmatpush1.msra.mxu0 0.0
    %1987 = vmatprep.subr.mxu0 0.0
    %1988 = vmatpush1.msra.mxu0 0.0
    %1989 = vmatprep.subr.mxu0 0.0
    %1990 = vmatpush1.msra.mxu0 0.0
    %1991 = vmatprep.subr.mxu0 0.0
    %1992 = vmatpush1.msra.mxu0 0.0
    %1993 = vmatprep.subr.mxu0 0.0
    %1994 = vmatpush1.msra.mxu0 0.0
    %1995 = vmatprep.subr.mxu0 0.0
    %1996 = vmatpush1.msra.mxu0 0.0
    %1997 = vmatprep.subr.mxu0 0.0
    %1998 = vmatpush1.msra.mxu0 0.0
    %1999 = vmatprep.subr.mxu0 0.0
    %2000 = vmatpush1.msra.mxu0 0.0
    %2001 = vmatprep.subr.mxu0 0.0
    %2002 = vmatpush1.msra.mxu0 0.0
    %2003 = vmatprep.subr.mxu0 0.0
    %2004 = vmatpush1.msra.mxu0 0.0
    %2005 = vmatprep.subr.mxu0 0.0
    %2006 = vmatpush1.msra.mxu0 0.0
    %2007 = vmatprep.subr.mxu0 0.0
    %2008 = vmatpush1.msra.mxu0 0.0
    %2009 = vmatprep.mubr.f32.mxu0 0.0
    %2010 = vmatmul.mubr.f32.gmra.mrb[0].mxu0 %v1943
    %v2011 = vpop.f32.mrb[0].mxu0
    %v2012 = vadd.f32 0.0, %v2011
    %v2013 = vpop.f32.mrb[0].mxu0
    %v2014 = vadd.f32 0.0, %v2013
    %2015 = vdwg.mxu0
    %2016 = vmatprep.subr.mxu0 %v1927
    %2017 = vmatpush1.msra.mxu0 %v1926
    %2018 = vmatprep.subr.mxu0 %v1931
    %2019 = vmatpush1.msra.mxu0 %v1930
    %2020 = vmatprep.subr.mxu0 %v1935
    %2021 = vmatpush1.msra.mxu0 %v1934
    %2022 = vmatprep.subr.mxu0 %v1939
    %2023 = vmatpush1.msra.mxu0 %v1938
    %2024 = vmatprep.subr.mxu0 0.0
    %2025 = vmatpush1.msra.mxu0 0.0
    %2026 = vmatprep.subr.mxu0 0.0
    %2027 = vmatpush1.msra.mxu0 0.0
    %2028 = vmatprep.subr.mxu0 0.0
    %2029 = vmatpush1.msra.mxu0 0.0
    %2030 = vmatprep.subr.mxu0 0.0
    %2031 = vmatpush1.msra.mxu0 0.0
    %2032 = vmatprep.subr.mxu0 0.0
    %2033 = vmatpush1.msra.mxu0 0.0
    %2034 = vmatprep.subr.mxu0 0.0
    %2035 = vmatpush1.msra.mxu0 0.0
    %2036 = vmatprep.subr.mxu0 0.0
    %2037 = vmatpush1.msra.mxu0 0.0
    %2038 = vmatprep.subr.mxu0 0.0
    %2039 = vmatpush1.msra.mxu0 0.0
    %2040 = vmatprep.subr.mxu0 0.0
    %2041 = vmatpush1.msra.mxu0 0.0
    %2042 = vmatprep.subr.mxu0 0.0
    %2043 = vmatpush1.msra.mxu0 0.0
    %2044 = vmatprep.subr.mxu0 0.0
    %2045 = vmatpush1.msra.mxu0 0.0
    %2046 = vmatprep.subr.mxu0 0.0
    %2047 = vmatpush1.msra.mxu0 0.0
    %2048 = vmatprep.subr.mxu0 0.0
    %2049 = vmatpush1.msra.mxu0 0.0
    %2050 = vmatprep.subr.mxu0 0.0
    %2051 = vmatpush1.msra.mxu0 0.0
    %2052 = vmatprep.subr.mxu0 0.0
    %2053 = vmatpush1.msra.mxu0 0.0
    %2054 = vmatprep.subr.mxu0 0.0
    %2055 = vmatpush1.msra.mxu0 0.0
    %2056 = vmatprep.subr.mxu0 0.0
    %2057 = vmatpush1.msra.mxu0 0.0
    %2058 = vmatprep.subr.mxu0 0.0
    %2059 = vmatpush1.msra.mxu0 0.0
    %2060 = vmatprep.subr.mxu0 0.0
    %2061 = vmatpush1.msra.mxu0 0.0
    %2062 = vmatprep.subr.mxu0 0.0
    %2063 = vmatpush1.msra.mxu0 0.0
    %2064 = vmatprep.subr.mxu0 0.0
    %2065 = vmatpush1.msra.mxu0 0.0
    %2066 = vmatprep.subr.mxu0 0.0
    %2067 = vmatpush1.msra.mxu0 0.0
    %2068 = vmatprep.subr.mxu0 0.0
    %2069 = vmatpush1.msra.mxu0 0.0
    %2070 = vmatprep.subr.mxu0 0.0
    %2071 = vmatpush1.msra.mxu0 0.0
    %2072 = vmatprep.subr.mxu0 0.0
    %2073 = vmatpush1.msra.mxu0 0.0
    %2074 = vmatprep.subr.mxu0 0.0
    %2075 = vmatpush1.msra.mxu0 0.0
    %2076 = vmatprep.subr.mxu0 0.0
    %2077 = vmatpush1.msra.mxu0 0.0
    %2078 = vmatprep.subr.mxu0 0.0
    %2079 = vmatpush1.msra.mxu0 0.0
    %2080 = vmatprep.mubr.f32.mxu0 0.0
    %2081 = vmatmul.mubr.f32.gmra.mrb[0].mxu0 %v1943
    %v2082 = vpop.f32.mrb[0].mxu0
    %v2083 = vadd.f32 0.0, %v2082
    %v2084 = vpop.f32.mrb[0].mxu0
    %v2085 = vadd.f32 0.0, %v2084
    %2086 = vdwg.mxu0
    %v2087 = vadd.f32 %v1919, %v2012
    %v2088 = vadd.f32 %v1920, %v2014
    %v2089 = vadd.f32 %v1921, %v2083
    %v2090 = vadd.f32 %v1922, %v2085
    %s2091 = scalar_lea.vmem [#allocation2], 768
    %v2092 = vld [vmem:[%s2091] sm:$0xff]
    %v2093 = vld [vmem:[%s2091 + $0x8] sm:$0xff]
    %v2094 = vld [vmem:[%s2091 + $0x10] sm:$0xff]
    %v2095 = vld [vmem:[%s2091 + $0x18] sm:$0xff]
    %v2096 = vld [vmem:[%s2091 + $0x20] sm:$0xff]
    %v2097 = vld [vmem:[%s2091 + $0x28] sm:$0xff]
    %v2098 = vld [vmem:[%s2091 + $0x30] sm:$0xff]
    %v2099 = vld [vmem:[%s2091 + $0x38] sm:$0xff]
    %v2100 = vld [vmem:[%s2091 + $0x40] sm:$0xff]
    %v2101 = vld [vmem:[%s2091 + $0x48] sm:$0xff]
    %v2102 = vld [vmem:[%s2091 + $0x50] sm:$0xff]
    %v2103 = vld [vmem:[%s2091 + $0x58] sm:$0xff]
    %v2104 = vld [vmem:[%s2091 + $0x60] sm:$0xff]
    %v2105 = vld [vmem:[%s2091 + $0x68] sm:$0xff]
    %v2106 = vld [vmem:[%s2091 + $0x70] sm:$0xff]
    %v2107 = vld [vmem:[%s2091 + $0x78] sm:$0xff]
    %v2108 = vrot.slane %v1089, 6
    %v2109 = vrot.slane %v1090, 5
    %v2110 = vsel %vm1127, %v2109, %v2108
    %v2111 = vsel %vm179, %v2110, 0
    %2113 = vmatprep.subr.mxu0 %v2093
    %2114 = vmatpush1.msra.mxu0 %v2092
    %2115 = vmatprep.subr.mxu0 %v2097
    %2116 = vmatpush1.msra.mxu0 %v2096
    %2117 = vmatprep.subr.mxu0 %v2101
    %2118 = vmatpush1.msra.mxu0 %v2100
    %2119 = vmatprep.subr.mxu0 %v2105
    %2120 = vmatpush1.msra.mxu0 %v2104
    %2121 = vmatprep.subr.mxu0 0.0
    %2122 = vmatpush1.msra.mxu0 0.0
    %2123 = vmatprep.subr.mxu0 0.0
    %2124 = vmatpush1.msra.mxu0 0.0
    %2125 = vmatprep.subr.mxu0 0.0
    %2126 = vmatpush1.msra.mxu0 0.0
    %2127 = vmatprep.subr.mxu0 0.0
    %2128 = vmatpush1.msra.mxu0 0.0
    %2129 = vmatprep.subr.mxu0 0.0
    %2130 = vmatpush1.msra.mxu0 0.0
    %2131 = vmatprep.subr.mxu0 0.0
    %2132 = vmatpush1.msra.mxu0 0.0
    %2133 = vmatprep.subr.mxu0 0.0
    %2134 = vmatpush1.msra.mxu0 0.0
    %2135 = vmatprep.subr.mxu0 0.0
    %2136 = vmatpush1.msra.mxu0 0.0
    %2137 = vmatprep.subr.mxu0 0.0
    %2138 = vmatpush1.msra.mxu0 0.0
    %2139 = vmatprep.subr.mxu0 0.0
    %2140 = vmatpush1.msra.mxu0 0.0
    %2141 = vmatprep.subr.mxu0 0.0
    %2142 = vmatpush1.msra.mxu0 0.0
    %2143 = vmatprep.subr.mxu0 0.0
    %2144 = vmatpush1.msra.mxu0 0.0
    %2145 = vmatprep.subr.mxu0 0.0
    %2146 = vmatpush1.msra.mxu0 0.0
    %2147 = vmatprep.subr.mxu0 0.0
    %2148 = vmatpush1.msra.mxu0 0.0
    %2149 = vmatprep.subr.mxu0 0.0
    %2150 = vmatpush1.msra.mxu0 0.0
    %2151 = vmatprep.subr.mxu0 0.0
    %2152 = vmatpush1.msra.mxu0 0.0
    %2153 = vmatprep.subr.mxu0 0.0
    %2154 = vmatpush1.msra.mxu0 0.0
    %2155 = vmatprep.subr.mxu0 0.0
    %2156 = vmatpush1.msra.mxu0 0.0
    %2157 = vmatprep.subr.mxu0 0.0
    %2158 = vmatpush1.msra.mxu0 0.0
    %2159 = vmatprep.subr.mxu0 0.0
    %2160 = vmatpush1.msra.mxu0 0.0
    %2161 = vmatprep.subr.mxu0 0.0
    %2162 = vmatpush1.msra.mxu0 0.0
    %2163 = vmatprep.subr.mxu0 0.0
    %2164 = vmatpush1.msra.mxu0 0.0
    %2165 = vmatprep.subr.mxu0 0.0
    %2166 = vmatpush1.msra.mxu0 0.0
    %2167 = vmatprep.subr.mxu0 0.0
    %2168 = vmatpush1.msra.mxu0 0.0
    %2169 = vmatprep.subr.mxu0 0.0
    %2170 = vmatpush1.msra.mxu0 0.0
    %2171 = vmatprep.subr.mxu0 0.0
    %2172 = vmatpush1.msra.mxu0 0.0
    %2173 = vmatprep.subr.mxu0 0.0
    %2174 = vmatpush1.msra.mxu0 0.0
    %2175 = vmatprep.subr.mxu0 0.0
    %2176 = vmatpush1.msra.mxu0 0.0
    %2177 = vmatprep.mubr.f32.mxu0 0.0
    %2178 = vmatmul.mubr.f32.gmra.mrb[0].mxu0 %v2111
    %v2179 = vpop.f32.mrb[0].mxu0
    %v2180 = vadd.f32 0.0, %v2179
    %v2181 = vpop.f32.mrb[0].mxu0
    %v2182 = vadd.f32 0.0, %v2181
    %2183 = vdwg.mxu0
    %2184 = vmatprep.subr.mxu0 %v2095
    %2185 = vmatpush1.msra.mxu0 %v2094
    %2186 = vmatprep.subr.mxu0 %v2099
    %2187 = vmatpush1.msra.mxu0 %v2098
    %2188 = vmatprep.subr.mxu0 %v2103
    %2189 = vmatpush1.msra.mxu0 %v2102
    %2190 = vmatprep.subr.mxu0 %v2107
    %2191 = vmatpush1.msra.mxu0 %v2106
    %2192 = vmatprep.subr.mxu0 0.0
    %2193 = vmatpush1.msra.mxu0 0.0
    %2194 = vmatprep.subr.mxu0 0.0
    %2195 = vmatpush1.msra.mxu0 0.0
    %2196 = vmatprep.subr.mxu0 0.0
    %2197 = vmatpush1.msra.mxu0 0.0
    %2198 = vmatprep.subr.mxu0 0.0
    %2199 = vmatpush1.msra.mxu0 0.0
    %2200 = vmatprep.subr.mxu0 0.0
    %2201 = vmatpush1.msra.mxu0 0.0
    %2202 = vmatprep.subr.mxu0 0.0
    %2203 = vmatpush1.msra.mxu0 0.0
    %2204 = vmatprep.subr.mxu0 0.0
    %2205 = vmatpush1.msra.mxu0 0.0
    %2206 = vmatprep.subr.mxu0 0.0
    %2207 = vmatpush1.msra.mxu0 0.0
    %2208 = vmatprep.subr.mxu0 0.0
    %2209 = vmatpush1.msra.mxu0 0.0
    %2210 = vmatprep.subr.mxu0 0.0
    %2211 = vmatpush1.msra.mxu0 0.0
    %2212 = vmatprep.subr.mxu0 0.0
    %2213 = vmatpush1.msra.mxu0 0.0
    %2214 = vmatprep.subr.mxu0 0.0
    %2215 = vmatpush1.msra.mxu0 0.0
    %2216 = vmatprep.subr.mxu0 0.0
    %2217 = vmatpush1.msra.mxu0 0.0
    %2218 = vmatprep.subr.mxu0 0.0
    %2219 = vmatpush1.msra.mxu0 0.0
    %2220 = vmatprep.subr.mxu0 0.0
    %2221 = vmatpush1.msra.mxu0 0.0
    %2222 = vmatprep.subr.mxu0 0.0
    %2223 = vmatpush1.msra.mxu0 0.0
    %2224 = vmatprep.subr.mxu0 0.0
    %2225 = vmatpush1.msra.mxu0 0.0
    %2226 = vmatprep.subr.mxu0 0.0
    %2227 = vmatpush1.msra.mxu0 0.0
    %2228 = vmatprep.subr.mxu0 0.0
    %2229 = vmatpush1.msra.mxu0 0.0
    %2230 = vmatprep.subr.mxu0 0.0
    %2231 = vmatpush1.msra.mxu0 0.0
    %2232 = vmatprep.subr.mxu0 0.0
    %2233 = vmatpush1.msra.mxu0 0.0
    %2234 = vmatprep.subr.mxu0 0.0
    %2235 = vmatpush1.msra.mxu0 0.0
    %2236 = vmatprep.subr.mxu0 0.0
    %2237 = vmatpush1.msra.mxu0 0.0
    %2238 = vmatprep.subr.mxu0 0.0
    %2239 = vmatpush1.msra.mxu0 0.0
    %2240 = vmatprep.subr.mxu0 0.0
    %2241 = vmatpush1.msra.mxu0 0.0
    %2242 = vmatprep.subr.mxu0 0.0
    %2243 = vmatpush1.msra.mxu0 0.0
    %2244 = vmatprep.subr.mxu0 0.0
    %2245 = vmatpush1.msra.mxu0 0.0
    %2246 = vmatprep.subr.mxu0 0.0
    %2247 = vmatpush1.msra.mxu0 0.0
    %2248 = vmatprep.mubr.f32.mxu0 0.0
    %2249 = vmatmul.mubr.f32.gmra.mrb[0].mxu0 %v2111
    %v2250 = vpop.f32.mrb[0].mxu0
    %v2251 = vadd.f32 0.0, %v2250
    %v2252 = vpop.f32.mrb[0].mxu0
    %v2253 = vadd.f32 0.0, %v2252
    %2254 = vdwg.mxu0
    %v2255 = vadd.f32 %v2087, %v2180
    %v2256 = vadd.f32 %v2088, %v2182
    %v2257 = vadd.f32 %v2089, %v2251
    %v2258 = vadd.f32 %v2090, %v2253
    %s2259 = scalar_lea.vmem [#allocation2], 896
    %v2260 = vld [vmem:[%s2259] sm:$0xff]
    %v2261 = vld [vmem:[%s2259 + $0x8] sm:$0xff]
    %v2262 = vld [vmem:[%s2259 + $0x10] sm:$0xff]
    %v2263 = vld [vmem:[%s2259 + $0x18] sm:$0xff]
    %v2264 = vld [vmem:[%s2259 + $0x20] sm:$0xff]
    %v2265 = vld [vmem:[%s2259 + $0x28] sm:$0xff]
    %v2266 = vld [vmem:[%s2259 + $0x30] sm:$0xff]
    %v2267 = vld [vmem:[%s2259 + $0x38] sm:$0xff]
    %v2268 = vld [vmem:[%s2259 + $0x40] sm:$0xff]
    %v2269 = vld [vmem:[%s2259 + $0x48] sm:$0xff]
    %v2270 = vld [vmem:[%s2259 + $0x50] sm:$0xff]
    %v2271 = vld [vmem:[%s2259 + $0x58] sm:$0xff]
    %v2272 = vld [vmem:[%s2259 + $0x60] sm:$0xff]
    %v2273 = vld [vmem:[%s2259 + $0x68] sm:$0xff]
    %v2274 = vld [vmem:[%s2259 + $0x70] sm:$0xff]
    %v2275 = vld [vmem:[%s2259 + $0x78] sm:$0xff]
    %v2276 = vrot.slane %v1089, 7
    %v2277 = vrot.slane %v1090, 6
    %v2278 = vsel %vm1127, %v2277, %v2276
    %v2279 = vsel %vm179, %v2278, 0
    %2281 = vmatprep.subr.mxu0 %v2261
    %2282 = vmatpush1.msra.mxu0 %v2260
    %2283 = vmatprep.subr.mxu0 %v2265
    %2284 = vmatpush1.msra.mxu0 %v2264
    %2285 = vmatprep.subr.mxu0 %v2269
    %2286 = vmatpush1.msra.mxu0 %v2268
    %2287 = vmatprep.subr.mxu0 %v2273
    %2288 = vmatpush1.msra.mxu0 %v2272
    %2289 = vmatprep.subr.mxu0 0.0
    %2290 = vmatpush1.msra.mxu0 0.0
    %2291 = vmatprep.subr.mxu0 0.0
    %2292 = vmatpush1.msra.mxu0 0.0
    %2293 = vmatprep.subr.mxu0 0.0
    %2294 = vmatpush1.msra.mxu0 0.0
    %2295 = vmatprep.subr.mxu0 0.0
    %2296 = vmatpush1.msra.mxu0 0.0
    %2297 = vmatprep.subr.mxu0 0.0
    %2298 = vmatpush1.msra.mxu0 0.0
    %2299 = vmatprep.subr.mxu0 0.0
    %2300 = vmatpush1.msra.mxu0 0.0
    %2301 = vmatprep.subr.mxu0 0.0
    %2302 = vmatpush1.msra.mxu0 0.0
    %2303 = vmatprep.subr.mxu0 0.0
    %2304 = vmatpush1.msra.mxu0 0.0
    %2305 = vmatprep.subr.mxu0 0.0
    %2306 = vmatpush1.msra.mxu0 0.0
    %2307 = vmatprep.subr.mxu0 0.0
    %2308 = vmatpush1.msra.mxu0 0.0
    %2309 = vmatprep.subr.mxu0 0.0
    %2310 = vmatpush1.msra.mxu0 0.0
    %2311 = vmatprep.subr.mxu0 0.0
    %2312 = vmatpush1.msra.mxu0 0.0
    %2313 = vmatprep.subr.mxu0 0.0
    %2314 = vmatpush1.msra.mxu0 0.0
    %2315 = vmatprep.subr.mxu0 0.0
    %2316 = vmatpush1.msra.mxu0 0.0
    %2317 = vmatprep.subr.mxu0 0.0
    %2318 = vmatpush1.msra.mxu0 0.0
    %2319 = vmatprep.subr.mxu0 0.0
    %2320 = vmatpush1.msra.mxu0 0.0
    %2321 = vmatprep.subr.mxu0 0.0
    %2322 = vmatpush1.msra.mxu0 0.0
    %2323 = vmatprep.subr.mxu0 0.0
    %2324 = vmatpush1.msra.mxu0 0.0
    %2325 = vmatprep.subr.mxu0 0.0
    %2326 = vmatpush1.msra.mxu0 0.0
    %2327 = vmatprep.subr.mxu0 0.0
    %2328 = vmatpush1.msra.mxu0 0.0
    %2329 = vmatprep.subr.mxu0 0.0
    %2330 = vmatpush1.msra.mxu0 0.0
    %2331 = vmatprep.subr.mxu0 0.0
    %2332 = vmatpush1.msra.mxu0 0.0
    %2333 = vmatprep.subr.mxu0 0.0
    %2334 = vmatpush1.msra.mxu0 0.0
    %2335 = vmatprep.subr.mxu0 0.0
    %2336 = vmatpush1.msra.mxu0 0.0
    %2337 = vmatprep.subr.mxu0 0.0
    %2338 = vmatpush1.msra.mxu0 0.0
    %2339 = vmatprep.subr.mxu0 0.0
    %2340 = vmatpush1.msra.mxu0 0.0
    %2341 = vmatprep.subr.mxu0 0.0
    %2342 = vmatpush1.msra.mxu0 0.0
    %2343 = vmatprep.subr.mxu0 0.0
    %2344 = vmatpush1.msra.mxu0 0.0
    %2345 = vmatprep.mubr.f32.mxu0 0.0
    %2346 = vmatmul.mubr.f32.gmra.mrb[0].mxu0 %v2279
    %v2347 = vpop.f32.mrb[0].mxu0
    %v2348 = vadd.f32 0.0, %v2347
    %v2349 = vpop.f32.mrb[0].mxu0
    %v2350 = vadd.f32 0.0, %v2349
    %2351 = vdwg.mxu0
    %2352 = vmatprep.subr.mxu0 %v2263
    %2353 = vmatpush1.msra.mxu0 %v2262
    %2354 = vmatprep.subr.mxu0 %v2267
    %2355 = vmatpush1.msra.mxu0 %v2266
    %2356 = vmatprep.subr.mxu0 %v2271
    %2357 = vmatpush1.msra.mxu0 %v2270
    %2358 = vmatprep.subr.mxu0 %v2275
    %2359 = vmatpush1.msra.mxu0 %v2274
    %2360 = vmatprep.subr.mxu0 0.0
    %2361 = vmatpush1.msra.mxu0 0.0
    %2362 = vmatprep.subr.mxu0 0.0
    %2363 = vmatpush1.msra.mxu0 0.0
    %2364 = vmatprep.subr.mxu0 0.0
    %2365 = vmatpush1.msra.mxu0 0.0
    %2366 = vmatprep.subr.mxu0 0.0
    %2367 = vmatpush1.msra.mxu0 0.0
    %2368 = vmatprep.subr.mxu0 0.0
    %2369 = vmatpush1.msra.mxu0 0.0
    %2370 = vmatprep.subr.mxu0 0.0
    %2371 = vmatpush1.msra.mxu0 0.0
    %2372 = vmatprep.subr.mxu0 0.0
    %2373 = vmatpush1.msra.mxu0 0.0
    %2374 = vmatprep.subr.mxu0 0.0
    %2375 = vmatpush1.msra.mxu0 0.0
    %2376 = vmatprep.subr.mxu0 0.0
    %2377 = vmatpush1.msra.mxu0 0.0
    %2378 = vmatprep.subr.mxu0 0.0
    %2379 = vmatpush1.msra.mxu0 0.0
    %2380 = vmatprep.subr.mxu0 0.0
    %2381 = vmatpush1.msra.mxu0 0.0
    %2382 = vmatprep.subr.mxu0 0.0
    %2383 = vmatpush1.msra.mxu0 0.0
    %2384 = vmatprep.subr.mxu0 0.0
    %2385 = vmatpush1.msra.mxu0 0.0
    %2386 = vmatprep.subr.mxu0 0.0
    %2387 = vmatpush1.msra.mxu0 0.0
    %2388 = vmatprep.subr.mxu0 0.0
    %2389 = vmatpush1.msra.mxu0 0.0
    %2390 = vmatprep.subr.mxu0 0.0
    %2391 = vmatpush1.msra.mxu0 0.0
    %2392 = vmatprep.subr.mxu0 0.0
    %2393 = vmatpush1.msra.mxu0 0.0
    %2394 = vmatprep.subr.mxu0 0.0
    %2395 = vmatpush1.msra.mxu0 0.0
    %2396 = vmatprep.subr.mxu0 0.0
    %2397 = vmatpush1.msra.mxu0 0.0
    %2398 = vmatprep.subr.mxu0 0.0
    %2399 = vmatpush1.msra.mxu0 0.0
    %2400 = vmatprep.subr.mxu0 0.0
    %2401 = vmatpush1.msra.mxu0 0.0
    %2402 = vmatprep.subr.mxu0 0.0
    %2403 = vmatpush1.msra.mxu0 0.0
    %2404 = vmatprep.subr.mxu0 0.0
    %2405 = vmatpush1.msra.mxu0 0.0
    %2406 = vmatprep.subr.mxu0 0.0
    %2407 = vmatpush1.msra.mxu0 0.0
    %2408 = vmatprep.subr.mxu0 0.0
    %2409 = vmatpush1.msra.mxu0 0.0
    %2410 = vmatprep.subr.mxu0 0.0
    %2411 = vmatpush1.msra.mxu0 0.0
    %2412 = vmatprep.subr.mxu0 0.0
    %2413 = vmatpush1.msra.mxu0 0.0
    %2414 = vmatprep.subr.mxu0 0.0
    %2415 = vmatpush1.msra.mxu0 0.0
    %2416 = vmatprep.mubr.f32.mxu0 0.0
    %2417 = vmatmul.mubr.f32.gmra.mrb[0].mxu0 %v2279
    %v2418 = vpop.f32.mrb[0].mxu0
    %v2419 = vadd.f32 0.0, %v2418
    %v2420 = vpop.f32.mrb[0].mxu0
    %v2421 = vadd.f32 0.0, %v2420
    %2422 = vdwg.mxu0
    %v2423 = vadd.f32 %v2255, %v2348
    %v2424 = vadd.f32 %v2256, %v2350
    %v2425 = vadd.f32 %v2257, %v2419
    %v2426 = vadd.f32 %v2258, %v2421
    %v2428 = vlaneseq
    %v2429 = vshrl.u32 %v2428, 7
    %v2430 = vsub.s32 0, %v2429
    %v2431 = vrot.slane %v56, %v2430
    %v2432 = vlaneseq
    %v2433 = vshrl.u32 %v2432, 7
    %v2434 = vsub.s32 1, %v2433
    %v2435 = vrot.slane %v56, %v2434
    %v2436 = vlaneseq
    %v2437 = vshrl.u32 %v2436, 7
    %v2438 = vsub.s32 2, %v2437
    %v2439 = vrot.slane %v56, %v2438
    %v2440 = vlaneseq
    %v2441 = vshrl.u32 %v2440, 7
    %v2442 = vsub.s32 3, %v2441
    %v2443 = vrot.slane %v56, %v2442
    %v2448 = vadd.f32 %v2423, %v2431
    %v2449 = vadd.f32 %v2424, %v2435
    %v2450 = vadd.f32 %v2425, %v2439
    %v2451 = vadd.f32 %v2426, %v2443
    %vm2452 = vcmp.gt.f32.partialorder %v2448, 0.0
    %vm2453 = vcmp.gt.f32.partialorder %v2449, 0.0
    %vm2454 = vcmp.gt.f32.partialorder %v2450, 0.0
    %vm2455 = vcmp.gt.f32.partialorder %v2451, 0.0
    %v2456 = vmul.f32 %v2448, 0.01
    %v2457 = vmul.f32 %v2449, 0.01
    %v2458 = vmul.f32 %v2450, 0.01
    %v2459 = vmul.f32 %v2451, 0.01
    %v2460 = vsel %vm2452, %v2448, %v2456
    %v2461 = vsel %vm2453, %v2449, %v2457
    %v2462 = vsel %vm2454, %v2450, %v2458
    %v2463 = vsel %vm2455, %v2451, %v2459
    %v2465 = vlaneseq
    %v2466 = vshrl.u32 %v2465, 7
    %v2467 = vsub.s32 0, %v2466
    %v2468 = vrot.slane %v121, %v2467
    %2470 = vmatprep.subr.mxu0 0.0
    %2471 = vmatpush1.msra.mxu0 %v57
    %2472 = vmatprep.subr.mxu0 0.0
    %2473 = vmatpush1.msra.mxu0 %v58
    %2474 = vmatprep.subr.mxu0 0.0
    %2475 = vmatpush1.msra.mxu0 %v59
    %2476 = vmatprep.subr.mxu0 0.0
    %2477 = vmatpush1.msra.mxu0 %v60
    %2478 = vmatprep.subr.mxu0 0.0
    %2479 = vmatpush1.msra.mxu0 %v61
    %2480 = vmatprep.subr.mxu0 0.0
    %2481 = vmatpush1.msra.mxu0 %v62
    %2482 = vmatprep.subr.mxu0 0.0
    %2483 = vmatpush1.msra.mxu0 %v63
    %2484 = vmatprep.subr.mxu0 0.0
    %2485 = vmatpush1.msra.mxu0 %v64
    %2486 = vmatprep.subr.mxu0 0.0
    %2487 = vmatpush1.msra.mxu0 %v65
    %2488 = vmatprep.subr.mxu0 0.0
    %2489 = vmatpush1.msra.mxu0 %v66
    %2490 = vmatprep.subr.mxu0 0.0
    %2491 = vmatpush1.msra.mxu0 %v67
    %2492 = vmatprep.subr.mxu0 0.0
    %2493 = vmatpush1.msra.mxu0 %v68
    %2494 = vmatprep.subr.mxu0 0.0
    %2495 = vmatpush1.msra.mxu0 %v69
    %2496 = vmatprep.subr.mxu0 0.0
    %2497 = vmatpush1.msra.mxu0 %v70
    %2498 = vmatprep.subr.mxu0 0.0
    %2499 = vmatpush1.msra.mxu0 %v71
    %2500 = vmatprep.subr.mxu0 0.0
    %2501 = vmatpush1.msra.mxu0 %v72
    %2502 = vmatprep.subr.mxu0 0.0
    %2503 = vmatpush1.msra.mxu0 %v73
    %2504 = vmatprep.subr.mxu0 0.0
    %2505 = vmatpush1.msra.mxu0 %v74
    %2506 = vmatprep.subr.mxu0 0.0
    %2507 = vmatpush1.msra.mxu0 %v75
    %2508 = vmatprep.subr.mxu0 0.0
    %2509 = vmatpush1.msra.mxu0 %v76
    %2510 = vmatprep.subr.mxu0 0.0
    %2511 = vmatpush1.msra.mxu0 %v77
    %2512 = vmatprep.subr.mxu0 0.0
    %2513 = vmatpush1.msra.mxu0 %v78
    %2514 = vmatprep.subr.mxu0 0.0
    %2515 = vmatpush1.msra.mxu0 %v79
    %2516 = vmatprep.subr.mxu0 0.0
    %2517 = vmatpush1.msra.mxu0 %v80
    %2518 = vmatprep.subr.mxu0 0.0
    %2519 = vmatpush1.msra.mxu0 %v81
    %2520 = vmatprep.subr.mxu0 0.0
    %2521 = vmatpush1.msra.mxu0 %v82
    %2522 = vmatprep.subr.mxu0 0.0
    %2523 = vmatpush1.msra.mxu0 %v83
    %2524 = vmatprep.subr.mxu0 0.0
    %2525 = vmatpush1.msra.mxu0 %v84
    %2526 = vmatprep.subr.mxu0 0.0
    %2527 = vmatpush1.msra.mxu0 %v85
    %2528 = vmatprep.subr.mxu0 0.0
    %2529 = vmatpush1.msra.mxu0 %v86
    %2530 = vmatprep.subr.mxu0 0.0
    %2531 = vmatpush1.msra.mxu0 %v87
    %2532 = vmatprep.subr.mxu0 0.0
    %2533 = vmatpush1.msra.mxu0 %v88
    %2534 = vmatprep.mubr.f32.mxu0 %v2461
    %2535 = vmatmul.mubr.f32.gmra.mrb[0].mxu0 %v2460
    %v2536 = vpop.f32.mrb[0].mxu0
    %v2537 = vadd.f32 %v2468, %v2536
    %v2538 = vpop.f32.mrb[0].mxu0
    %2539 = vdwg.mxu0
    %2540 = vmatprep.subr.mxu0 0.0
    %2541 = vmatpush1.msra.mxu0 %v89
    %2542 = vmatprep.subr.mxu0 0.0
    %2543 = vmatpush1.msra.mxu0 %v90
    %2544 = vmatprep.subr.mxu0 0.0
    %2545 = vmatpush1.msra.mxu0 %v91
    %2546 = vmatprep.subr.mxu0 0.0
    %2547 = vmatpush1.msra.mxu0 %v92
    %2548 = vmatprep.subr.mxu0 0.0
    %2549 = vmatpush1.msra.mxu0 %v93
    %2550 = vmatprep.subr.mxu0 0.0
    %2551 = vmatpush1.msra.mxu0 %v94
    %2552 = vmatprep.subr.mxu0 0.0
    %2553 = vmatpush1.msra.mxu0 %v95
    %2554 = vmatprep.subr.mxu0 0.0
    %2555 = vmatpush1.msra.mxu0 %v96
    %2556 = vmatprep.subr.mxu0 0.0
    %2557 = vmatpush1.msra.mxu0 %v97
    %2558 = vmatprep.subr.mxu0 0.0
    %2559 = vmatpush1.msra.mxu0 %v98
    %2560 = vmatprep.subr.mxu0 0.0
    %2561 = vmatpush1.msra.mxu0 %v99
    %2562 = vmatprep.subr.mxu0 0.0
    %2563 = vmatpush1.msra.mxu0 %v100
    %2564 = vmatprep.subr.mxu0 0.0
    %2565 = vmatpush1.msra.mxu0 %v101
    %2566 = vmatprep.subr.mxu0 0.0
    %2567 = vmatpush1.msra.mxu0 %v102
    %2568 = vmatprep.subr.mxu0 0.0
    %2569 = vmatpush1.msra.mxu0 %v103
    %2570 = vmatprep.subr.mxu0 0.0
    %2571 = vmatpush1.msra.mxu0 %v104
    %2572 = vmatprep.subr.mxu0 0.0
    %2573 = vmatpush1.msra.mxu0 %v105
    %2574 = vmatprep.subr.mxu0 0.0
    %2575 = vmatpush1.msra.mxu0 %v106
    %2576 = vmatprep.subr.mxu0 0.0
    %2577 = vmatpush1.msra.mxu0 %v107
    %2578 = vmatprep.subr.mxu0 0.0
    %2579 = vmatpush1.msra.mxu0 %v108
    %2580 = vmatprep.subr.mxu0 0.0
    %2581 = vmatpush1.msra.mxu0 %v109
    %2582 = vmatprep.subr.mxu0 0.0
    %2583 = vmatpush1.msra.mxu0 %v110
    %2584 = vmatprep.subr.mxu0 0.0
    %2585 = vmatpush1.msra.mxu0 %v111
    %2586 = vmatprep.subr.mxu0 0.0
    %2587 = vmatpush1.msra.mxu0 %v112
    %2588 = vmatprep.subr.mxu0 0.0
    %2589 = vmatpush1.msra.mxu0 %v113
    %2590 = vmatprep.subr.mxu0 0.0
    %2591 = vmatpush1.msra.mxu0 %v114
    %2592 = vmatprep.subr.mxu0 0.0
    %2593 = vmatpush1.msra.mxu0 %v115
    %2594 = vmatprep.subr.mxu0 0.0
    %2595 = vmatpush1.msra.mxu0 %v116
    %2596 = vmatprep.subr.mxu0 0.0
    %2597 = vmatpush1.msra.mxu0 %v117
    %2598 = vmatprep.subr.mxu0 0.0
    %2599 = vmatpush1.msra.mxu0 %v118
    %2600 = vmatprep.subr.mxu0 0.0
    %2601 = vmatpush1.msra.mxu0 %v119
    %2602 = vmatprep.subr.mxu0 0.0
    %2603 = vmatpush1.msra.mxu0 %v120
    %2604 = vmatprep.mubr.f32.mxu0 %v2463
    %2605 = vmatmul.mubr.f32.gmra.mrb[0].mxu0 %v2462
    %v2606 = vpop.f32.mrb[0].mxu0
    %v2607 = vadd.f32 %v2537, %v2606
    %v2608 = vpop.f32.mrb[0].mxu0
    %2609 = vdwg.mxu0
    %v2610 = vadd.f32 %v122, %v2607
    %v2611 = vlaneseq
    %v2612 = vshrl.u32 %v2611, 7
    %v2613 = vsub.s32 0, %v2612
    %v2614 = vrot.slane %v2610, %v2613
    %2616 = vbcast.lane.b32.xlu0 %v2614, 256
    %v2617 = vpop.permute.xlu0 %2616
    %v2618 = vlaneseq
    %v2619 = vshrl.u32 %v2618, 7
    %v2620 = vsub.s32 1, %v2619
    %v2621 = vrot.slane %v2610, %v2620
    %2623 = vbcast.lane.b32.xlu0 %v2621, 256
    %v2624 = vpop.permute.xlu0 %2623
    %v2625 = vadd.f32 %v2617, %v50
    %v2626 = vadd.f32 %v2624, %v50
    %v2627 = vld [vmem:[%s2] sm:$0x1]
    %v2629 = vlaneseq
    %v2630 = vshrl.u32 %v2629, 7
    %v2631 = vsub.s32 0, %v2630
    %v2632 = vrot.slane %v2627, %v2631
    %v2634 = vmul.f32 %v2617, %v2632
    %v2635 = vmul.f32 %v2624, %v2632
    %v2636 = vld [vmem:[%s3] sm:$0xff]
    %v2637 = vadd.f32 %v2634, %v2636
    %v2638 = vadd.f32 %v2635, %v2636
    %v2639 = vld [vmem:[%s151] sm:$0x1]
    %v2641 = vlaneseq
    %v2642 = vshrl.u32 %v2641, 7
    %v2643 = vsub.s32 0, %v2642
    %v2644 = vrot.slane %v2639, %v2643
    %v2646 = vmul.f32 %v2617, %v2644
    %v2647 = vmul.f32 %v2624, %v2644
    %v2648 = vld [vmem:[%s161] sm:$0xff]
    %v2649 = vadd.f32 %v2646, %v2648
    %v2650 = vadd.f32 %v2647, %v2648
    %v2651 = vld [vmem:[%s165] sm:$0x1]
    %v2653 = vlaneseq
    %v2654 = vshrl.u32 %v2653, 7
    %v2655 = vsub.s32 0, %v2654
    %v2656 = vrot.slane %v2651, %v2655
    %v2658 = vmul.f32 %v2617, %v2656
    %v2659 = vmul.f32 %v2624, %v2656
    %v2660 = vld [vmem:[%s175] sm:$0xff]
    %v2661 = vadd.f32 %v2658, %v2660
    %v2662 = vadd.f32 %v2659, %v2660
    %v2664 = vsel %vm179, %v2637, 0
    %v2667 = vsel %vm179, %v2649, 0
    %2669 = vmatprep.subr.mxu0 0.0
    %2670 = vmatpush1.xpose.msra.mxu0 %v2667
    %2671 = vmatprep.subr.mxu0 0.0
    %2672 = vmatpush1.xpose.msra.mxu0 0.0
    %2673 = vmatprep.subr.mxu0 0.0
    %2674 = vmatpush1.xpose.msra.mxu0 0.0
    %2675 = vmatprep.subr.mxu0 0.0
    %2676 = vmatpush1.xpose.msra.mxu0 0.0
    %2677 = vmatprep.subr.mxu0 0.0
    %2678 = vmatpush1.xpose.msra.mxu0 0.0
    %2679 = vmatprep.subr.mxu0 0.0
    %2680 = vmatpush1.xpose.msra.mxu0 0.0
    %2681 = vmatprep.subr.mxu0 0.0
    %2682 = vmatpush1.xpose.msra.mxu0 0.0
    %2683 = vmatprep.subr.mxu0 0.0
    %2684 = vmatpush1.xpose.msra.mxu0 0.0
    %2685 = vmatprep.subr.mxu0 0.0
    %2686 = vmatpush1.xpose.msra.mxu0 0.0
    %2687 = vmatprep.subr.mxu0 0.0
    %2688 = vmatpush1.xpose.msra.mxu0 0.0
    %2689 = vmatprep.subr.mxu0 0.0
    %2690 = vmatpush1.xpose.msra.mxu0 0.0
    %2691 = vmatprep.subr.mxu0 0.0
    %2692 = vmatpush1.xpose.msra.mxu0 0.0
    %2693 = vmatprep.subr.mxu0 0.0
    %2694 = vmatpush1.xpose.msra.mxu0 0.0
    %2695 = vmatprep.subr.mxu0 0.0
    %2696 = vmatpush1.xpose.msra.mxu0 0.0
    %2697 = vmatprep.subr.mxu0 0.0
    %2698 = vmatpush1.xpose.msra.mxu0 0.0
    %2699 = vmatprep.subr.mxu0 0.0
    %2700 = vmatpush1.xpose.msra.mxu0 0.0
    %2701 = vmatprep.subr.mxu0 0.0
    %2702 = vmatpush1.xpose.msra.mxu0 0.0
    %2703 = vmatprep.subr.mxu0 0.0
    %2704 = vmatpush1.xpose.msra.mxu0 0.0
    %2705 = vmatprep.subr.mxu0 0.0
    %2706 = vmatpush1.xpose.msra.mxu0 0.0
    %2707 = vmatprep.subr.mxu0 0.0
    %2708 = vmatpush1.xpose.msra.mxu0 0.0
    %2709 = vmatprep.subr.mxu0 0.0
    %2710 = vmatpush1.xpose.msra.mxu0 0.0
    %2711 = vmatprep.subr.mxu0 0.0
    %2712 = vmatpush1.xpose.msra.mxu0 0.0
    %2713 = vmatprep.subr.mxu0 0.0
    %2714 = vmatpush1.xpose.msra.mxu0 0.0
    %2715 = vmatprep.subr.mxu0 0.0
    %2716 = vmatpush1.xpose.msra.mxu0 0.0
    %2717 = vmatprep.subr.mxu0 0.0
    %2718 = vmatpush1.xpose.msra.mxu0 0.0
    %2719 = vmatprep.subr.mxu0 0.0
    %2720 = vmatpush1.xpose.msra.mxu0 0.0
    %2721 = vmatprep.subr.mxu0 0.0
    %2722 = vmatpush1.xpose.msra.mxu0 0.0
    %2723 = vmatprep.subr.mxu0 0.0
    %2724 = vmatpush1.xpose.msra.mxu0 0.0
    %2725 = vmatprep.subr.mxu0 0.0
    %2726 = vmatpush1.xpose.msra.mxu0 0.0
    %2727 = vmatprep.subr.mxu0 0.0
    %2728 = vmatpush1.xpose.msra.mxu0 0.0
    %2729 = vmatprep.subr.mxu0 0.0
    %2730 = vmatpush1.xpose.msra.mxu0 0.0
    %2731 = vmatprep.subr.mxu0 0.0
    %2732 = vmatpush1.xpose.msra.mxu0 0.0
    %2733 = vmatprep.mubr.f32.mxu0 0.0
    %2734 = vmatmul.mubr.f32.gmra.mrb[0].mxu0 %v2664
    %v2735 = vpop.f32.mrb[0].mxu0
    %v2736 = vadd.f32 0.0, %v2735
    %v2737 = vpop.f32.mrb[0].mxu0
    %2738 = vdwg.mxu0
    %v2740 = vsel %vm179, %v2638, 0
    %v2743 = vsel %vm179, %v2650, 0
    %2745 = vmatprep.subr.mxu0 0.0
    %2746 = vmatpush1.xpose.msra.mxu0 %v2743
    %2747 = vmatprep.subr.mxu0 0.0
    %2748 = vmatpush1.xpose.msra.mxu0 0.0
    %2749 = vmatprep.subr.mxu0 0.0
    %2750 = vmatpush1.xpose.msra.mxu0 0.0
    %2751 = vmatprep.subr.mxu0 0.0
    %2752 = vmatpush1.xpose.msra.mxu0 0.0
    %2753 = vmatprep.subr.mxu0 0.0
    %2754 = vmatpush1.xpose.msra.mxu0 0.0
    %2755 = vmatprep.subr.mxu0 0.0
    %2756 = vmatpush1.xpose.msra.mxu0 0.0
    %2757 = vmatprep.subr.mxu0 0.0
    %2758 = vmatpush1.xpose.msra.mxu0 0.0
    %2759 = vmatprep.subr.mxu0 0.0
    %2760 = vmatpush1.xpose.msra.mxu0 0.0
    %2761 = vmatprep.subr.mxu0 0.0
    %2762 = vmatpush1.xpose.msra.mxu0 0.0
    %2763 = vmatprep.subr.mxu0 0.0
    %2764 = vmatpush1.xpose.msra.mxu0 0.0
    %2765 = vmatprep.subr.mxu0 0.0
    %2766 = vmatpush1.xpose.msra.mxu0 0.0
    %2767 = vmatprep.subr.mxu0 0.0
    %2768 = vmatpush1.xpose.msra.mxu0 0.0
    %2769 = vmatprep.subr.mxu0 0.0
    %2770 = vmatpush1.xpose.msra.mxu0 0.0
    %2771 = vmatprep.subr.mxu0 0.0
    %2772 = vmatpush1.xpose.msra.mxu0 0.0
    %2773 = vmatprep.subr.mxu0 0.0
    %2774 = vmatpush1.xpose.msra.mxu0 0.0
    %2775 = vmatprep.subr.mxu0 0.0
    %2776 = vmatpush1.xpose.msra.mxu0 0.0
    %2777 = vmatprep.subr.mxu0 0.0
    %2778 = vmatpush1.xpose.msra.mxu0 0.0
    %2779 = vmatprep.subr.mxu0 0.0
    %2780 = vmatpush1.xpose.msra.mxu0 0.0
    %2781 = vmatprep.subr.mxu0 0.0
    %2782 = vmatpush1.xpose.msra.mxu0 0.0
    %2783 = vmatprep.subr.mxu0 0.0
    %2784 = vmatpush1.xpose.msra.mxu0 0.0
    %2785 = vmatprep.subr.mxu0 0.0
    %2786 = vmatpush1.xpose.msra.mxu0 0.0
    %2787 = vmatprep.subr.mxu0 0.0
    %2788 = vmatpush1.xpose.msra.mxu0 0.0
    %2789 = vmatprep.subr.mxu0 0.0
    %2790 = vmatpush1.xpose.msra.mxu0 0.0
    %2791 = vmatprep.subr.mxu0 0.0
    %2792 = vmatpush1.xpose.msra.mxu0 0.0
    %2793 = vmatprep.subr.mxu0 0.0
    %2794 = vmatpush1.xpose.msra.mxu0 0.0
    %2795 = vmatprep.subr.mxu0 0.0
    %2796 = vmatpush1.xpose.msra.mxu0 0.0
    %2797 = vmatprep.subr.mxu0 0.0
    %2798 = vmatpush1.xpose.msra.mxu0 0.0
    %2799 = vmatprep.subr.mxu0 0.0
    %2800 = vmatpush1.xpose.msra.mxu0 0.0
    %2801 = vmatprep.subr.mxu0 0.0
    %2802 = vmatpush1.xpose.msra.mxu0 0.0
    %2803 = vmatprep.subr.mxu0 0.0
    %2804 = vmatpush1.xpose.msra.mxu0 0.0
    %2805 = vmatprep.subr.mxu0 0.0
    %2806 = vmatpush1.xpose.msra.mxu0 0.0
    %2807 = vmatprep.subr.mxu0 0.0
    %2808 = vmatpush1.xpose.msra.mxu0 0.0
    %2809 = vmatprep.mubr.f32.mxu0 0.0
    %2810 = vmatmul.mubr.f32.gmra.mrb[0].mxu0 %v2740
    %v2811 = vpop.f32.mrb[0].mxu0
    %v2812 = vadd.f32 0.0, %v2811
    %v2813 = vpop.f32.mrb[0].mxu0
    %2814 = vdwg.mxu0
    %v2815 = vmul.f32 %v2736, 0.17677669
    %v2816 = vmul.f32 %v2812, 0.17677669
    %v2817 = vsel %vm334, %v2815, -inf
    %2818 = vmax.xlane.f32.xlu0 %v2817
    %v2819 = vpop.xlane.xlu0 %2818
    %v2820 = vsel %vm334, %v2816, -inf
    %2821 = vmax.xlane.f32.xlu0 %v2820
    %v2822 = vpop.xlane.xlu0 %2821
    %v2823 = vsub.f32 %v2815, %v2819
    %v2824 = vsub.f32 %v2816, %v2822
    %v2825 = vmul.f32 %v2823, 1.442695
    %v2826 = vpow.pop %v2825
    %v2827 = vmul.f32 %v2824, 1.442695
    %v2828 = vpow.pop %v2827
    %v2829 = vsel %vm334, %v2826, 0.0
    %2830 = vadd.xlane.f32.xlu0 %v2829
    %v2831 = vpop.xlane.xlu0 %2830
    %v2832 = vsel %vm334, %v2828, 0.0
    %2833 = vadd.xlane.f32.xlu0 %v2832
    %v2834 = vpop.xlane.xlu0 %2833
    %v2835 = vrcp.pop %v2831
    %v2836 = vrcp.pop %v2834
    %v2837 = vmul.f32 %v2826, %v2835
    %v2838 = vmul.f32 %v2828, %v2836
    %v2840 = vsel %vm334, %v2837, 0
    %2842 = vmatprep.subr.mxu0 0.0
    %2843 = vmatpush1.msra.mxu0 %v2661
    %2844 = vmatprep.subr.mxu0 0.0
    %2845 = vmatpush1.msra.mxu0 0.0
    %2846 = vmatprep.subr.mxu0 0.0
    %2847 = vmatpush1.msra.mxu0 0.0
    %2848 = vmatprep.subr.mxu0 0.0
    %2849 = vmatpush1.msra.mxu0 0.0
    %2850 = vmatprep.subr.mxu0 0.0
    %2851 = vmatpush1.msra.mxu0 0.0
    %2852 = vmatprep.subr.mxu0 0.0
    %2853 = vmatpush1.msra.mxu0 0.0
    %2854 = vmatprep.subr.mxu0 0.0
    %2855 = vmatpush1.msra.mxu0 0.0
    %2856 = vmatprep.subr.mxu0 0.0
    %2857 = vmatpush1.msra.mxu0 0.0
    %2858 = vmatprep.subr.mxu0 0.0
    %2859 = vmatpush1.msra.mxu0 0.0
    %2860 = vmatprep.subr.mxu0 0.0
    %2861 = vmatpush1.msra.mxu0 0.0
    %2862 = vmatprep.subr.mxu0 0.0
    %2863 = vmatpush1.msra.mxu0 0.0
    %2864 = vmatprep.subr.mxu0 0.0
    %2865 = vmatpush1.msra.mxu0 0.0
    %2866 = vmatprep.subr.mxu0 0.0
    %2867 = vmatpush1.msra.mxu0 0.0
    %2868 = vmatprep.subr.mxu0 0.0
    %2869 = vmatpush1.msra.mxu0 0.0
    %2870 = vmatprep.subr.mxu0 0.0
    %2871 = vmatpush1.msra.mxu0 0.0
    %2872 = vmatprep.subr.mxu0 0.0
    %2873 = vmatpush1.msra.mxu0 0.0
    %2874 = vmatprep.subr.mxu0 0.0
    %2875 = vmatpush1.msra.mxu0 0.0
    %2876 = vmatprep.subr.mxu0 0.0
    %2877 = vmatpush1.msra.mxu0 0.0
    %2878 = vmatprep.subr.mxu0 0.0
    %2879 = vmatpush1.msra.mxu0 0.0
    %2880 = vmatprep.subr.mxu0 0.0
    %2881 = vmatpush1.msra.mxu0 0.0
    %2882 = vmatprep.subr.mxu0 0.0
    %2883 = vmatpush1.msra.mxu0 0.0
    %2884 = vmatprep.subr.mxu0 0.0
    %2885 = vmatpush1.msra.mxu0 0.0
    %2886 = vmatprep.subr.mxu0 0.0
    %2887 = vmatpush1.msra.mxu0 0.0
    %2888 = vmatprep.subr.mxu0 0.0
    %2889 = vmatpush1.msra.mxu0 0.0
    %2890 = vmatprep.subr.mxu0 0.0
    %2891 = vmatpush1.msra.mxu0 0.0
    %2892 = vmatprep.subr.mxu0 0.0
    %2893 = vmatpush1.msra.mxu0 0.0
    %2894 = vmatprep.subr.mxu0 0.0
    %2895 = vmatpush1.msra.mxu0 0.0
    %2896 = vmatprep.subr.mxu0 0.0
    %2897 = vmatpush1.msra.mxu0 0.0
    %2898 = vmatprep.subr.mxu0 0.0
    %2899 = vmatpush1.msra.mxu0 0.0
    %2900 = vmatprep.subr.mxu0 0.0
    %2901 = vmatpush1.msra.mxu0 0.0
    %2902 = vmatprep.subr.mxu0 0.0
    %2903 = vmatpush1.msra.mxu0 0.0
    %2904 = vmatprep.subr.mxu0 0.0
    %2905 = vmatpush1.msra.mxu0 0.0
    %2906 = vmatprep.mubr.f32.mxu0 0.0
    %2907 = vmatmul.mubr.f32.gmra.mrb[0].mxu0 %v2840
    %v2908 = vpop.f32.mrb[0].mxu0
    %v2909 = vadd.f32 0.0, %v2908
    %v2910 = vpop.f32.mrb[0].mxu0
    %2911 = vdwg.mxu0
    %v2913 = vsel %vm334, %v2838, 0
    %2915 = vmatprep.subr.mxu0 0.0
    %2916 = vmatpush1.msra.mxu0 %v2662
    %2917 = vmatprep.subr.mxu0 0.0
    %2918 = vmatpush1.msra.mxu0 0.0
    %2919 = vmatprep.subr.mxu0 0.0
    %2920 = vmatpush1.msra.mxu0 0.0
    %2921 = vmatprep.subr.mxu0 0.0
    %2922 = vmatpush1.msra.mxu0 0.0
    %2923 = vmatprep.subr.mxu0 0.0
    %2924 = vmatpush1.msra.mxu0 0.0
    %2925 = vmatprep.subr.mxu0 0.0
    %2926 = vmatpush1.msra.mxu0 0.0
    %2927 = vmatprep.subr.mxu0 0.0
    %2928 = vmatpush1.msra.mxu0 0.0
    %2929 = vmatprep.subr.mxu0 0.0
    %2930 = vmatpush1.msra.mxu0 0.0
    %2931 = vmatprep.subr.mxu0 0.0
    %2932 = vmatpush1.msra.mxu0 0.0
    %2933 = vmatprep.subr.mxu0 0.0
    %2934 = vmatpush1.msra.mxu0 0.0
    %2935 = vmatprep.subr.mxu0 0.0
    %2936 = vmatpush1.msra.mxu0 0.0
    %2937 = vmatprep.subr.mxu0 0.0
    %2938 = vmatpush1.msra.mxu0 0.0
    %2939 = vmatprep.subr.mxu0 0.0
    %2940 = vmatpush1.msra.mxu0 0.0
    %2941 = vmatprep.subr.mxu0 0.0
    %2942 = vmatpush1.msra.mxu0 0.0
    %2943 = vmatprep.subr.mxu0 0.0
    %2944 = vmatpush1.msra.mxu0 0.0
    %2945 = vmatprep.subr.mxu0 0.0
    %2946 = vmatpush1.msra.mxu0 0.0
    %2947 = vmatprep.subr.mxu0 0.0
    %2948 = vmatpush1.msra.mxu0 0.0
    %2949 = vmatprep.subr.mxu0 0.0
    %2950 = vmatpush1.msra.mxu0 0.0
    %2951 = vmatprep.subr.mxu0 0.0
    %2952 = vmatpush1.msra.mxu0 0.0
    %2953 = vmatprep.subr.mxu0 0.0
    %2954 = vmatpush1.msra.mxu0 0.0
    %2955 = vmatprep.subr.mxu0 0.0
    %2956 = vmatpush1.msra.mxu0 0.0
    %2957 = vmatprep.subr.mxu0 0.0
    %2958 = vmatpush1.msra.mxu0 0.0
    %2959 = vmatprep.subr.mxu0 0.0
    %2960 = vmatpush1.msra.mxu0 0.0
    %2961 = vmatprep.subr.mxu0 0.0
    %2962 = vmatpush1.msra.mxu0 0.0
    %2963 = vmatprep.subr.mxu0 0.0
    %2964 = vmatpush1.msra.mxu0 0.0
    %2965 = vmatprep.subr.mxu0 0.0
    %2966 = vmatpush1.msra.mxu0 0.0
    %2967 = vmatprep.subr.mxu0 0.0
    %2968 = vmatpush1.msra.mxu0 0.0
    %2969 = vmatprep.subr.mxu0 0.0
    %2970 = vmatpush1.msra.mxu0 0.0
    %2971 = vmatprep.subr.mxu0 0.0
    %2972 = vmatpush1.msra.mxu0 0.0
    %2973 = vmatprep.subr.mxu0 0.0
    %2974 = vmatpush1.msra.mxu0 0.0
    %2975 = vmatprep.subr.mxu0 0.0
    %2976 = vmatpush1.msra.mxu0 0.0
    %2977 = vmatprep.subr.mxu0 0.0
    %2978 = vmatpush1.msra.mxu0 0.0
    %2979 = vmatprep.mubr.f32.mxu0 0.0
    %2980 = vmatmul.mubr.f32.gmra.mrb[0].mxu0 %v2913
    %v2981 = vpop.f32.mrb[0].mxu0
    %v2982 = vadd.f32 0.0, %v2981
    %v2983 = vpop.f32.mrb[0].mxu0
    %2984 = vdwg.mxu0
    %v2985 = vld [vmem:[%s4] sm:$0xff]
    %v2986 = vld [vmem:[%s4 + $0x8] sm:$0xff]
    %v2987 = vld [vmem:[%s4 + $0x10] sm:$0xff]
    %v2988 = vld [vmem:[%s4 + $0x18] sm:$0xff]
    %v2989 = vld [vmem:[%s507] sm:$0x1]
    %v2991 = vlaneseq
    %v2992 = vshrl.u32 %v2991, 7
    %v2993 = vsub.s32 0, %v2992
    %v2994 = vrot.slane %v2989, %v2993
    %v2996 = vmul.f32 %v2617, %v2994
    %v2997 = vmul.f32 %v2624, %v2994
    %v2998 = vld [vmem:[%s517] sm:$0xff]
    %v2999 = vadd.f32 %v2996, %v2998
    %v3000 = vadd.f32 %v2997, %v2998
    %v3001 = vld [vmem:[%s521] sm:$0x1]
    %v3003 = vlaneseq
    %v3004 = vshrl.u32 %v3003, 7
    %v3005 = vsub.s32 0, %v3004
    %v3006 = vrot.slane %v3001, %v3005
    %v3008 = vmul.f32 %v2617, %v3006
    %v3009 = vmul.f32 %v2624, %v3006
    %v3010 = vld [vmem:[%s531] sm:$0xff]
    %v3011 = vadd.f32 %v3008, %v3010
    %v3012 = vadd.f32 %v3009, %v3010
    %v3013 = vld [vmem:[%s535] sm:$0x1]
    %v3015 = vlaneseq
    %v3016 = vshrl.u32 %v3015, 7
    %v3017 = vsub.s32 0, %v3016
    %v3018 = vrot.slane %v3013, %v3017
    %v3020 = vmul.f32 %v2617, %v3018
    %v3021 = vmul.f32 %v2624, %v3018
    %v3022 = vld [vmem:[%s545] sm:$0xff]
    %v3023 = vadd.f32 %v3020, %v3022
    %v3024 = vadd.f32 %v3021, %v3022
    %v3026 = vsel %vm179, %v2999, 0
    %v3029 = vsel %vm179, %v3011, 0
    %3031 = vmatprep.subr.mxu0 0.0
    %3032 = vmatpush1.xpose.msra.mxu0 %v3029
    %3033 = vmatprep.subr.mxu0 0.0
    %3034 = vmatpush1.xpose.msra.mxu0 0.0
    %3035 = vmatprep.subr.mxu0 0.0
    %3036 = vmatpush1.xpose.msra.mxu0 0.0
    %3037 = vmatprep.subr.mxu0 0.0
    %3038 = vmatpush1.xpose.msra.mxu0 0.0
    %3039 = vmatprep.subr.mxu0 0.0
    %3040 = vmatpush1.xpose.msra.mxu0 0.0
    %3041 = vmatprep.subr.mxu0 0.0
    %3042 = vmatpush1.xpose.msra.mxu0 0.0
    %3043 = vmatprep.subr.mxu0 0.0
    %3044 = vmatpush1.xpose.msra.mxu0 0.0
    %3045 = vmatprep.subr.mxu0 0.0
    %3046 = vmatpush1.xpose.msra.mxu0 0.0
    %3047 = vmatprep.subr.mxu0 0.0
    %3048 = vmatpush1.xpose.msra.mxu0 0.0
    %3049 = vmatprep.subr.mxu0 0.0
    %3050 = vmatpush1.xpose.msra.mxu0 0.0
    %3051 = vmatprep.subr.mxu0 0.0
    %3052 = vmatpush1.xpose.msra.mxu0 0.0
    %3053 = vmatprep.subr.mxu0 0.0
    %3054 = vmatpush1.xpose.msra.mxu0 0.0
    %3055 = vmatprep.subr.mxu0 0.0
    %3056 = vmatpush1.xpose.msra.mxu0 0.0
    %3057 = vmatprep.subr.mxu0 0.0
    %3058 = vmatpush1.xpose.msra.mxu0 0.0
    %3059 = vmatprep.subr.mxu0 0.0
    %3060 = vmatpush1.xpose.msra.mxu0 0.0
    %3061 = vmatprep.subr.mxu0 0.0
    %3062 = vmatpush1.xpose.msra.mxu0 0.0
    %3063 = vmatprep.subr.mxu0 0.0
    %3064 = vmatpush1.xpose.msra.mxu0 0.0
    %3065 = vmatprep.subr.mxu0 0.0
    %3066 = vmatpush1.xpose.msra.mxu0 0.0
    %3067 = vmatprep.subr.mxu0 0.0
    %3068 = vmatpush1.xpose.msra.mxu0 0.0
    %3069 = vmatprep.subr.mxu0 0.0
    %3070 = vmatpush1.xpose.msra.mxu0 0.0
    %3071 = vmatprep.subr.mxu0 0.0
    %3072 = vmatpush1.xpose.msra.mxu0 0.0
    %3073 = vmatprep.subr.mxu0 0.0
    %3074 = vmatpush1.xpose.msra.mxu0 0.0
    %3075 = vmatprep.subr.mxu0 0.0
    %3076 = vmatpush1.xpose.msra.mxu0 0.0
    %3077 = vmatprep.subr.mxu0 0.0
    %3078 = vmatpush1.xpose.msra.mxu0 0.0
    %3079 = vmatprep.subr.mxu0 0.0
    %3080 = vmatpush1.xpose.msra.mxu0 0.0
    %3081 = vmatprep.subr.mxu0 0.0
    %3082 = vmatpush1.xpose.msra.mxu0 0.0
    %3083 = vmatprep.subr.mxu0 0.0
    %3084 = vmatpush1.xpose.msra.mxu0 0.0
    %3085 = vmatprep.subr.mxu0 0.0
    %3086 = vmatpush1.xpose.msra.mxu0 0.0
    %3087 = vmatprep.subr.mxu0 0.0
    %3088 = vmatpush1.xpose.msra.mxu0 0.0
    %3089 = vmatprep.subr.mxu0 0.0
    %3090 = vmatpush1.xpose.msra.mxu0 0.0
    %3091 = vmatprep.subr.mxu0 0.0
    %3092 = vmatpush1.xpose.msra.mxu0 0.0
    %3093 = vmatprep.subr.mxu0 0.0
    %3094 = vmatpush1.xpose.msra.mxu0 0.0
    %3095 = vmatprep.mubr.f32.mxu0 0.0
    %3096 = vmatmul.mubr.f32.gmra.mrb[0].mxu0 %v3026
    %v3097 = vpop.f32.mrb[0].mxu0
    %v3098 = vadd.f32 0.0, %v3097
    %v3099 = vpop.f32.mrb[0].mxu0
    %3100 = vdwg.mxu0
    %v3102 = vsel %vm179, %v3000, 0
    %v3105 = vsel %vm179, %v3012, 0
    %3107 = vmatprep.subr.mxu0 0.0
    %3108 = vmatpush1.xpose.msra.mxu0 %v3105
    %3109 = vmatprep.subr.mxu0 0.0
    %3110 = vmatpush1.xpose.msra.mxu0 0.0
    %3111 = vmatprep.subr.mxu0 0.0
    %3112 = vmatpush1.xpose.msra.mxu0 0.0
    %3113 = vmatprep.subr.mxu0 0.0
    %3114 = vmatpush1.xpose.msra.mxu0 0.0
    %3115 = vmatprep.subr.mxu0 0.0
    %3116 = vmatpush1.xpose.msra.mxu0 0.0
    %3117 = vmatprep.subr.mxu0 0.0
    %3118 = vmatpush1.xpose.msra.mxu0 0.0
    %3119 = vmatprep.subr.mxu0 0.0
    %3120 = vmatpush1.xpose.msra.mxu0 0.0
    %3121 = vmatprep.subr.mxu0 0.0
    %3122 = vmatpush1.xpose.msra.mxu0 0.0
    %3123 = vmatprep.subr.mxu0 0.0
    %3124 = vmatpush1.xpose.msra.mxu0 0.0
    %3125 = vmatprep.subr.mxu0 0.0
    %3126 = vmatpush1.xpose.msra.mxu0 0.0
    %3127 = vmatprep.subr.mxu0 0.0
    %3128 = vmatpush1.xpose.msra.mxu0 0.0
    %3129 = vmatprep.subr.mxu0 0.0
    %3130 = vmatpush1.xpose.msra.mxu0 0.0
    %3131 = vmatprep.subr.mxu0 0.0
    %3132 = vmatpush1.xpose.msra.mxu0 0.0
    %3133 = vmatprep.subr.mxu0 0.0
    %3134 = vmatpush1.xpose.msra.mxu0 0.0
    %3135 = vmatprep.subr.mxu0 0.0
    %3136 = vmatpush1.xpose.msra.mxu0 0.0
    %3137 = vmatprep.subr.mxu0 0.0
    %3138 = vmatpush1.xpose.msra.mxu0 0.0
    %3139 = vmatprep.subr.mxu0 0.0
    %3140 = vmatpush1.xpose.msra.mxu0 0.0
    %3141 = vmatprep.subr.mxu0 0.0
    %3142 = vmatpush1.xpose.msra.mxu0 0.0
    %3143 = vmatprep.subr.mxu0 0.0
    %3144 = vmatpush1.xpose.msra.mxu0 0.0
    %3145 = vmatprep.subr.mxu0 0.0
    %3146 = vmatpush1.xpose.msra.mxu0 0.0
    %3147 = vmatprep.subr.mxu0 0.0
    %3148 = vmatpush1.xpose.msra.mxu0 0.0
    %3149 = vmatprep.subr.mxu0 0.0
    %3150 = vmatpush1.xpose.msra.mxu0 0.0
    %3151 = vmatprep.subr.mxu0 0.0
    %3152 = vmatpush1.xpose.msra.mxu0 0.0
    %3153 = vmatprep.subr.mxu0 0.0
    %3154 = vmatpush1.xpose.msra.mxu0 0.0
    %3155 = vmatprep.subr.mxu0 0.0
    %3156 = vmatpush1.xpose.msra.mxu0 0.0
    %3157 = vmatprep.subr.mxu0 0.0
    %3158 = vmatpush1.xpose.msra.mxu0 0.0
    %3159 = vmatprep.subr.mxu0 0.0
    %3160 = vmatpush1.xpose.msra.mxu0 0.0
    %3161 = vmatprep.subr.mxu0 0.0
    %3162 = vmatpush1.xpose.msra.mxu0 0.0
    %3163 = vmatprep.subr.mxu0 0.0
    %3164 = vmatpush1.xpose.msra.mxu0 0.0
    %3165 = vmatprep.subr.mxu0 0.0
    %3166 = vmatpush1.xpose.msra.mxu0 0.0
    %3167 = vmatprep.subr.mxu0 0.0
    %3168 = vmatpush1.xpose.msra.mxu0 0.0
    %3169 = vmatprep.subr.mxu0 0.0
    %3170 = vmatpush1.xpose.msra.mxu0 0.0
    %3171 = vmatprep.mubr.f32.mxu0 0.0
    %3172 = vmatmul.mubr.f32.gmra.mrb[0].mxu0 %v3102
    %v3173 = vpop.f32.mrb[0].mxu0
    %v3174 = vadd.f32 0.0, %v3173
    %v3175 = vpop.f32.mrb[0].mxu0
    %3176 = vdwg.mxu0
    %v3177 = vmul.f32 %v3098, 0.17677669
    %v3178 = vmul.f32 %v3174, 0.17677669
    %v3179 = vsel %vm334, %v3177, -inf
    %3180 = vmax.xlane.f32.xlu0 %v3179
    %v3181 = vpop.xlane.xlu0 %3180
    %v3182 = vsel %vm334, %v3178, -inf
    %3183 = vmax.xlane.f32.xlu0 %v3182
    %v3184 = vpop.xlane.xlu0 %3183
    %v3185 = vsub.f32 %v3177, %v3181
    %v3186 = vsub.f32 %v3178, %v3184
    %v3187 = vmul.f32 %v3185, 1.442695
    %v3188 = vpow.pop %v3187
    %v3189 = vmul.f32 %v3186, 1.442695
    %v3190 = vpow.pop %v3189
    %v3191 = vsel %vm334, %v3188, 0.0
    %3192 = vadd.xlane.f32.xlu0 %v3191
    %v3193 = vpop.xlane.xlu0 %3192
    %v3194 = vsel %vm334, %v3190, 0.0
    %3195 = vadd.xlane.f32.xlu0 %v3194
    %v3196 = vpop.xlane.xlu0 %3195
    %v3197 = vrcp.pop %v3193
    %v3198 = vrcp.pop %v3196
    %v3199 = vmul.f32 %v3188, %v3197
    %v3200 = vmul.f32 %v3190, %v3198
    %v3202 = vsel %vm334, %v3199, 0
    %3204 = vmatprep.subr.mxu0 0.0
    %3205 = vmatpush1.msra.mxu0 %v3023
    %3206 = vmatprep.subr.mxu0 0.0
    %3207 = vmatpush1.msra.mxu0 0.0
    %3208 = vmatprep.subr.mxu0 0.0
    %3209 = vmatpush1.msra.mxu0 0.0
    %3210 = vmatprep.subr.mxu0 0.0
    %3211 = vmatpush1.msra.mxu0 0.0
    %3212 = vmatprep.subr.mxu0 0.0
    %3213 = vmatpush1.msra.mxu0 0.0
    %3214 = vmatprep.subr.mxu0 0.0
    %3215 = vmatpush1.msra.mxu0 0.0
    %3216 = vmatprep.subr.mxu0 0.0
    %3217 = vmatpush1.msra.mxu0 0.0
    %3218 = vmatprep.subr.mxu0 0.0
    %3219 = vmatpush1.msra.mxu0 0.0
    %3220 = vmatprep.subr.mxu0 0.0
    %3221 = vmatpush1.msra.mxu0 0.0
    %3222 = vmatprep.subr.mxu0 0.0
    %3223 = vmatpush1.msra.mxu0 0.0
    %3224 = vmatprep.subr.mxu0 0.0
    %3225 = vmatpush1.msra.mxu0 0.0
    %3226 = vmatprep.subr.mxu0 0.0
    %3227 = vmatpush1.msra.mxu0 0.0
    %3228 = vmatprep.subr.mxu0 0.0
    %3229 = vmatpush1.msra.mxu0 0.0
    %3230 = vmatprep.subr.mxu0 0.0
    %3231 = vmatpush1.msra.mxu0 0.0
    %3232 = vmatprep.subr.mxu0 0.0
    %3233 = vmatpush1.msra.mxu0 0.0
    %3234 = vmatprep.subr.mxu0 0.0
    %3235 = vmatpush1.msra.mxu0 0.0
    %3236 = vmatprep.subr.mxu0 0.0
    %3237 = vmatpush1.msra.mxu0 0.0
    %3238 = vmatprep.subr.mxu0 0.0
    %3239 = vmatpush1.msra.mxu0 0.0
    %3240 = vmatprep.subr.mxu0 0.0
    %3241 = vmatpush1.msra.mxu0 0.0
    %3242 = vmatprep.subr.mxu0 0.0
    %3243 = vmatpush1.msra.mxu0 0.0
    %3244 = vmatprep.subr.mxu0 0.0
    %3245 = vmatpush1.msra.mxu0 0.0
    %3246 = vmatprep.subr.mxu0 0.0
    %3247 = vmatpush1.msra.mxu0 0.0
    %3248 = vmatprep.subr.mxu0 0.0
    %3249 = vmatpush1.msra.mxu0 0.0
    %3250 = vmatprep.subr.mxu0 0.0
    %3251 = vmatpush1.msra.mxu0 0.0
    %3252 = vmatprep.subr.mxu0 0.0
    %3253 = vmatpush1.msra.mxu0 0.0
    %3254 = vmatprep.subr.mxu0 0.0
    %3255 = vmatpush1.msra.mxu0 0.0
    %3256 = vmatprep.subr.mxu0 0.0
    %3257 = vmatpush1.msra.mxu0 0.0
    %3258 = vmatprep.subr.mxu0 0.0
    %3259 = vmatpush1.msra.mxu0 0.0
    %3260 = vmatprep.subr.mxu0 0.0
    %3261 = vmatpush1.msra.mxu0 0.0
    %3262 = vmatprep.subr.mxu0 0.0
    %3263 = vmatpush1.msra.mxu0 0.0
    %3264 = vmatprep.subr.mxu0 0.0
    %3265 = vmatpush1.msra.mxu0 0.0
    %3266 = vmatprep.subr.mxu0 0.0
    %3267 = vmatpush1.msra.mxu0 0.0
    %3268 = vmatprep.mubr.f32.mxu0 0.0
    %3269 = vmatmul.mubr.f32.gmra.mrb[0].mxu0 %v3202
    %v3270 = vpop.f32.mrb[0].mxu0
    %v3271 = vadd.f32 0.0, %v3270
    %v3272 = vpop.f32.mrb[0].mxu0
    %3273 = vdwg.mxu0
    %v3275 = vsel %vm334, %v3200, 0
    %3277 = vmatprep.subr.mxu0 0.0
    %3278 = vmatpush1.msra.mxu0 %v3024
    %3279 = vmatprep.subr.mxu0 0.0
    %3280 = vmatpush1.msra.mxu0 0.0
    %3281 = vmatprep.subr.mxu0 0.0
    %3282 = vmatpush1.msra.mxu0 0.0
    %3283 = vmatprep.subr.mxu0 0.0
    %3284 = vmatpush1.msra.mxu0 0.0
    %3285 = vmatprep.subr.mxu0 0.0
    %3286 = vmatpush1.msra.mxu0 0.0
    %3287 = vmatprep.subr.mxu0 0.0
    %3288 = vmatpush1.msra.mxu0 0.0
    %3289 = vmatprep.subr.mxu0 0.0
    %3290 = vmatpush1.msra.mxu0 0.0
    %3291 = vmatprep.subr.mxu0 0.0
    %3292 = vmatpush1.msra.mxu0 0.0
    %3293 = vmatprep.subr.mxu0 0.0
    %3294 = vmatpush1.msra.mxu0 0.0
    %3295 = vmatprep.subr.mxu0 0.0
    %3296 = vmatpush1.msra.mxu0 0.0
    %3297 = vmatprep.subr.mxu0 0.0
    %3298 = vmatpush1.msra.mxu0 0.0
    %3299 = vmatprep.subr.mxu0 0.0
    %3300 = vmatpush1.msra.mxu0 0.0
    %3301 = vmatprep.subr.mxu0 0.0
    %3302 = vmatpush1.msra.mxu0 0.0
    %3303 = vmatprep.subr.mxu0 0.0
    %3304 = vmatpush1.msra.mxu0 0.0
    %3305 = vmatprep.subr.mxu0 0.0
    %3306 = vmatpush1.msra.mxu0 0.0
    %3307 = vmatprep.subr.mxu0 0.0
    %3308 = vmatpush1.msra.mxu0 0.0
    %3309 = vmatprep.subr.mxu0 0.0
    %3310 = vmatpush1.msra.mxu0 0.0
    %3311 = vmatprep.subr.mxu0 0.0
    %3312 = vmatpush1.msra.mxu0 0.0
    %3313 = vmatprep.subr.mxu0 0.0
    %3314 = vmatpush1.msra.mxu0 0.0
    %3315 = vmatprep.subr.mxu0 0.0
    %3316 = vmatpush1.msra.mxu0 0.0
    %3317 = vmatprep.subr.mxu0 0.0
    %3318 = vmatpush1.msra.mxu0 0.0
    %3319 = vmatprep.subr.mxu0 0.0
    %3320 = vmatpush1.msra.mxu0 0.0
    %3321 = vmatprep.subr.mxu0 0.0
    %3322 = vmatpush1.msra.mxu0 0.0
    %3323 = vmatprep.subr.mxu0 0.0
    %3324 = vmatpush1.msra.mxu0 0.0
    %3325 = vmatprep.subr.mxu0 0.0
    %3326 = vmatpush1.msra.mxu0 0.0
    %3327 = vmatprep.subr.mxu0 0.0
    %3328 = vmatpush1.msra.mxu0 0.0
    %3329 = vmatprep.subr.mxu0 0.0
    %3330 = vmatpush1.msra.mxu0 0.0
    %3331 = vmatprep.subr.mxu0 0.0
    %3332 = vmatpush1.msra.mxu0 0.0
    %3333 = vmatprep.subr.mxu0 0.0
    %3334 = vmatpush1.msra.mxu0 0.0
    %3335 = vmatprep.subr.mxu0 0.0
    %3336 = vmatpush1.msra.mxu0 0.0
    %3337 = vmatprep.subr.mxu0 0.0
    %3338 = vmatpush1.msra.mxu0 0.0
    %3339 = vmatprep.subr.mxu0 0.0
    %3340 = vmatpush1.msra.mxu0 0.0
    %3341 = vmatprep.mubr.f32.mxu0 0.0
    %3342 = vmatmul.mubr.f32.gmra.mrb[0].mxu0 %v3275
    %v3343 = vpop.f32.mrb[0].mxu0
    %v3344 = vadd.f32 0.0, %v3343
    %v3345 = vpop.f32.mrb[0].mxu0
    %3346 = vdwg.mxu0
    %v3347 = vld [vmem:[%s871] sm:$0xff]
    %v3348 = vld [vmem:[%s871 + $0x8] sm:$0xff]
    %v3349 = vld [vmem:[%s871 + $0x10] sm:$0xff]
    %v3350 = vld [vmem:[%s871 + $0x18] sm:$0xff]
    %v3352 = vsel %vm179, %v3271, 0
    %v3355 = vsel %vm179, %v3344, 0
    %3357 = vmatprep.subr.mxu0 0.0
    %3358 = vmatpush1.msra.mxu0 %v3347
    %3359 = vmatprep.subr.mxu0 0.0
    %3360 = vmatpush1.msra.mxu0 %v3348
    %3361 = vmatprep.subr.mxu0 0.0
    %3362 = vmatpush1.msra.mxu0 %v3349
    %3363 = vmatprep.subr.mxu0 0.0
    %3364 = vmatpush1.msra.mxu0 %v3350
    %3365 = vmatprep.subr.mxu0 0.0
    %3366 = vmatpush1.msra.mxu0 0.0
    %3367 = vmatprep.subr.mxu0 0.0
    %3368 = vmatpush1.msra.mxu0 0.0
    %3369 = vmatprep.subr.mxu0 0.0
    %3370 = vmatpush1.msra.mxu0 0.0
    %3371 = vmatprep.subr.mxu0 0.0
    %3372 = vmatpush1.msra.mxu0 0.0
    %3373 = vmatprep.subr.mxu0 0.0
    %3374 = vmatpush1.msra.mxu0 0.0
    %3375 = vmatprep.subr.mxu0 0.0
    %3376 = vmatpush1.msra.mxu0 0.0
    %3377 = vmatprep.subr.mxu0 0.0
    %3378 = vmatpush1.msra.mxu0 0.0
    %3379 = vmatprep.subr.mxu0 0.0
    %3380 = vmatpush1.msra.mxu0 0.0
    %3381 = vmatprep.subr.mxu0 0.0
    %3382 = vmatpush1.msra.mxu0 0.0
    %3383 = vmatprep.subr.mxu0 0.0
    %3384 = vmatpush1.msra.mxu0 0.0
    %3385 = vmatprep.subr.mxu0 0.0
    %3386 = vmatpush1.msra.mxu0 0.0
    %3387 = vmatprep.subr.mxu0 0.0
    %3388 = vmatpush1.msra.mxu0 0.0
    %3389 = vmatprep.subr.mxu0 0.0
    %3390 = vmatpush1.msra.mxu0 0.0
    %3391 = vmatprep.subr.mxu0 0.0
    %3392 = vmatpush1.msra.mxu0 0.0
    %3393 = vmatprep.subr.mxu0 0.0
    %3394 = vmatpush1.msra.mxu0 0.0
    %3395 = vmatprep.subr.mxu0 0.0
    %3396 = vmatpush1.msra.mxu0 0.0
    %3397 = vmatprep.subr.mxu0 0.0
    %3398 = vmatpush1.msra.mxu0 0.0
    %3399 = vmatprep.subr.mxu0 0.0
    %3400 = vmatpush1.msra.mxu0 0.0
    %3401 = vmatprep.subr.mxu0 0.0
    %3402 = vmatpush1.msra.mxu0 0.0
    %3403 = vmatprep.subr.mxu0 0.0
    %3404 = vmatpush1.msra.mxu0 0.0
    %3405 = vmatprep.subr.mxu0 0.0
    %3406 = vmatpush1.msra.mxu0 0.0
    %3407 = vmatprep.subr.mxu0 0.0
    %3408 = vmatpush1.msra.mxu0 0.0
    %3409 = vmatprep.subr.mxu0 0.0
    %3410 = vmatpush1.msra.mxu0 0.0
    %3411 = vmatprep.subr.mxu0 0.0
    %3412 = vmatpush1.msra.mxu0 0.0
    %3413 = vmatprep.subr.mxu0 0.0
    %3414 = vmatpush1.msra.mxu0 0.0
    %3415 = vmatprep.subr.mxu0 0.0
    %3416 = vmatpush1.msra.mxu0 0.0
    %3417 = vmatprep.subr.mxu0 0.0
    %3418 = vmatpush1.msra.mxu0 0.0
    %3419 = vmatprep.subr.mxu0 0.0
    %3420 = vmatpush1.msra.mxu0 0.0
    %3421 = vmatprep.mubr.f32.mxu0 0.0
    %3422 = vmatmul.mubr.f32.gmra.mrb[0].mxu0 %v3352
    %v3423 = vpop.f32.mrb[0].mxu0
    %v3424 = vadd.f32 0.0, %v3423
    %v3425 = vpop.f32.mrb[0].mxu0
    %3426 = vmatprep.mubr.f32.mxu0 0.0
    %3427 = vmatmul.mubr.f32.gmra.mrb[0].mxu0 %v3355
    %v3428 = vpop.f32.mrb[0].mxu0
    %v3429 = vadd.f32 0.0, %v3428
    %v3430 = vpop.f32.mrb[0].mxu0
    %3431 = vdwg.mxu0
    %v3433 = vsel %vm179, %v2909, 0
    %v3436 = vsel %vm179, %v2982, 0
    %3438 = vmatprep.subr.mxu0 0.0
    %3439 = vmatpush1.msra.mxu0 %v2985
    %3440 = vmatprep.subr.mxu0 0.0
    %3441 = vmatpush1.msra.mxu0 %v2986
    %3442 = vmatprep.subr.mxu0 0.0
    %3443 = vmatpush1.msra.mxu0 %v2987
    %3444 = vmatprep.subr.mxu0 0.0
    %3445 = vmatpush1.msra.mxu0 %v2988
    %3446 = vmatprep.subr.mxu0 0.0
    %3447 = vmatpush1.msra.mxu0 0.0
    %3448 = vmatprep.subr.mxu0 0.0
    %3449 = vmatpush1.msra.mxu0 0.0
    %3450 = vmatprep.subr.mxu0 0.0
    %3451 = vmatpush1.msra.mxu0 0.0
    %3452 = vmatprep.subr.mxu0 0.0
    %3453 = vmatpush1.msra.mxu0 0.0
    %3454 = vmatprep.subr.mxu0 0.0
    %3455 = vmatpush1.msra.mxu0 0.0
    %3456 = vmatprep.subr.mxu0 0.0
    %3457 = vmatpush1.msra.mxu0 0.0
    %3458 = vmatprep.subr.mxu0 0.0
    %3459 = vmatpush1.msra.mxu0 0.0
    %3460 = vmatprep.subr.mxu0 0.0
    %3461 = vmatpush1.msra.mxu0 0.0
    %3462 = vmatprep.subr.mxu0 0.0
    %3463 = vmatpush1.msra.mxu0 0.0
    %3464 = vmatprep.subr.mxu0 0.0
    %3465 = vmatpush1.msra.mxu0 0.0
    %3466 = vmatprep.subr.mxu0 0.0
    %3467 = vmatpush1.msra.mxu0 0.0
    %3468 = vmatprep.subr.mxu0 0.0
    %3469 = vmatpush1.msra.mxu0 0.0
    %3470 = vmatprep.subr.mxu0 0.0
    %3471 = vmatpush1.msra.mxu0 0.0
    %3472 = vmatprep.subr.mxu0 0.0
    %3473 = vmatpush1.msra.mxu0 0.0
    %3474 = vmatprep.subr.mxu0 0.0
    %3475 = vmatpush1.msra.mxu0 0.0
    %3476 = vmatprep.subr.mxu0 0.0
    %3477 = vmatpush1.msra.mxu0 0.0
    %3478 = vmatprep.subr.mxu0 0.0
    %3479 = vmatpush1.msra.mxu0 0.0
    %3480 = vmatprep.subr.mxu0 0.0
    %3481 = vmatpush1.msra.mxu0 0.0
    %3482 = vmatprep.subr.mxu0 0.0
    %3483 = vmatpush1.msra.mxu0 0.0
    %3484 = vmatprep.subr.mxu0 0.0
    %3485 = vmatpush1.msra.mxu0 0.0
    %3486 = vmatprep.subr.mxu0 0.0
    %3487 = vmatpush1.msra.mxu0 0.0
    %3488 = vmatprep.subr.mxu0 0.0
    %3489 = vmatpush1.msra.mxu0 0.0
    %3490 = vmatprep.subr.mxu0 0.0
    %3491 = vmatpush1.msra.mxu0 0.0
    %3492 = vmatprep.subr.mxu0 0.0
    %3493 = vmatpush1.msra.mxu0 0.0
    %3494 = vmatprep.subr.mxu0 0.0
    %3495 = vmatpush1.msra.mxu0 0.0
    %3496 = vmatprep.subr.mxu0 0.0
    %3497 = vmatpush1.msra.mxu0 0.0
    %3498 = vmatprep.subr.mxu0 0.0
    %3499 = vmatpush1.msra.mxu0 0.0
    %3500 = vmatprep.subr.mxu0 0.0
    %3501 = vmatpush1.msra.mxu0 0.0
    %3502 = vmatprep.mubr.f32.mxu0 0.0
    %3503 = vmatmul.mubr.f32.gmra.mrb[0].mxu0 %v3433
    %v3504 = vpop.f32.mrb[0].mxu0
    %v3505 = vadd.f32 %v3424, %v3504
    %v3506 = vpop.f32.mrb[0].mxu0
    %3507 = vmatprep.mubr.f32.mxu0 0.0
    %3508 = vmatmul.mubr.f32.gmra.mrb[0].mxu0 %v3436
    %v3509 = vpop.f32.mrb[0].mxu0
    %v3510 = vadd.f32 %v3429, %v3509
    %v3511 = vpop.f32.mrb[0].mxu0
    %3512 = vdwg.mxu0
    %v3513 = vadd.f32 %v3505, %v1042
    %v3514 = vadd.f32 %v3510, %v1042
    %v3515 = vadd.f32 %v2625, %v3513
    %v3516 = vadd.f32 %v2626, %v3514
    %v3517 = vsel %vm179, %v3515, 0.0
    %3518 = vadd.xlane.f32.xlu0 %v3517
    %v3519 = vpop.xlane.xlu0 %3518
    %v3520 = vsel %vm179, %v3516, 0.0
    %3521 = vadd.xlane.f32.xlu0 %v3520
    %v3522 = vpop.xlane.xlu0 %3521
    %v3523 = vmul.f32 %v3519, %v1054
    %v3524 = vmul.f32 %v3522, %v1054
    %v3525 = vsub.f32 %v3515, %v3523
    %v3526 = vsub.f32 %v3516, %v3524
    %v3527 = vmul.f32 %v3525, %v3525
    %v3528 = vmul.f32 %v3526, %v3526
    %v3529 = vsel %vm179, %v3527, 0.0
    %3530 = vadd.xlane.f32.xlu0 %v3529
    %v3531 = vpop.xlane.xlu0 %3530
    %v3532 = vsel %vm179, %v3528, 0.0
    %3533 = vadd.xlane.f32.xlu0 %v3532
    %v3534 = vpop.xlane.xlu0 %3533
    %v3535 = vmul.f32 %v3531, %v1054
    %v3536 = vmul.f32 %v3534, %v1054
    %v3537 = vadd.f32 %v3535, 1e-05
    %v3538 = vadd.f32 %v3536, 1e-05
    %v3539 = vrsqrt.pop %v3537
    %v3540 = vrsqrt.pop %v3538
    %v3541 = vmul.f32 %v3525, %v3539
    %v3542 = vmul.f32 %v3526, %v3540
    %v3543 = vmul.f32 %v3541, %v1079
    %v3544 = vmul.f32 %v3542, %v1079
    %v3545 = vadd.f32 %v3543, %v1087
    %v3546 = vadd.f32 %v3544, %v1087
    %v3547 = vld [vmem:[#allocation2] sm:$0xff]
    %v3548 = vld [vmem:[#allocation2 + $0x8] sm:$0xff]
    %v3549 = vld [vmem:[#allocation2 + $0x10] sm:$0xff]
    %v3550 = vld [vmem:[#allocation2 + $0x18] sm:$0xff]
    %v3551 = vld [vmem:[#allocation2 + $0x20] sm:$0xff]
    %v3552 = vld [vmem:[#allocation2 + $0x28] sm:$0xff]
    %v3553 = vld [vmem:[#allocation2 + $0x30] sm:$0xff]
    %v3554 = vld [vmem:[#allocation2 + $0x38] sm:$0xff]
    %v3555 = vld [vmem:[#allocation2 + $0x40] sm:$0xff]
    %v3556 = vld [vmem:[#allocation2 + $0x48] sm:$0xff]
    %v3557 = vld [vmem:[#allocation2 + $0x50] sm:$0xff]
    %v3558 = vld [vmem:[#allocation2 + $0x58] sm:$0xff]
    %v3559 = vld [vmem:[#allocation2 + $0x60] sm:$0xff]
    %v3560 = vld [vmem:[#allocation2 + $0x68] sm:$0xff]
    %v3561 = vld [vmem:[#allocation2 + $0x70] sm:$0xff]
    %v3562 = vld [vmem:[#allocation2 + $0x78] sm:$0xff]
    %v3563 = vld [vmem:[%s1107] sm:$0xff]
    %v3564 = vld [vmem:[%s1107 + $0x8] sm:$0xff]
    %v3565 = vld [vmem:[%s1107 + $0x10] sm:$0xff]
    %v3566 = vld [vmem:[%s1107 + $0x18] sm:$0xff]
    %v3567 = vld [vmem:[%s1107 + $0x20] sm:$0xff]
    %v3568 = vld [vmem:[%s1107 + $0x28] sm:$0xff]
    %v3569 = vld [vmem:[%s1107 + $0x30] sm:$0xff]
    %v3570 = vld [vmem:[%s1107 + $0x38] sm:$0xff]
    %v3571 = vld [vmem:[%s1107 + $0x40] sm:$0xff]
    %v3572 = vld [vmem:[%s1107 + $0x48] sm:$0xff]
    %v3573 = vld [vmem:[%s1107 + $0x50] sm:$0xff]
    %v3574 = vld [vmem:[%s1107 + $0x58] sm:$0xff]
    %v3575 = vld [vmem:[%s1107 + $0x60] sm:$0xff]
    %v3576 = vld [vmem:[%s1107 + $0x68] sm:$0xff]
    %v3577 = vld [vmem:[%s1107 + $0x70] sm:$0xff]
    %v3578 = vld [vmem:[%s1107 + $0x78] sm:$0xff]
    %v3581 = vrot.slane %v3545, 1
    %v3582 = vsel %vm1127, %v3546, %v3581
    %v3583 = vsel %vm179, %v3582, 0
    %3585 = vmatprep.subr.mxu0 %v3564
    %3586 = vmatpush1.msra.mxu0 %v3563
    %3587 = vmatprep.subr.mxu0 %v3568
    %3588 = vmatpush1.msra.mxu0 %v3567
    %3589 = vmatprep.subr.mxu0 %v3572
    %3590 = vmatpush1.msra.mxu0 %v3571
    %3591 = vmatprep.subr.mxu0 %v3576
    %3592 = vmatpush1.msra.mxu0 %v3575
    %3593 = vmatprep.subr.mxu0 0.0
    %3594 = vmatpush1.msra.mxu0 0.0
    %3595 = vmatprep.subr.mxu0 0.0
    %3596 = vmatpush1.msra.mxu0 0.0
    %3597 = vmatprep.subr.mxu0 0.0
    %3598 = vmatpush1.msra.mxu0 0.0
    %3599 = vmatprep.subr.mxu0 0.0
    %3600 = vmatpush1.msra.mxu0 0.0
    %3601 = vmatprep.subr.mxu0 0.0
    %3602 = vmatpush1.msra.mxu0 0.0
    %3603 = vmatprep.subr.mxu0 0.0
    %3604 = vmatpush1.msra.mxu0 0.0
    %3605 = vmatprep.subr.mxu0 0.0
    %3606 = vmatpush1.msra.mxu0 0.0
    %3607 = vmatprep.subr.mxu0 0.0
    %3608 = vmatpush1.msra.mxu0 0.0
    %3609 = vmatprep.subr.mxu0 0.0
    %3610 = vmatpush1.msra.mxu0 0.0
    %3611 = vmatprep.subr.mxu0 0.0
    %3612 = vmatpush1.msra.mxu0 0.0
    %3613 = vmatprep.subr.mxu0 0.0
    %3614 = vmatpush1.msra.mxu0 0.0
    %3615 = vmatprep.subr.mxu0 0.0
    %3616 = vmatpush1.msra.mxu0 0.0
    %3617 = vmatprep.subr.mxu0 0.0
    %3618 = vmatpush1.msra.mxu0 0.0
    %3619 = vmatprep.subr.mxu0 0.0
    %3620 = vmatpush1.msra.mxu0 0.0
    %3621 = vmatprep.subr.mxu0 0.0
    %3622 = vmatpush1.msra.mxu0 0.0
    %3623 = vmatprep.subr.mxu0 0.0
    %3624 = vmatpush1.msra.mxu0 0.0
    %3625 = vmatprep.subr.mxu0 0.0
    %3626 = vmatpush1.msra.mxu0 0.0
    %3627 = vmatprep.subr.mxu0 0.0
    %3628 = vmatpush1.msra.mxu0 0.0
    %3629 = vmatprep.subr.mxu0 0.0
    %3630 = vmatpush1.msra.mxu0 0.0
    %3631 = vmatprep.subr.mxu0 0.0
    %3632 = vmatpush1.msra.mxu0 0.0
    %3633 = vmatprep.subr.mxu0 0.0
    %3634 = vmatpush1.msra.mxu0 0.0
    %3635 = vmatprep.subr.mxu0 0.0
    %3636 = vmatpush1.msra.mxu0 0.0
    %3637 = vmatprep.subr.mxu0 0.0
    %3638 = vmatpush1.msra.mxu0 0.0
    %3639 = vmatprep.subr.mxu0 0.0
    %3640 = vmatpush1.msra.mxu0 0.0
    %3641 = vmatprep.subr.mxu0 0.0
    %3642 = vmatpush1.msra.mxu0 0.0
    %3643 = vmatprep.subr.mxu0 0.0
    %3644 = vmatpush1.msra.mxu0 0.0
    %3645 = vmatprep.subr.mxu0 0.0
    %3646 = vmatpush1.msra.mxu0 0.0
    %3647 = vmatprep.subr.mxu0 0.0
    %3648 = vmatpush1.msra.mxu0 0.0
    %3649 = vmatprep.mubr.f32.mxu0 0.0
    %3650 = vmatmul.mubr.f32.gmra.mrb[0].mxu0 %v3583
    %v3651 = vpop.f32.mrb[0].mxu0
    %v3652 = vadd.f32 0.0, %v3651
    %v3653 = vpop.f32.mrb[0].mxu0
    %v3654 = vadd.f32 0.0, %v3653
    %3655 = vdwg.mxu0
    %3656 = vmatprep.subr.mxu0 %v3566
    %3657 = vmatpush1.msra.mxu0 %v3565
    %3658 = vmatprep.subr.mxu0 %v3570
    %3659 = vmatpush1.msra.mxu0 %v3569
    %3660 = vmatprep.subr.mxu0 %v3574
    %3661 = vmatpush1.msra.mxu0 %v3573
    %3662 = vmatprep.subr.mxu0 %v3578
    %3663 = vmatpush1.msra.mxu0 %v3577
    %3664 = vmatprep.subr.mxu0 0.0
    %3665 = vmatpush1.msra.mxu0 0.0
    %3666 = vmatprep.subr.mxu0 0.0
    %3667 = vmatpush1.msra.mxu0 0.0
    %3668 = vmatprep.subr.mxu0 0.0
    %3669 = vmatpush1.msra.mxu0 0.0
    %3670 = vmatprep.subr.mxu0 0.0
    %3671 = vmatpush1.msra.mxu0 0.0
    %3672 = vmatprep.subr.mxu0 0.0
    %3673 = vmatpush1.msra.mxu0 0.0
    %3674 = vmatprep.subr.mxu0 0.0
    %3675 = vmatpush1.msra.mxu0 0.0
    %3676 = vmatprep.subr.mxu0 0.0
    %3677 = vmatpush1.msra.mxu0 0.0
    %3678 = vmatprep.subr.mxu0 0.0
    %3679 = vmatpush1.msra.mxu0 0.0
    %3680 = vmatprep.subr.mxu0 0.0
    %3681 = vmatpush1.msra.mxu0 0.0
    %3682 = vmatprep.subr.mxu0 0.0
    %3683 = vmatpush1.msra.mxu0 0.0
    %3684 = vmatprep.subr.mxu0 0.0
    %3685 = vmatpush1.msra.mxu0 0.0
    %3686 = vmatprep.subr.mxu0 0.0
    %3687 = vmatpush1.msra.mxu0 0.0
    %3688 = vmatprep.subr.mxu0 0.0
    %3689 = vmatpush1.msra.mxu0 0.0
    %3690 = vmatprep.subr.mxu0 0.0
    %3691 = vmatpush1.msra.mxu0 0.0
    %3692 = vmatprep.subr.mxu0 0.0
    %3693 = vmatpush1.msra.mxu0 0.0
    %3694 = vmatprep.subr.mxu0 0.0
    %3695 = vmatpush1.msra.mxu0 0.0
    %3696 = vmatprep.subr.mxu0 0.0
    %3697 = vmatpush1.msra.mxu0 0.0
    %3698 = vmatprep.subr.mxu0 0.0
    %3699 = vmatpush1.msra.mxu0 0.0
    %3700 = vmatprep.subr.mxu0 0.0
    %3701 = vmatpush1.msra.mxu0 0.0
    %3702 = vmatprep.subr.mxu0 0.0
    %3703 = vmatpush1.msra.mxu0 0.0
    %3704 = vmatprep.subr.mxu0 0.0
    %3705 = vmatpush1.msra.mxu0 0.0
    %3706 = vmatprep.subr.mxu0 0.0
    %3707 = vmatpush1.msra.mxu0 0.0
    %3708 = vmatprep.subr.mxu0 0.0
    %3709 = vmatpush1.msra.mxu0 0.0
    %3710 = vmatprep.subr.mxu0 0.0
    %3711 = vmatpush1.msra.mxu0 0.0
    %3712 = vmatprep.subr.mxu0 0.0
    %3713 = vmatpush1.msra.mxu0 0.0
    %3714 = vmatprep.subr.mxu0 0.0
    %3715 = vmatpush1.msra.mxu0 0.0
    %3716 = vmatprep.subr.mxu0 0.0
    %3717 = vmatpush1.msra.mxu0 0.0
    %3718 = vmatprep.subr.mxu0 0.0
    %3719 = vmatpush1.msra.mxu0 0.0
    %3720 = vmatprep.mubr.f32.mxu0 0.0
    %3721 = vmatmul.mubr.f32.gmra.mrb[0].mxu0 %v3583
    %v3722 = vpop.f32.mrb[0].mxu0
    %v3723 = vadd.f32 0.0, %v3722
    %v3724 = vpop.f32.mrb[0].mxu0
    %v3725 = vadd.f32 0.0, %v3724
    %3726 = vdwg.mxu0
    %v3727 = vrot.slane %v3546, 7
    %v3728 = vsel %vm1127, %v3727, %v3545
    %v3729 = vsel %vm179, %v3728, 0
    %3731 = vmatprep.subr.mxu0 %v3548
    %3732 = vmatpush1.msra.mxu0 %v3547
    %3733 = vmatprep.subr.mxu0 %v3552
    %3734 = vmatpush1.msra.mxu0 %v3551
    %3735 = vmatprep.subr.mxu0 %v3556
    %3736 = vmatpush1.msra.mxu0 %v3555
    %3737 = vmatprep.subr.mxu0 %v3560
    %3738 = vmatpush1.msra.mxu0 %v3559
    %3739 = vmatprep.subr.mxu0 0.0
    %3740 = vmatpush1.msra.mxu0 0.0
    %3741 = vmatprep.subr.mxu0 0.0
    %3742 = vmatpush1.msra.mxu0 0.0
    %3743 = vmatprep.subr.mxu0 0.0
    %3744 = vmatpush1.msra.mxu0 0.0
    %3745 = vmatprep.subr.mxu0 0.0
    %3746 = vmatpush1.msra.mxu0 0.0
    %3747 = vmatprep.subr.mxu0 0.0
    %3748 = vmatpush1.msra.mxu0 0.0
    %3749 = vmatprep.subr.mxu0 0.0
    %3750 = vmatpush1.msra.mxu0 0.0
    %3751 = vmatprep.subr.mxu0 0.0
    %3752 = vmatpush1.msra.mxu0 0.0
    %3753 = vmatprep.subr.mxu0 0.0
    %3754 = vmatpush1.msra.mxu0 0.0
    %3755 = vmatprep.subr.mxu0 0.0
    %3756 = vmatpush1.msra.mxu0 0.0
    %3757 = vmatprep.subr.mxu0 0.0
    %3758 = vmatpush1.msra.mxu0 0.0
    %3759 = vmatprep.subr.mxu0 0.0
    %3760 = vmatpush1.msra.mxu0 0.0
    %3761 = vmatprep.subr.mxu0 0.0
    %3762 = vmatpush1.msra.mxu0 0.0
    %3763 = vmatprep.subr.mxu0 0.0
    %3764 = vmatpush1.msra.mxu0 0.0
    %3765 = vmatprep.subr.mxu0 0.0
    %3766 = vmatpush1.msra.mxu0 0.0
    %3767 = vmatprep.subr.mxu0 0.0
    %3768 = vmatpush1.msra.mxu0 0.0
    %3769 = vmatprep.subr.mxu0 0.0
    %3770 = vmatpush1.msra.mxu0 0.0
    %3771 = vmatprep.subr.mxu0 0.0
    %3772 = vmatpush1.msra.mxu0 0.0
    %3773 = vmatprep.subr.mxu0 0.0
    %3774 = vmatpush1.msra.mxu0 0.0
    %3775 = vmatprep.subr.mxu0 0.0
    %3776 = vmatpush1.msra.mxu0 0.0
    %3777 = vmatprep.subr.mxu0 0.0
    %3778 = vmatpush1.msra.mxu0 0.0
    %3779 = vmatprep.subr.mxu0 0.0
    %3780 = vmatpush1.msra.mxu0 0.0
    %3781 = vmatprep.subr.mxu0 0.0
    %3782 = vmatpush1.msra.mxu0 0.0
    %3783 = vmatprep.subr.mxu0 0.0
    %3784 = vmatpush1.msra.mxu0 0.0
    %3785 = vmatprep.subr.mxu0 0.0
    %3786 = vmatpush1.msra.mxu0 0.0
    %3787 = vmatprep.subr.mxu0 0.0
    %3788 = vmatpush1.msra.mxu0 0.0
    %3789 = vmatprep.subr.mxu0 0.0
    %3790 = vmatpush1.msra.mxu0 0.0
    %3791 = vmatprep.subr.mxu0 0.0
    %3792 = vmatpush1.msra.mxu0 0.0
    %3793 = vmatprep.subr.mxu0 0.0
    %3794 = vmatpush1.msra.mxu0 0.0
    %3795 = vmatprep.mubr.f32.mxu0 0.0
    %3796 = vmatmul.mubr.f32.gmra.mrb[0].mxu0 %v3729
    %v3797 = vpop.f32.mrb[0].mxu0
    %v3798 = vadd.f32 %v3652, %v3797
    %v3799 = vpop.f32.mrb[0].mxu0
    %v3800 = vadd.f32 %v3654, %v3799
    %3801 = vdwg.mxu0
    %3802 = vmatprep.subr.mxu0 %v3550
    %3803 = vmatpush1.msra.mxu0 %v3549
    %3804 = vmatprep.subr.mxu0 %v3554
    %3805 = vmatpush1.msra.mxu0 %v3553
    %3806 = vmatprep.subr.mxu0 %v3558
    %3807 = vmatpush1.msra.mxu0 %v3557
    %3808 = vmatprep.subr.mxu0 %v3562
    %3809 = vmatpush1.msra.mxu0 %v3561
    %3810 = vmatprep.subr.mxu0 0.0
    %3811 = vmatpush1.msra.mxu0 0.0
    %3812 = vmatprep.subr.mxu0 0.0
    %3813 = vmatpush1.msra.mxu0 0.0
    %3814 = vmatprep.subr.mxu0 0.0
    %3815 = vmatpush1.msra.mxu0 0.0
    %3816 = vmatprep.subr.mxu0 0.0
    %3817 = vmatpush1.msra.mxu0 0.0
    %3818 = vmatprep.subr.mxu0 0.0
    %3819 = vmatpush1.msra.mxu0 0.0
    %3820 = vmatprep.subr.mxu0 0.0
    %3821 = vmatpush1.msra.mxu0 0.0
    %3822 = vmatprep.subr.mxu0 0.0
    %3823 = vmatpush1.msra.mxu0 0.0
    %3824 = vmatprep.subr.mxu0 0.0
    %3825 = vmatpush1.msra.mxu0 0.0
    %3826 = vmatprep.subr.mxu0 0.0
    %3827 = vmatpush1.msra.mxu0 0.0
    %3828 = vmatprep.subr.mxu0 0.0
    %3829 = vmatpush1.msra.mxu0 0.0
    %3830 = vmatprep.subr.mxu0 0.0
    %3831 = vmatpush1.msra.mxu0 0.0
    %3832 = vmatprep.subr.mxu0 0.0
    %3833 = vmatpush1.msra.mxu0 0.0
    %3834 = vmatprep.subr.mxu0 0.0
    %3835 = vmatpush1.msra.mxu0 0.0
    %3836 = vmatprep.subr.mxu0 0.0
    %3837 = vmatpush1.msra.mxu0 0.0
    %3838 = vmatprep.subr.mxu0 0.0
    %3839 = vmatpush1.msra.mxu0 0.0
    %3840 = vmatprep.subr.mxu0 0.0
    %3841 = vmatpush1.msra.mxu0 0.0
    %3842 = vmatprep.subr.mxu0 0.0
    %3843 = vmatpush1.msra.mxu0 0.0
    %3844 = vmatprep.subr.mxu0 0.0
    %3845 = vmatpush1.msra.mxu0 0.0
    %3846 = vmatprep.subr.mxu0 0.0
    %3847 = vmatpush1.msra.mxu0 0.0
    %3848 = vmatprep.subr.mxu0 0.0
    %3849 = vmatpush1.msra.mxu0 0.0
    %3850 = vmatprep.subr.mxu0 0.0
    %3851 = vmatpush1.msra.mxu0 0.0
    %3852 = vmatprep.subr.mxu0 0.0
    %3853 = vmatpush1.msra.mxu0 0.0
    %3854 = vmatprep.subr.mxu0 0.0
    %3855 = vmatpush1.msra.mxu0 0.0
    %3856 = vmatprep.subr.mxu0 0.0
    %3857 = vmatpush1.msra.mxu0 0.0
    %3858 = vmatprep.subr.mxu0 0.0
    %3859 = vmatpush1.msra.mxu0 0.0
    %3860 = vmatprep.subr.mxu0 0.0
    %3861 = vmatpush1.msra.mxu0 0.0
    %3862 = vmatprep.subr.mxu0 0.0
    %3863 = vmatpush1.msra.mxu0 0.0
    %3864 = vmatprep.subr.mxu0 0.0
    %3865 = vmatpush1.msra.mxu0 0.0
    %3866 = vmatprep.mubr.f32.mxu0 0.0
    %3867 = vmatmul.mubr.f32.gmra.mrb[0].mxu0 %v3729
    %v3868 = vpop.f32.mrb[0].mxu0
    %v3869 = vadd.f32 %v3723, %v3868
    %v3870 = vpop.f32.mrb[0].mxu0
    %v3871 = vadd.f32 %v3725, %v3870
    %3872 = vdwg.mxu0
    %v3873 = vld [vmem:[%s1419] sm:$0xff]
    %v3874 = vld [vmem:[%s1419 + $0x8] sm:$0xff]
    %v3875 = vld [vmem:[%s1419 + $0x10] sm:$0xff]
    %v3876 = vld [vmem:[%s1419 + $0x18] sm:$0xff]
    %v3877 = vld [vmem:[%s1419 + $0x20] sm:$0xff]
    %v3878 = vld [vmem:[%s1419 + $0x28] sm:$0xff]
    %v3879 = vld [vmem:[%s1419 + $0x30] sm:$0xff]
    %v3880 = vld [vmem:[%s1419 + $0x38] sm:$0xff]
    %v3881 = vld [vmem:[%s1419 + $0x40] sm:$0xff]
    %v3882 = vld [vmem:[%s1419 + $0x48] sm:$0xff]
    %v3883 = vld [vmem:[%s1419 + $0x50] sm:$0xff]
    %v3884 = vld [vmem:[%s1419 + $0x58] sm:$0xff]
    %v3885 = vld [vmem:[%s1419 + $0x60] sm:$0xff]
    %v3886 = vld [vmem:[%s1419 + $0x68] sm:$0xff]
    %v3887 = vld [vmem:[%s1419 + $0x70] sm:$0xff]
    %v3888 = vld [vmem:[%s1419 + $0x78] sm:$0xff]
    %v3889 = vrot.slane %v3545, 2
    %v3890 = vrot.slane %v3546, 1
    %v3891 = vsel %vm1127, %v3890, %v3889
    %v3892 = vsel %vm179, %v3891, 0
    %3894 = vmatprep.subr.mxu0 %v3874
    %3895 = vmatpush1.msra.mxu0 %v3873
    %3896 = vmatprep.subr.mxu0 %v3878
    %3897 = vmatpush1.msra.mxu0 %v3877
    %3898 = vmatprep.subr.mxu0 %v3882
    %3899 = vmatpush1.msra.mxu0 %v3881
    %3900 = vmatprep.subr.mxu0 %v3886
    %3901 = vmatpush1.msra.mxu0 %v3885
    %3902 = vmatprep.subr.mxu0 0.0
    %3903 = vmatpush1.msra.mxu0 0.0
    %3904 = vmatprep.subr.mxu0 0.0
    %3905 = vmatpush1.msra.mxu0 0.0
    %3906 = vmatprep.subr.mxu0 0.0
    %3907 = vmatpush1.msra.mxu0 0.0
    %3908 = vmatprep.subr.mxu0 0.0
    %3909 = vmatpush1.msra.mxu0 0.0
    %3910 = vmatprep.subr.mxu0 0.0
    %3911 = vmatpush1.msra.mxu0 0.0
    %3912 = vmatprep.subr.mxu0 0.0
    %3913 = vmatpush1.msra.mxu0 0.0
    %3914 = vmatprep.subr.mxu0 0.0
    %3915 = vmatpush1.msra.mxu0 0.0
    %3916 = vmatprep.subr.mxu0 0.0
    %3917 = vmatpush1.msra.mxu0 0.0
    %3918 = vmatprep.subr.mxu0 0.0
    %3919 = vmatpush1.msra.mxu0 0.0
    %3920 = vmatprep.subr.mxu0 0.0
    %3921 = vmatpush1.msra.mxu0 0.0
    %3922 = vmatprep.subr.mxu0 0.0
    %3923 = vmatpush1.msra.mxu0 0.0
    %3924 = vmatprep.subr.mxu0 0.0
    %3925 = vmatpush1.msra.mxu0 0.0
    %3926 = vmatprep.subr.mxu0 0.0
    %3927 = vmatpush1.msra.mxu0 0.0
    %3928 = vmatprep.subr.mxu0 0.0
    %3929 = vmatpush1.msra.mxu0 0.0
    %3930 = vmatprep.subr.mxu0 0.0
    %3931 = vmatpush1.msra.mxu0 0.0
    %3932 = vmatprep.subr.mxu0 0.0
    %3933 = vmatpush1.msra.mxu0 0.0
    %3934 = vmatprep.subr.mxu0 0.0
    %3935 = vmatpush1.msra.mxu0 0.0
    %3936 = vmatprep.subr.mxu0 0.0
    %3937 = vmatpush1.msra.mxu0 0.0
    %3938 = vmatprep.subr.mxu0 0.0
    %3939 = vmatpush1.msra.mxu0 0.0
    %3940 = vmatprep.subr.mxu0 0.0
    %3941 = vmatpush1.msra.mxu0 0.0
    %3942 = vmatprep.subr.mxu0 0.0
    %3943 = vmatpush1.msra.mxu0 0.0
    %3944 = vmatprep.subr.mxu0 0.0
    %3945 = vmatpush1.msra.mxu0 0.0
    %3946 = vmatprep.subr.mxu0 0.0
    %3947 = vmatpush1.msra.mxu0 0.0
    %3948 = vmatprep.subr.mxu0 0.0
    %3949 = vmatpush1.msra.mxu0 0.0
    %3950 = vmatprep.subr.mxu0 0.0
    %3951 = vmatpush1.msra.mxu0 0.0
    %3952 = vmatprep.subr.mxu0 0.0
    %3953 = vmatpush1.msra.mxu0 0.0
    %3954 = vmatprep.subr.mxu0 0.0
    %3955 = vmatpush1.msra.mxu0 0.0
    %3956 = vmatprep.subr.mxu0 0.0
    %3957 = vmatpush1.msra.mxu0 0.0
    %3958 = vmatprep.mubr.f32.mxu0 0.0
    %3959 = vmatmul.mubr.f32.gmra.mrb[0].mxu0 %v3892
    %v3960 = vpop.f32.mrb[0].mxu0
    %v3961 = vadd.f32 0.0, %v3960
    %v3962 = vpop.f32.mrb[0].mxu0
    %v3963 = vadd.f32 0.0, %v3962
    %3964 = vdwg.mxu0
    %3965 = vmatprep.subr.mxu0 %v3876
    %3966 = vmatpush1.msra.mxu0 %v3875
    %3967 = vmatprep.subr.mxu0 %v3880
    %3968 = vmatpush1.msra.mxu0 %v3879
    %3969 = vmatprep.subr.mxu0 %v3884
    %3970 = vmatpush1.msra.mxu0 %v3883
    %3971 = vmatprep.subr.mxu0 %v3888
    %3972 = vmatpush1.msra.mxu0 %v3887
    %3973 = vmatprep.subr.mxu0 0.0
    %3974 = vmatpush1.msra.mxu0 0.0
    %3975 = vmatprep.subr.mxu0 0.0
    %3976 = vmatpush1.msra.mxu0 0.0
    %3977 = vmatprep.subr.mxu0 0.0
    %3978 = vmatpush1.msra.mxu0 0.0
    %3979 = vmatprep.subr.mxu0 0.0
    %3980 = vmatpush1.msra.mxu0 0.0
    %3981 = vmatprep.subr.mxu0 0.0
    %3982 = vmatpush1.msra.mxu0 0.0
    %3983 = vmatprep.subr.mxu0 0.0
    %3984 = vmatpush1.msra.mxu0 0.0
    %3985 = vmatprep.subr.mxu0 0.0
    %3986 = vmatpush1.msra.mxu0 0.0
    %3987 = vmatprep.subr.mxu0 0.0
    %3988 = vmatpush1.msra.mxu0 0.0
    %3989 = vmatprep.subr.mxu0 0.0
    %3990 = vmatpush1.msra.mxu0 0.0
    %3991 = vmatprep.subr.mxu0 0.0
    %3992 = vmatpush1.msra.mxu0 0.0
    %3993 = vmatprep.subr.mxu0 0.0
    %3994 = vmatpush1.msra.mxu0 0.0
    %3995 = vmatprep.subr.mxu0 0.0
    %3996 = vmatpush1.msra.mxu0 0.0
    %3997 = vmatprep.subr.mxu0 0.0
    %3998 = vmatpush1.msra.mxu0 0.0
    %3999 = vmatprep.subr.mxu0 0.0
    %4000 = vmatpush1.msra.mxu0 0.0
    %4001 = vmatprep.subr.mxu0 0.0
    %4002 = vmatpush1.msra.mxu0 0.0
    %4003 = vmatprep.subr.mxu0 0.0
    %4004 = vmatpush1.msra.mxu0 0.0
    %4005 = vmatprep.subr.mxu0 0.0
    %4006 = vmatpush1.msra.mxu0 0.0
    %4007 = vmatprep.subr.mxu0 0.0
    %4008 = vmatpush1.msra.mxu0 0.0
    %4009 = vmatprep.subr.mxu0 0.0
    %4010 = vmatpush1.msra.mxu0 0.0
    %4011 = vmatprep.subr.mxu0 0.0
    %4012 = vmatpush1.msra.mxu0 0.0
    %4013 = vmatprep.subr.mxu0 0.0
    %4014 = vmatpush1.msra.mxu0 0.0
    %4015 = vmatprep.subr.mxu0 0.0
    %4016 = vmatpush1.msra.mxu0 0.0
    %4017 = vmatprep.subr.mxu0 0.0
    %4018 = vmatpush1.msra.mxu0 0.0
    %4019 = vmatprep.subr.mxu0 0.0
    %4020 = vmatpush1.msra.mxu0 0.0
    %4021 = vmatprep.subr.mxu0 0.0
    %4022 = vmatpush1.msra.mxu0 0.0
    %4023 = vmatprep.subr.mxu0 0.0
    %4024 = vmatpush1.msra.mxu0 0.0
    %4025 = vmatprep.subr.mxu0 0.0
    %4026 = vmatpush1.msra.mxu0 0.0
    %4027 = vmatprep.subr.mxu0 0.0
    %4028 = vmatpush1.msra.mxu0 0.0
    %4029 = vmatprep.mubr.f32.mxu0 0.0
    %4030 = vmatmul.mubr.f32.gmra.mrb[0].mxu0 %v3892
    %v4031 = vpop.f32.mrb[0].mxu0
    %v4032 = vadd.f32 0.0, %v4031
    %v4033 = vpop.f32.mrb[0].mxu0
    %v4034 = vadd.f32 0.0, %v4033
    %4035 = vdwg.mxu0
    %v4036 = vadd.f32 %v3798, %v3961
    %v4037 = vadd.f32 %v3800, %v3963
    %v4038 = vadd.f32 %v3869, %v4032
    %v4039 = vadd.f32 %v3871, %v4034
    %v4040 = vld [vmem:[%s1587] sm:$0xff]
    %v4041 = vld [vmem:[%s1587 + $0x8] sm:$0xff]
    %v4042 = vld [vmem:[%s1587 + $0x10] sm:$0xff]
    %v4043 = vld [vmem:[%s1587 + $0x18] sm:$0xff]
    %v4044 = vld [vmem:[%s1587 + $0x20] sm:$0xff]
    %v4045 = vld [vmem:[%s1587 + $0x28] sm:$0xff]
    %v4046 = vld [vmem:[%s1587 + $0x30] sm:$0xff]
    %v4047 = vld [vmem:[%s1587 + $0x38] sm:$0xff]
    %v4048 = vld [vmem:[%s1587 + $0x40] sm:$0xff]
    %v4049 = vld [vmem:[%s1587 + $0x48] sm:$0xff]
    %v4050 = vld [vmem:[%s1587 + $0x50] sm:$0xff]
    %v4051 = vld [vmem:[%s1587 + $0x58] sm:$0xff]
    %v4052 = vld [vmem:[%s1587 + $0x60] sm:$0xff]
    %v4053 = vld [vmem:[%s1587 + $0x68] sm:$0xff]
    %v4054 = vld [vmem:[%s1587 + $0x70] sm:$0xff]
    %v4055 = vld [vmem:[%s1587 + $0x78] sm:$0xff]
    %v4056 = vrot.slane %v3545, 3
    %v4057 = vrot.slane %v3546, 2
    %v4058 = vsel %vm1127, %v4057, %v4056
    %v4059 = vsel %vm179, %v4058, 0
    %4061 = vmatprep.subr.mxu0 %v4041
    %4062 = vmatpush1.msra.mxu0 %v4040
    %4063 = vmatprep.subr.mxu0 %v4045
    %4064 = vmatpush1.msra.mxu0 %v4044
    %4065 = vmatprep.subr.mxu0 %v4049
    %4066 = vmatpush1.msra.mxu0 %v4048
    %4067 = vmatprep.subr.mxu0 %v4053
    %4068 = vmatpush1.msra.mxu0 %v4052
    %4069 = vmatprep.subr.mxu0 0.0
    %4070 = vmatpush1.msra.mxu0 0.0
    %4071 = vmatprep.subr.mxu0 0.0
    %4072 = vmatpush1.msra.mxu0 0.0
    %4073 = vmatprep.subr.mxu0 0.0
    %4074 = vmatpush1.msra.mxu0 0.0
    %4075 = vmatprep.subr.mxu0 0.0
    %4076 = vmatpush1.msra.mxu0 0.0
    %4077 = vmatprep.subr.mxu0 0.0
    %4078 = vmatpush1.msra.mxu0 0.0
    %4079 = vmatprep.subr.mxu0 0.0
    %4080 = vmatpush1.msra.mxu0 0.0
    %4081 = vmatprep.subr.mxu0 0.0
    %4082 = vmatpush1.msra.mxu0 0.0
    %4083 = vmatprep.subr.mxu0 0.0
    %4084 = vmatpush1.msra.mxu0 0.0
    %4085 = vmatprep.subr.mxu0 0.0
    %4086 = vmatpush1.msra.mxu0 0.0
    %4087 = vmatprep.subr.mxu0 0.0
    %4088 = vmatpush1.msra.mxu0 0.0
    %4089 = vmatprep.subr.mxu0 0.0
    %4090 = vmatpush1.msra.mxu0 0.0
    %4091 = vmatprep.subr.mxu0 0.0
    %4092 = vmatpush1.msra.mxu0 0.0
    %4093 = vmatprep.subr.mxu0 0.0
    %4094 = vmatpush1.msra.mxu0 0.0
    %4095 = vmatprep.subr.mxu0 0.0
    %4096 = vmatpush1.msra.mxu0 0.0
    %4097 = vmatprep.subr.mxu0 0.0
    %4098 = vmatpush1.msra.mxu0 0.0
    %4099 = vmatprep.subr.mxu0 0.0
    %4100 = vmatpush1.msra.mxu0 0.0
    %4101 = vmatprep.subr.mxu0 0.0
    %4102 = vmatpush1.msra.mxu0 0.0
    %4103 = vmatprep.subr.mxu0 0.0
    %4104 = vmatpush1.msra.mxu0 0.0
    %4105 = vmatprep.subr.mxu0 0.0
    %4106 = vmatpush1.msra.mxu0 0.0
    %4107 = vmatprep.subr.mxu0 0.0
    %4108 = vmatpush1.msra.mxu0 0.0
    %4109 = vmatprep.subr.mxu0 0.0
    %4110 = vmatpush1.msra.mxu0 0.0
    %4111 = vmatprep.subr.mxu0 0.0
    %4112 = vmatpush1.msra.mxu0 0.0
    %4113 = vmatprep.subr.mxu0 0.0
    %4114 = vmatpush1.msra.mxu0 0.0
    %4115 = vmatprep.subr.mxu0 0.0
    %4116 = vmatpush1.msra.mxu0 0.0
    %4117 = vmatprep.subr.mxu0 0.0
    %4118 = vmatpush1.msra.mxu0 0.0
    %4119 = vmatprep.subr.mxu0 0.0
    %4120 = vmatpush1.msra.mxu0 0.0
    %4121 = vmatprep.subr.mxu0 0.0
    %4122 = vmatpush1.msra.mxu0 0.0
    %4123 = vmatprep.subr.mxu0 0.0
    %4124 = vmatpush1.msra.mxu0 0.0
    %4125 = vmatprep.mubr.f32.mxu0 0.0
    %4126 = vmatmul.mubr.f32.gmra.mrb[0].mxu0 %v4059
    %v4127 = vpop.f32.mrb[0].mxu0
    %v4128 = vadd.f32 0.0, %v4127
    %v4129 = vpop.f32.mrb[0].mxu0
    %v4130 = vadd.f32 0.0, %v4129
    %4131 = vdwg.mxu0
    %4132 = vmatprep.subr.mxu0 %v4043
    %4133 = vmatpush1.msra.mxu0 %v4042
    %4134 = vmatprep.subr.mxu0 %v4047
    %4135 = vmatpush1.msra.mxu0 %v4046
    %4136 = vmatprep.subr.mxu0 %v4051
    %4137 = vmatpush1.msra.mxu0 %v4050
    %4138 = vmatprep.subr.mxu0 %v4055
    %4139 = vmatpush1.msra.mxu0 %v4054
    %4140 = vmatprep.subr.mxu0 0.0
    %4141 = vmatpush1.msra.mxu0 0.0
    %4142 = vmatprep.subr.mxu0 0.0
    %4143 = vmatpush1.msra.mxu0 0.0
    %4144 = vmatprep.subr.mxu0 0.0
    %4145 = vmatpush1.msra.mxu0 0.0
    %4146 = vmatprep.subr.mxu0 0.0
    %4147 = vmatpush1.msra.mxu0 0.0
    %4148 = vmatprep.subr.mxu0 0.0
    %4149 = vmatpush1.msra.mxu0 0.0
    %4150 = vmatprep.subr.mxu0 0.0
    %4151 = vmatpush1.msra.mxu0 0.0
    %4152 = vmatprep.subr.mxu0 0.0
    %4153 = vmatpush1.msra.mxu0 0.0
    %4154 = vmatprep.subr.mxu0 0.0
    %4155 = vmatpush1.msra.mxu0 0.0
    %4156 = vmatprep.subr.mxu0 0.0
    %4157 = vmatpush1.msra.mxu0 0.0
    %4158 = vmatprep.subr.mxu0 0.0
    %4159 = vmatpush1.msra.mxu0 0.0
    %4160 = vmatprep.subr.mxu0 0.0
    %4161 = vmatpush1.msra.mxu0 0.0
    %4162 = vmatprep.subr.mxu0 0.0
    %4163 = vmatpush1.msra.mxu0 0.0
    %4164 = vmatprep.subr.mxu0 0.0
    %4165 = vmatpush1.msra.mxu0 0.0
    %4166 = vmatprep.subr.mxu0 0.0
    %4167 = vmatpush1.msra.mxu0 0.0
    %4168 = vmatprep.subr.mxu0 0.0
    %4169 = vmatpush1.msra.mxu0 0.0
    %4170 = vmatprep.subr.mxu0 0.0
    %4171 = vmatpush1.msra.mxu0 0.0
    %4172 = vmatprep.subr.mxu0 0.0
    %4173 = vmatpush1.msra.mxu0 0.0
    %4174 = vmatprep.subr.mxu0 0.0
    %4175 = vmatpush1.msra.mxu0 0.0
    %4176 = vmatprep.subr.mxu0 0.0
    %4177 = vmatpush1.msra.mxu0 0.0
    %4178 = vmatprep.subr.mxu0 0.0
    %4179 = vmatpush1.msra.mxu0 0.0
    %4180 = vmatprep.subr.mxu0 0.0
    %4181 = vmatpush1.msra.mxu0 0.0
    %4182 = vmatprep.subr.mxu0 0.0
    %4183 = vmatpush1.msra.mxu0 0.0
    %4184 = vmatprep.subr.mxu0 0.0
    %4185 = vmatpush1.msra.mxu0 0.0
    %4186 = vmatprep.subr.mxu0 0.0
    %4187 = vmatpush1.msra.mxu0 0.0
    %4188 = vmatprep.subr.mxu0 0.0
    %4189 = vmatpush1.msra.mxu0 0.0
    %4190 = vmatprep.subr.mxu0 0.0
    %4191 = vmatpush1.msra.mxu0 0.0
    %4192 = vmatprep.subr.mxu0 0.0
    %4193 = vmatpush1.msra.mxu0 0.0
    %4194 = vmatprep.subr.mxu0 0.0
    %4195 = vmatpush1.msra.mxu0 0.0
    %4196 = vmatprep.mubr.f32.mxu0 0.0
    %4197 = vmatmul.mubr.f32.gmra.mrb[0].mxu0 %v4059
    %v4198 = vpop.f32.mrb[0].mxu0
    %v4199 = vadd.f32 0.0, %v4198
    %v4200 = vpop.f32.mrb[0].mxu0
    %v4201 = vadd.f32 0.0, %v4200
    %4202 = vdwg.mxu0
    %v4203 = vadd.f32 %v4036, %v4128
    %v4204 = vadd.f32 %v4037, %v4130
    %v4205 = vadd.f32 %v4038, %v4199
    %v4206 = vadd.f32 %v4039, %v4201
    %v4207 = vld [vmem:[%s1755] sm:$0xff]
    %v4208 = vld [vmem:[%s1755 + $0x8] sm:$0xff]
    %v4209 = vld [vmem:[%s1755 + $0x10] sm:$0xff]
    %v4210 = vld [vmem:[%s1755 + $0x18] sm:$0xff]
    %v4211 = vld [vmem:[%s1755 + $0x20] sm:$0xff]
    %v4212 = vld [vmem:[%s1755 + $0x28] sm:$0xff]
    %v4213 = vld [vmem:[%s1755 + $0x30] sm:$0xff]
    %v4214 = vld [vmem:[%s1755 + $0x38] sm:$0xff]
    %v4215 = vld [vmem:[%s1755 + $0x40] sm:$0xff]
    %v4216 = vld [vmem:[%s1755 + $0x48] sm:$0xff]
    %v4217 = vld [vmem:[%s1755 + $0x50] sm:$0xff]
    %v4218 = vld [vmem:[%s1755 + $0x58] sm:$0xff]
    %v4219 = vld [vmem:[%s1755 + $0x60] sm:$0xff]
    %v4220 = vld [vmem:[%s1755 + $0x68] sm:$0xff]
    %v4221 = vld [vmem:[%s1755 + $0x70] sm:$0xff]
    %v4222 = vld [vmem:[%s1755 + $0x78] sm:$0xff]
    %v4223 = vrot.slane %v3545, 4
    %v4224 = vrot.slane %v3546, 3
    %v4225 = vsel %vm1127, %v4224, %v4223
    %v4226 = vsel %vm179, %v4225, 0
    %4228 = vmatprep.subr.mxu0 %v4208
    %4229 = vmatpush1.msra.mxu0 %v4207
    %4230 = vmatprep.subr.mxu0 %v4212
    %4231 = vmatpush1.msra.mxu0 %v4211
    %4232 = vmatprep.subr.mxu0 %v4216
    %4233 = vmatpush1.msra.mxu0 %v4215
    %4234 = vmatprep.subr.mxu0 %v4220
    %4235 = vmatpush1.msra.mxu0 %v4219
    %4236 = vmatprep.subr.mxu0 0.0
    %4237 = vmatpush1.msra.mxu0 0.0
    %4238 = vmatprep.subr.mxu0 0.0
    %4239 = vmatpush1.msra.mxu0 0.0
    %4240 = vmatprep.subr.mxu0 0.0
    %4241 = vmatpush1.msra.mxu0 0.0
    %4242 = vmatprep.subr.mxu0 0.0
    %4243 = vmatpush1.msra.mxu0 0.0
    %4244 = vmatprep.subr.mxu0 0.0
    %4245 = vmatpush1.msra.mxu0 0.0
    %4246 = vmatprep.subr.mxu0 0.0
    %4247 = vmatpush1.msra.mxu0 0.0
    %4248 = vmatprep.subr.mxu0 0.0
    %4249 = vmatpush1.msra.mxu0 0.0
    %4250 = vmatprep.subr.mxu0 0.0
    %4251 = vmatpush1.msra.mxu0 0.0
    %4252 = vmatprep.subr.mxu0 0.0
    %4253 = vmatpush1.msra.mxu0 0.0
    %4254 = vmatprep.subr.mxu0 0.0
    %4255 = vmatpush1.msra.mxu0 0.0
    %4256 = vmatprep.subr.mxu0 0.0
    %4257 = vmatpush1.msra.mxu0 0.0
    %4258 = vmatprep.subr.mxu0 0.0
    %4259 = vmatpush1.msra.mxu0 0.0
    %4260 = vmatprep.subr.mxu0 0.0
    %4261 = vmatpush1.msra.mxu0 0.0
    %4262 = vmatprep.subr.mxu0 0.0
    %4263 = vmatpush1.msra.mxu0 0.0
    %4264 = vmatprep.subr.mxu0 0.0
    %4265 = vmatpush1.msra.mxu0 0.0
    %4266 = vmatprep.subr.mxu0 0.0
    %4267 = vmatpush1.msra.mxu0 0.0
    %4268 = vmatprep.subr.mxu0 0.0
    %4269 = vmatpush1.msra.mxu0 0.0
    %4270 = vmatprep.subr.mxu0 0.0
    %4271 = vmatpush1.msra.mxu0 0.0
    %4272 = vmatprep.subr.mxu0 0.0
    %4273 = vmatpush1.msra.mxu0 0.0
    %4274 = vmatprep.subr.mxu0 0.0
    %4275 = vmatpush1.msra.mxu0 0.0
    %4276 = vmatprep.subr.mxu0 0.0
    %4277 = vmatpush1.msra.mxu0 0.0
    %4278 = vmatprep.subr.mxu0 0.0
    %4279 = vmatpush1.msra.mxu0 0.0
    %4280 = vmatprep.subr.mxu0 0.0
    %4281 = vmatpush1.msra.mxu0 0.0
    %4282 = vmatprep.subr.mxu0 0.0
    %4283 = vmatpush1.msra.mxu0 0.0
    %4284 = vmatprep.subr.mxu0 0.0
    %4285 = vmatpush1.msra.mxu0 0.0
    %4286 = vmatprep.subr.mxu0 0.0
    %4287 = vmatpush1.msra.mxu0 0.0
    %4288 = vmatprep.subr.mxu0 0.0
    %4289 = vmatpush1.msra.mxu0 0.0
    %4290 = vmatprep.subr.mxu0 0.0
    %4291 = vmatpush1.msra.mxu0 0.0
    %4292 = vmatprep.mubr.f32.mxu0 0.0
    %4293 = vmatmul.mubr.f32.gmra.mrb[0].mxu0 %v4226
    %v4294 = vpop.f32.mrb[0].mxu0
    %v4295 = vadd.f32 0.0, %v4294
    %v4296 = vpop.f32.mrb[0].mxu0
    %v4297 = vadd.f32 0.0, %v4296
    %4298 = vdwg.mxu0
    %4299 = vmatprep.subr.mxu0 %v4210
    %4300 = vmatpush1.msra.mxu0 %v4209
    %4301 = vmatprep.subr.mxu0 %v4214
    %4302 = vmatpush1.msra.mxu0 %v4213
    %4303 = vmatprep.subr.mxu0 %v4218
    %4304 = vmatpush1.msra.mxu0 %v4217
    %4305 = vmatprep.subr.mxu0 %v4222
    %4306 = vmatpush1.msra.mxu0 %v4221
    %4307 = vmatprep.subr.mxu0 0.0
    %4308 = vmatpush1.msra.mxu0 0.0
    %4309 = vmatprep.subr.mxu0 0.0
    %4310 = vmatpush1.msra.mxu0 0.0
    %4311 = vmatprep.subr.mxu0 0.0
    %4312 = vmatpush1.msra.mxu0 0.0
    %4313 = vmatprep.subr.mxu0 0.0
    %4314 = vmatpush1.msra.mxu0 0.0
    %4315 = vmatprep.subr.mxu0 0.0
    %4316 = vmatpush1.msra.mxu0 0.0
    %4317 = vmatprep.subr.mxu0 0.0
    %4318 = vmatpush1.msra.mxu0 0.0
    %4319 = vmatprep.subr.mxu0 0.0
    %4320 = vmatpush1.msra.mxu0 0.0
    %4321 = vmatprep.subr.mxu0 0.0
    %4322 = vmatpush1.msra.mxu0 0.0
    %4323 = vmatprep.subr.mxu0 0.0
    %4324 = vmatpush1.msra.mxu0 0.0
    %4325 = vmatprep.subr.mxu0 0.0
    %4326 = vmatpush1.msra.mxu0 0.0
    %4327 = vmatprep.subr.mxu0 0.0
    %4328 = vmatpush1.msra.mxu0 0.0
    %4329 = vmatprep.subr.mxu0 0.0
    %4330 = vmatpush1.msra.mxu0 0.0
    %4331 = vmatprep.subr.mxu0 0.0
    %4332 = vmatpush1.msra.mxu0 0.0
    %4333 = vmatprep.subr.mxu0 0.0
    %4334 = vmatpush1.msra.mxu0 0.0
    %4335 = vmatprep.subr.mxu0 0.0
    %4336 = vmatpush1.msra.mxu0 0.0
    %4337 = vmatprep.subr.mxu0 0.0
    %4338 = vmatpush1.msra.mxu0 0.0
    %4339 = vmatprep.subr.mxu0 0.0
    %4340 = vmatpush1.msra.mxu0 0.0
    %4341 = vmatprep.subr.mxu0 0.0
    %4342 = vmatpush1.msra.mxu0 0.0
    %4343 = vmatprep.subr.mxu0 0.0
    %4344 = vmatpush1.msra.mxu0 0.0
    %4345 = vmatprep.subr.mxu0 0.0
    %4346 = vmatpush1.msra.mxu0 0.0
    %4347 = vmatprep.subr.mxu0 0.0
    %4348 = vmatpush1.msra.mxu0 0.0
    %4349 = vmatprep.subr.mxu0 0.0
    %4350 = vmatpush1.msra.mxu0 0.0
    %4351 = vmatprep.subr.mxu0 0.0
    %4352 = vmatpush1.msra.mxu0 0.0
    %4353 = vmatprep.subr.mxu0 0.0
    %4354 = vmatpush1.msra.mxu0 0.0
    %4355 = vmatprep.subr.mxu0 0.0
    %4356 = vmatpush1.msra.mxu0 0.0
    %4357 = vmatprep.subr.mxu0 0.0
    %4358 = vmatpush1.msra.mxu0 0.0
    %4359 = vmatprep.subr.mxu0 0.0
    %4360 = vmatpush1.msra.mxu0 0.0
    %4361 = vmatprep.subr.mxu0 0.0
    %4362 = vmatpush1.msra.mxu0 0.0
    %4363 = vmatprep.mubr.f32.mxu0 0.0
    %4364 = vmatmul.mubr.f32.gmra.mrb[0].mxu0 %v4226
    %v4365 = vpop.f32.mrb[0].mxu0
    %v4366 = vadd.f32 0.0, %v4365
    %v4367 = vpop.f32.mrb[0].mxu0
    %v4368 = vadd.f32 0.0, %v4367
    %4369 = vdwg.mxu0
    %v4370 = vadd.f32 %v4203, %v4295
    %v4371 = vadd.f32 %v4204, %v4297
    %v4372 = vadd.f32 %v4205, %v4366
    %v4373 = vadd.f32 %v4206, %v4368
    %v4374 = vld [vmem:[%s1923] sm:$0xff]
    %v4375 = vld [vmem:[%s1923 + $0x8] sm:$0xff]
    %v4376 = vld [vmem:[%s1923 + $0x10] sm:$0xff]
    %v4377 = vld [vmem:[%s1923 + $0x18] sm:$0xff]
    %v4378 = vld [vmem:[%s1923 + $0x20] sm:$0xff]
    %v4379 = vld [vmem:[%s1923 + $0x28] sm:$0xff]
    %v4380 = vld [vmem:[%s1923 + $0x30] sm:$0xff]
    %v4381 = vld [vmem:[%s1923 + $0x38] sm:$0xff]
    %v4382 = vld [vmem:[%s1923 + $0x40] sm:$0xff]
    %v4383 = vld [vmem:[%s1923 + $0x48] sm:$0xff]
    %v4384 = vld [vmem:[%s1923 + $0x50] sm:$0xff]
    %v4385 = vld [vmem:[%s1923 + $0x58] sm:$0xff]
    %v4386 = vld [vmem:[%s1923 + $0x60] sm:$0xff]
    %v4387 = vld [vmem:[%s1923 + $0x68] sm:$0xff]
    %v4388 = vld [vmem:[%s1923 + $0x70] sm:$0xff]
    %v4389 = vld [vmem:[%s1923 + $0x78] sm:$0xff]
    %v4390 = vrot.slane %v3545, 5
    %v4391 = vrot.slane %v3546, 4
    %v4392 = vsel %vm1127, %v4391, %v4390
    %v4393 = vsel %vm179, %v4392, 0
    %4395 = vmatprep.subr.mxu0 %v4375
    %4396 = vmatpush1.msra.mxu0 %v4374
    %4397 = vmatprep.subr.mxu0 %v4379
    %4398 = vmatpush1.msra.mxu0 %v4378
    %4399 = vmatprep.subr.mxu0 %v4383
    %4400 = vmatpush1.msra.mxu0 %v4382
    %4401 = vmatprep.subr.mxu0 %v4387
    %4402 = vmatpush1.msra.mxu0 %v4386
    %4403 = vmatprep.subr.mxu0 0.0
    %4404 = vmatpush1.msra.mxu0 0.0
    %4405 = vmatprep.subr.mxu0 0.0
    %4406 = vmatpush1.msra.mxu0 0.0
    %4407 = vmatprep.subr.mxu0 0.0
    %4408 = vmatpush1.msra.mxu0 0.0
    %4409 = vmatprep.subr.mxu0 0.0
    %4410 = vmatpush1.msra.mxu0 0.0
    %4411 = vmatprep.subr.mxu0 0.0
    %4412 = vmatpush1.msra.mxu0 0.0
    %4413 = vmatprep.subr.mxu0 0.0
    %4414 = vmatpush1.msra.mxu0 0.0
    %4415 = vmatprep.subr.mxu0 0.0
    %4416 = vmatpush1.msra.mxu0 0.0
    %4417 = vmatprep.subr.mxu0 0.0
    %4418 = vmatpush1.msra.mxu0 0.0
    %4419 = vmatprep.subr.mxu0 0.0
    %4420 = vmatpush1.msra.mxu0 0.0
    %4421 = vmatprep.subr.mxu0 0.0
    %4422 = vmatpush1.msra.mxu0 0.0
    %4423 = vmatprep.subr.mxu0 0.0
    %4424 = vmatpush1.msra.mxu0 0.0
    %4425 = vmatprep.subr.mxu0 0.0
    %4426 = vmatpush1.msra.mxu0 0.0
    %4427 = vmatprep.subr.mxu0 0.0
    %4428 = vmatpush1.msra.mxu0 0.0
    %4429 = vmatprep.subr.mxu0 0.0
    %4430 = vmatpush1.msra.mxu0 0.0
    %4431 = vmatprep.subr.mxu0 0.0
    %4432 = vmatpush1.msra.mxu0 0.0
    %4433 = vmatprep.subr.mxu0 0.0
    %4434 = vmatpush1.msra.mxu0 0.0
    %4435 = vmatprep.subr.mxu0 0.0
    %4436 = vmatpush1.msra.mxu0 0.0
    %4437 = vmatprep.subr.mxu0 0.0
    %4438 = vmatpush1.msra.mxu0 0.0
    %4439 = vmatprep.subr.mxu0 0.0
    %4440 = vmatpush1.msra.mxu0 0.0
    %4441 = vmatprep.subr.mxu0 0.0
    %4442 = vmatpush1.msra.mxu0 0.0
    %4443 = vmatprep.subr.mxu0 0.0
    %4444 = vmatpush1.msra.mxu0 0.0
    %4445 = vmatprep.subr.mxu0 0.0
    %4446 = vmatpush1.msra.mxu0 0.0
    %4447 = vmatprep.subr.mxu0 0.0
    %4448 = vmatpush1.msra.mxu0 0.0
    %4449 = vmatprep.subr.mxu0 0.0
    %4450 = vmatpush1.msra.mxu0 0.0
    %4451 = vmatprep.subr.mxu0 0.0
    %4452 = vmatpush1.msra.mxu0 0.0
    %4453 = vmatprep.subr.mxu0 0.0
    %4454 = vmatpush1.msra.mxu0 0.0
    %4455 = vmatprep.subr.mxu0 0.0
    %4456 = vmatpush1.msra.mxu0 0.0
    %4457 = vmatprep.subr.mxu0 0.0
    %4458 = vmatpush1.msra.mxu0 0.0
    %4459 = vmatprep.mubr.f32.mxu0 0.0
    %4460 = vmatmul.mubr.f32.gmra.mrb[0].mxu0 %v4393
    %v4461 = vpop.f32.mrb[0].mxu0
    %v4462 = vadd.f32 0.0, %v4461
    %v4463 = vpop.f32.mrb[0].mxu0
    %v4464 = vadd.f32 0.0, %v4463
    %4465 = vdwg.mxu0
    %4466 = vmatprep.subr.mxu0 %v4377
    %4467 = vmatpush1.msra.mxu0 %v4376
    %4468 = vmatprep.subr.mxu0 %v4381
    %4469 = vmatpush1.msra.mxu0 %v4380
    %4470 = vmatprep.subr.mxu0 %v4385
    %4471 = vmatpush1.msra.mxu0 %v4384
    %4472 = vmatprep.subr.mxu0 %v4389
    %4473 = vmatpush1.msra.mxu0 %v4388
    %4474 = vmatprep.subr.mxu0 0.0
    %4475 = vmatpush1.msra.mxu0 0.0
    %4476 = vmatprep.subr.mxu0 0.0
    %4477 = vmatpush1.msra.mxu0 0.0
    %4478 = vmatprep.subr.mxu0 0.0
    %4479 = vmatpush1.msra.mxu0 0.0
    %4480 = vmatprep.subr.mxu0 0.0
    %4481 = vmatpush1.msra.mxu0 0.0
    %4482 = vmatprep.subr.mxu0 0.0
    %4483 = vmatpush1.msra.mxu0 0.0
    %4484 = vmatprep.subr.mxu0 0.0
    %4485 = vmatpush1.msra.mxu0 0.0
    %4486 = vmatprep.subr.mxu0 0.0
    %4487 = vmatpush1.msra.mxu0 0.0
    %4488 = vmatprep.subr.mxu0 0.0
    %4489 = vmatpush1.msra.mxu0 0.0
    %4490 = vmatprep.subr.mxu0 0.0
    %4491 = vmatpush1.msra.mxu0 0.0
    %4492 = vmatprep.subr.mxu0 0.0
    %4493 = vmatpush1.msra.mxu0 0.0
    %4494 = vmatprep.subr.mxu0 0.0
    %4495 = vmatpush1.msra.mxu0 0.0
    %4496 = vmatprep.subr.mxu0 0.0
    %4497 = vmatpush1.msra.mxu0 0.0
    %4498 = vmatprep.subr.mxu0 0.0
    %4499 = vmatpush1.msra.mxu0 0.0
    %4500 = vmatprep.subr.mxu0 0.0
    %4501 = vmatpush1.msra.mxu0 0.0
    %4502 = vmatprep.subr.mxu0 0.0
    %4503 = vmatpush1.msra.mxu0 0.0
    %4504 = vmatprep.subr.mxu0 0.0
    %4505 = vmatpush1.msra.mxu0 0.0
    %4506 = vmatprep.subr.mxu0 0.0
    %4507 = vmatpush1.msra.mxu0 0.0
    %4508 = vmatprep.subr.mxu0 0.0
    %4509 = vmatpush1.msra.mxu0 0.0
    %4510 = vmatprep.subr.mxu0 0.0
    %4511 = vmatpush1.msra.mxu0 0.0
    %4512 = vmatprep.subr.mxu0 0.0
    %4513 = vmatpush1.msra.mxu0 0.0
    %4514 = vmatprep.subr.mxu0 0.0
    %4515 = vmatpush1.msra.mxu0 0.0
    %4516 = vmatprep.subr.mxu0 0.0
    %4517 = vmatpush1.msra.mxu0 0.0
    %4518 = vmatprep.subr.mxu0 0.0
    %4519 = vmatpush1.msra.mxu0 0.0
    %4520 = vmatprep.subr.mxu0 0.0
    %4521 = vmatpush1.msra.mxu0 0.0
    %4522 = vmatprep.subr.mxu0 0.0
    %4523 = vmatpush1.msra.mxu0 0.0
    %4524 = vmatprep.subr.mxu0 0.0
    %4525 = vmatpush1.msra.mxu0 0.0
    %4526 = vmatprep.subr.mxu0 0.0
    %4527 = vmatpush1.msra.mxu0 0.0
    %4528 = vmatprep.subr.mxu0 0.0
    %4529 = vmatpush1.msra.mxu0 0.0
    %4530 = vmatprep.mubr.f32.mxu0 0.0
    %4531 = vmatmul.mubr.f32.gmra.mrb[0].mxu0 %v4393
    %v4532 = vpop.f32.mrb[0].mxu0
    %v4533 = vadd.f32 0.0, %v4532
    %v4534 = vpop.f32.mrb[0].mxu0
    %v4535 = vadd.f32 0.0, %v4534
    %4536 = vdwg.mxu0
    %v4537 = vadd.f32 %v4370, %v4462
    %v4538 = vadd.f32 %v4371, %v4464
    %v4539 = vadd.f32 %v4372, %v4533
    %v4540 = vadd.f32 %v4373, %v4535
    %v4541 = vld [vmem:[%s2091] sm:$0xff]
    %v4542 = vld [vmem:[%s2091 + $0x8] sm:$0xff]
    %v4543 = vld [vmem:[%s2091 + $0x10] sm:$0xff]
    %v4544 = vld [vmem:[%s2091 + $0x18] sm:$0xff]
    %v4545 = vld [vmem:[%s2091 + $0x20] sm:$0xff]
    %v4546 = vld [vmem:[%s2091 + $0x28] sm:$0xff]
    %v4547 = vld [vmem:[%s2091 + $0x30] sm:$0xff]
    %v4548 = vld [vmem:[%s2091 + $0x38] sm:$0xff]
    %v4549 = vld [vmem:[%s2091 + $0x40] sm:$0xff]
    %v4550 = vld [vmem:[%s2091 + $0x48] sm:$0xff]
    %v4551 = vld [vmem:[%s2091 + $0x50] sm:$0xff]
    %v4552 = vld [vmem:[%s2091 + $0x58] sm:$0xff]
    %v4553 = vld [vmem:[%s2091 + $0x60] sm:$0xff]
    %v4554 = vld [vmem:[%s2091 + $0x68] sm:$0xff]
    %v4555 = vld [vmem:[%s2091 + $0x70] sm:$0xff]
    %v4556 = vld [vmem:[%s2091 + $0x78] sm:$0xff]
    %v4557 = vrot.slane %v3545, 6
    %v4558 = vrot.slane %v3546, 5
    %v4559 = vsel %vm1127, %v4558, %v4557
    %v4560 = vsel %vm179, %v4559, 0
    %4562 = vmatprep.subr.mxu0 %v4542
    %4563 = vmatpush1.msra.mxu0 %v4541
    %4564 = vmatprep.subr.mxu0 %v4546
    %4565 = vmatpush1.msra.mxu0 %v4545
    %4566 = vmatprep.subr.mxu0 %v4550
    %4567 = vmatpush1.msra.mxu0 %v4549
    %4568 = vmatprep.subr.mxu0 %v4554
    %4569 = vmatpush1.msra.mxu0 %v4553
    %4570 = vmatprep.subr.mxu0 0.0
    %4571 = vmatpush1.msra.mxu0 0.0
    %4572 = vmatprep.subr.mxu0 0.0
    %4573 = vmatpush1.msra.mxu0 0.0
    %4574 = vmatprep.subr.mxu0 0.0
    %4575 = vmatpush1.msra.mxu0 0.0
    %4576 = vmatprep.subr.mxu0 0.0
    %4577 = vmatpush1.msra.mxu0 0.0
    %4578 = vmatprep.subr.mxu0 0.0
    %4579 = vmatpush1.msra.mxu0 0.0
    %4580 = vmatprep.subr.mxu0 0.0
    %4581 = vmatpush1.msra.mxu0 0.0
    %4582 = vmatprep.subr.mxu0 0.0
    %4583 = vmatpush1.msra.mxu0 0.0
    %4584 = vmatprep.subr.mxu0 0.0
    %4585 = vmatpush1.msra.mxu0 0.0
    %4586 = vmatprep.subr.mxu0 0.0
    %4587 = vmatpush1.msra.mxu0 0.0
    %4588 = vmatprep.subr.mxu0 0.0
    %4589 = vmatpush1.msra.mxu0 0.0
    %4590 = vmatprep.subr.mxu0 0.0
    %4591 = vmatpush1.msra.mxu0 0.0
    %4592 = vmatprep.subr.mxu0 0.0
    %4593 = vmatpush1.msra.mxu0 0.0
    %4594 = vmatprep.subr.mxu0 0.0
    %4595 = vmatpush1.msra.mxu0 0.0
    %4596 = vmatprep.subr.mxu0 0.0
    %4597 = vmatpush1.msra.mxu0 0.0
    %4598 = vmatprep.subr.mxu0 0.0
    %4599 = vmatpush1.msra.mxu0 0.0
    %4600 = vmatprep.subr.mxu0 0.0
    %4601 = vmatpush1.msra.mxu0 0.0
    %4602 = vmatprep.subr.mxu0 0.0
    %4603 = vmatpush1.msra.mxu0 0.0
    %4604 = vmatprep.subr.mxu0 0.0
    %4605 = vmatpush1.msra.mxu0 0.0
    %4606 = vmatprep.subr.mxu0 0.0
    %4607 = vmatpush1.msra.mxu0 0.0
    %4608 = vmatprep.subr.mxu0 0.0
    %4609 = vmatpush1.msra.mxu0 0.0
    %4610 = vmatprep.subr.mxu0 0.0
    %4611 = vmatpush1.msra.mxu0 0.0
    %4612 = vmatprep.subr.mxu0 0.0
    %4613 = vmatpush1.msra.mxu0 0.0
    %4614 = vmatprep.subr.mxu0 0.0
    %4615 = vmatpush1.msra.mxu0 0.0
    %4616 = vmatprep.subr.mxu0 0.0
    %4617 = vmatpush1.msra.mxu0 0.0
    %4618 = vmatprep.subr.mxu0 0.0
    %4619 = vmatpush1.msra.mxu0 0.0
    %4620 = vmatprep.subr.mxu0 0.0
    %4621 = vmatpush1.msra.mxu0 0.0
    %4622 = vmatprep.subr.mxu0 0.0
    %4623 = vmatpush1.msra.mxu0 0.0
    %4624 = vmatprep.subr.mxu0 0.0
    %4625 = vmatpush1.msra.mxu0 0.0
    %4626 = vmatprep.mubr.f32.mxu0 0.0
    %4627 = vmatmul.mubr.f32.gmra.mrb[0].mxu0 %v4560
    %v4628 = vpop.f32.mrb[0].mxu0
    %v4629 = vadd.f32 0.0, %v4628
    %v4630 = vpop.f32.mrb[0].mxu0
    %v4631 = vadd.f32 0.0, %v4630
    %4632 = vdwg.mxu0
    %4633 = vmatprep.subr.mxu0 %v4544
    %4634 = vmatpush1.msra.mxu0 %v4543
    %4635 = vmatprep.subr.mxu0 %v4548
    %4636 = vmatpush1.msra.mxu0 %v4547
    %4637 = vmatprep.subr.mxu0 %v4552
    %4638 = vmatpush1.msra.mxu0 %v4551
    %4639 = vmatprep.subr.mxu0 %v4556
    %4640 = vmatpush1.msra.mxu0 %v4555
    %4641 = vmatprep.subr.mxu0 0.0
    %4642 = vmatpush1.msra.mxu0 0.0
    %4643 = vmatprep.subr.mxu0 0.0
    %4644 = vmatpush1.msra.mxu0 0.0
    %4645 = vmatprep.subr.mxu0 0.0
    %4646 = vmatpush1.msra.mxu0 0.0
    %4647 = vmatprep.subr.mxu0 0.0
    %4648 = vmatpush1.msra.mxu0 0.0
    %4649 = vmatprep.subr.mxu0 0.0
    %4650 = vmatpush1.msra.mxu0 0.0
    %4651 = vmatprep.subr.mxu0 0.0
    %4652 = vmatpush1.msra.mxu0 0.0
    %4653 = vmatprep.subr.mxu0 0.0
    %4654 = vmatpush1.msra.mxu0 0.0
    %4655 = vmatprep.subr.mxu0 0.0
    %4656 = vmatpush1.msra.mxu0 0.0
    %4657 = vmatprep.subr.mxu0 0.0
    %4658 = vmatpush1.msra.mxu0 0.0
    %4659 = vmatprep.subr.mxu0 0.0
    %4660 = vmatpush1.msra.mxu0 0.0
    %4661 = vmatprep.subr.mxu0 0.0
    %4662 = vmatpush1.msra.mxu0 0.0
    %4663 = vmatprep.subr.mxu0 0.0
    %4664 = vmatpush1.msra.mxu0 0.0
    %4665 = vmatprep.subr.mxu0 0.0
    %4666 = vmatpush1.msra.mxu0 0.0
    %4667 = vmatprep.subr.mxu0 0.0
    %4668 = vmatpush1.msra.mxu0 0.0
    %4669 = vmatprep.subr.mxu0 0.0
    %4670 = vmatpush1.msra.mxu0 0.0
    %4671 = vmatprep.subr.mxu0 0.0
    %4672 = vmatpush1.msra.mxu0 0.0
    %4673 = vmatprep.subr.mxu0 0.0
    %4674 = vmatpush1.msra.mxu0 0.0
    %4675 = vmatprep.subr.mxu0 0.0
    %4676 = vmatpush1.msra.mxu0 0.0
    %4677 = vmatprep.subr.mxu0 0.0
    %4678 = vmatpush1.msra.mxu0 0.0
    %4679 = vmatprep.subr.mxu0 0.0
    %4680 = vmatpush1.msra.mxu0 0.0
    %4681 = vmatprep.subr.mxu0 0.0
    %4682 = vmatpush1.msra.mxu0 0.0
    %4683 = vmatprep.subr.mxu0 0.0
    %4684 = vmatpush1.msra.mxu0 0.0
    %4685 = vmatprep.subr.mxu0 0.0
    %4686 = vmatpush1.msra.mxu0 0.0
    %4687 = vmatprep.subr.mxu0 0.0
    %4688 = vmatpush1.msra.mxu0 0.0
    %4689 = vmatprep.subr.mxu0 0.0
    %4690 = vmatpush1.msra.mxu0 0.0
    %4691 = vmatprep.subr.mxu0 0.0
    %4692 = vmatpush1.msra.mxu0 0.0
    %4693 = vmatprep.subr.mxu0 0.0
    %4694 = vmatpush1.msra.mxu0 0.0
    %4695 = vmatprep.subr.mxu0 0.0
    %4696 = vmatpush1.msra.mxu0 0.0
    %4697 = vmatprep.mubr.f32.mxu0 0.0
    %4698 = vmatmul.mubr.f32.gmra.mrb[0].mxu0 %v4560
    %v4699 = vpop.f32.mrb[0].mxu0
    %v4700 = vadd.f32 0.0, %v4699
    %v4701 = vpop.f32.mrb[0].mxu0
    %v4702 = vadd.f32 0.0, %v4701
    %4703 = vdwg.mxu0
    %v4704 = vadd.f32 %v4537, %v4629
    %v4705 = vadd.f32 %v4538, %v4631
    %v4706 = vadd.f32 %v4539, %v4700
    %v4707 = vadd.f32 %v4540, %v4702
    %v4708 = vld [vmem:[%s2259] sm:$0xff]
    %v4709 = vld [vmem:[%s2259 + $0x8] sm:$0xff]
    %v4710 = vld [vmem:[%s2259 + $0x10] sm:$0xff]
    %v4711 = vld [vmem:[%s2259 + $0x18] sm:$0xff]
    %v4712 = vld [vmem:[%s2259 + $0x20] sm:$0xff]
    %v4713 = vld [vmem:[%s2259 + $0x28] sm:$0xff]
    %v4714 = vld [vmem:[%s2259 + $0x30] sm:$0xff]
    %v4715 = vld [vmem:[%s2259 + $0x38] sm:$0xff]
    %v4716 = vld [vmem:[%s2259 + $0x40] sm:$0xff]
    %v4717 = vld [vmem:[%s2259 + $0x48] sm:$0xff]
    %v4718 = vld [vmem:[%s2259 + $0x50] sm:$0xff]
    %v4719 = vld [vmem:[%s2259 + $0x58] sm:$0xff]
    %v4720 = vld [vmem:[%s2259 + $0x60] sm:$0xff]
    %v4721 = vld [vmem:[%s2259 + $0x68] sm:$0xff]
    %v4722 = vld [vmem:[%s2259 + $0x70] sm:$0xff]
    %v4723 = vld [vmem:[%s2259 + $0x78] sm:$0xff]
    %v4724 = vrot.slane %v3545, 7
    %v4725 = vrot.slane %v3546, 6
    %v4726 = vsel %vm1127, %v4725, %v4724
    %v4727 = vsel %vm179, %v4726, 0
    %4729 = vmatprep.subr.mxu0 %v4709
    %4730 = vmatpush1.msra.mxu0 %v4708
    %4731 = vmatprep.subr.mxu0 %v4713
    %4732 = vmatpush1.msra.mxu0 %v4712
    %4733 = vmatprep.subr.mxu0 %v4717
    %4734 = vmatpush1.msra.mxu0 %v4716
    %4735 = vmatprep.subr.mxu0 %v4721
    %4736 = vmatpush1.msra.mxu0 %v4720
    %4737 = vmatprep.subr.mxu0 0.0
    %4738 = vmatpush1.msra.mxu0 0.0
    %4739 = vmatprep.subr.mxu0 0.0
    %4740 = vmatpush1.msra.mxu0 0.0
    %4741 = vmatprep.subr.mxu0 0.0
    %4742 = vmatpush1.msra.mxu0 0.0
    %4743 = vmatprep.subr.mxu0 0.0
    %4744 = vmatpush1.msra.mxu0 0.0
    %4745 = vmatprep.subr.mxu0 0.0
    %4746 = vmatpush1.msra.mxu0 0.0
    %4747 = vmatprep.subr.mxu0 0.0
    %4748 = vmatpush1.msra.mxu0 0.0
    %4749 = vmatprep.subr.mxu0 0.0
    %4750 = vmatpush1.msra.mxu0 0.0
    %4751 = vmatprep.subr.mxu0 0.0
    %4752 = vmatpush1.msra.mxu0 0.0
    %4753 = vmatprep.subr.mxu0 0.0
    %4754 = vmatpush1.msra.mxu0 0.0
    %4755 = vmatprep.subr.mxu0 0.0
    %4756 = vmatpush1.msra.mxu0 0.0
    %4757 = vmatprep.subr.mxu0 0.0
    %4758 = vmatpush1.msra.mxu0 0.0
    %4759 = vmatprep.subr.mxu0 0.0
    %4760 = vmatpush1.msra.mxu0 0.0
    %4761 = vmatprep.subr.mxu0 0.0
    %4762 = vmatpush1.msra.mxu0 0.0
    %4763 = vmatprep.subr.mxu0 0.0
    %4764 = vmatpush1.msra.mxu0 0.0
    %4765 = vmatprep.subr.mxu0 0.0
    %4766 = vmatpush1.msra.mxu0 0.0
    %4767 = vmatprep.subr.mxu0 0.0
    %4768 = vmatpush1.msra.mxu0 0.0
    %4769 = vmatprep.subr.mxu0 0.0
    %4770 = vmatpush1.msra.mxu0 0.0
    %4771 = vmatprep.subr.mxu0 0.0
    %4772 = vmatpush1.msra.mxu0 0.0
    %4773 = vmatprep.subr.mxu0 0.0
    %4774 = vmatpush1.msra.mxu0 0.0
    %4775 = vmatprep.subr.mxu0 0.0
    %4776 = vmatpush1.msra.mxu0 0.0
    %4777 = vmatprep.subr.mxu0 0.0
    %4778 = vmatpush1.msra.mxu0 0.0
    %4779 = vmatprep.subr.mxu0 0.0
    %4780 = vmatpush1.msra.mxu0 0.0
    %4781 = vmatprep.subr.mxu0 0.0
    %4782 = vmatpush1.msra.mxu0 0.0
    %4783 = vmatprep.subr.mxu0 0.0
    %4784 = vmatpush1.msra.mxu0 0.0
    %4785 = vmatprep.subr.mxu0 0.0
    %4786 = vmatpush1.msra.mxu0 0.0
    %4787 = vmatprep.subr.mxu0 0.0
    %4788 = vmatpush1.msra.mxu0 0.0
    %4789 = vmatprep.subr.mxu0 0.0
    %4790 = vmatpush1.msra.mxu0 0.0
    %4791 = vmatprep.subr.mxu0 0.0
    %4792 = vmatpush1.msra.mxu0 0.0
    %4793 = vmatprep.mubr.f32.mxu0 0.0
    %4794 = vmatmul.mubr.f32.gmra.mrb[0].mxu0 %v4727
    %v4795 = vpop.f32.mrb[0].mxu0
    %v4796 = vadd.f32 0.0, %v4795
    %v4797 = vpop.f32.mrb[0].mxu0
    %v4798 = vadd.f32 0.0, %v4797
    %4799 = vdwg.mxu0
    %4800 = vmatprep.subr.mxu0 %v4711
    %4801 = vmatpush1.msra.mxu0 %v4710
    %4802 = vmatprep.subr.mxu0 %v4715
    %4803 = vmatpush1.msra.mxu0 %v4714
    %4804 = vmatprep.subr.mxu0 %v4719
    %4805 = vmatpush1.msra.mxu0 %v4718
    %4806 = vmatprep.subr.mxu0 %v4723
    %4807 = vmatpush1.msra.mxu0 %v4722
    %4808 = vmatprep.subr.mxu0 0.0
    %4809 = vmatpush1.msra.mxu0 0.0
    %4810 = vmatprep.subr.mxu0 0.0
    %4811 = vmatpush1.msra.mxu0 0.0
    %4812 = vmatprep.subr.mxu0 0.0
    %4813 = vmatpush1.msra.mxu0 0.0
    %4814 = vmatprep.subr.mxu0 0.0
    %4815 = vmatpush1.msra.mxu0 0.0
    %4816 = vmatprep.subr.mxu0 0.0
    %4817 = vmatpush1.msra.mxu0 0.0
    %4818 = vmatprep.subr.mxu0 0.0
    %4819 = vmatpush1.msra.mxu0 0.0
    %4820 = vmatprep.subr.mxu0 0.0
    %4821 = vmatpush1.msra.mxu0 0.0
    %4822 = vmatprep.subr.mxu0 0.0
    %4823 = vmatpush1.msra.mxu0 0.0
    %4824 = vmatprep.subr.mxu0 0.0
    %4825 = vmatpush1.msra.mxu0 0.0
    %4826 = vmatprep.subr.mxu0 0.0
    %4827 = vmatpush1.msra.mxu0 0.0
    %4828 = vmatprep.subr.mxu0 0.0
    %4829 = vmatpush1.msra.mxu0 0.0
    %4830 = vmatprep.subr.mxu0 0.0
    %4831 = vmatpush1.msra.mxu0 0.0
    %4832 = vmatprep.subr.mxu0 0.0
    %4833 = vmatpush1.msra.mxu0 0.0
    %4834 = vmatprep.subr.mxu0 0.0
    %4835 = vmatpush1.msra.mxu0 0.0
    %4836 = vmatprep.subr.mxu0 0.0
    %4837 = vmatpush1.msra.mxu0 0.0
    %4838 = vmatprep.subr.mxu0 0.0
    %4839 = vmatpush1.msra.mxu0 0.0
    %4840 = vmatprep.subr.mxu0 0.0
    %4841 = vmatpush1.msra.mxu0 0.0
    %4842 = vmatprep.subr.mxu0 0.0
    %4843 = vmatpush1.msra.mxu0 0.0
    %4844 = vmatprep.subr.mxu0 0.0
    %4845 = vmatpush1.msra.mxu0 0.0
    %4846 = vmatprep.subr.mxu0 0.0
    %4847 = vmatpush1.msra.mxu0 0.0
    %4848 = vmatprep.subr.mxu0 0.0
    %4849 = vmatpush1.msra.mxu0 0.0
    %4850 = vmatprep.subr.mxu0 0.0
    %4851 = vmatpush1.msra.mxu0 0.0
    %4852 = vmatprep.subr.mxu0 0.0
    %4853 = vmatpush1.msra.mxu0 0.0
    %4854 = vmatprep.subr.mxu0 0.0
    %4855 = vmatpush1.msra.mxu0 0.0
    %4856 = vmatprep.subr.mxu0 0.0
    %4857 = vmatpush1.msra.mxu0 0.0
    %4858 = vmatprep.subr.mxu0 0.0
    %4859 = vmatpush1.msra.mxu0 0.0
    %4860 = vmatprep.subr.mxu0 0.0
    %4861 = vmatpush1.msra.mxu0 0.0
    %4862 = vmatprep.subr.mxu0 0.0
    %4863 = vmatpush1.msra.mxu0 0.0
    %4864 = vmatprep.mubr.f32.mxu0 0.0
    %4865 = vmatmul.mubr.f32.gmra.mrb[0].mxu0 %v4727
    %v4866 = vpop.f32.mrb[0].mxu0
    %v4867 = vadd.f32 0.0, %v4866
    %v4868 = vpop.f32.mrb[0].mxu0
    %v4869 = vadd.f32 0.0, %v4868
    %4870 = vdwg.mxu0
    %v4871 = vadd.f32 %v4704, %v4796
    %v4872 = vadd.f32 %v4705, %v4798
    %v4873 = vadd.f32 %v4706, %v4867
    %v4874 = vadd.f32 %v4707, %v4869
    %v4875 = vadd.f32 %v4871, %v2431
    %v4876 = vadd.f32 %v4872, %v2435
    %v4877 = vadd.f32 %v4873, %v2439
    %v4878 = vadd.f32 %v4874, %v2443
    %vm4879 = vcmp.gt.f32.partialorder %v4875, 0.0
    %vm4880 = vcmp.gt.f32.partialorder %v4876, 0.0
    %vm4881 = vcmp.gt.f32.partialorder %v4877, 0.0
    %vm4882 = vcmp.gt.f32.partialorder %v4878, 0.0
    %v4883 = vmul.f32 %v4875, 0.01
    %v4884 = vmul.f32 %v4876, 0.01
    %v4885 = vmul.f32 %v4877, 0.01
    %v4886 = vmul.f32 %v4878, 0.01
    %v4887 = vsel %vm4879, %v4875, %v4883
    %v4888 = vsel %vm4880, %v4876, %v4884
    %v4889 = vsel %vm4881, %v4877, %v4885
    %v4890 = vsel %vm4882, %v4878, %v4886
    %4891 = vmatprep.subr.mxu0 0.0
    %4892 = vmatpush1.msra.mxu0 %v57
    %4893 = vmatprep.subr.mxu0 0.0
    %4894 = vmatpush1.msra.mxu0 %v58
    %4895 = vmatprep.subr.mxu0 0.0
    %4896 = vmatpush1.msra.mxu0 %v59
    %4897 = vmatprep.subr.mxu0 0.0
    %4898 = vmatpush1.msra.mxu0 %v60
    %4899 = vmatprep.subr.mxu0 0.0
    %4900 = vmatpush1.msra.mxu0 %v61
    %4901 = vmatprep.subr.mxu0 0.0
    %4902 = vmatpush1.msra.mxu0 %v62
    %4903 = vmatprep.subr.mxu0 0.0
    %4904 = vmatpush1.msra.mxu0 %v63
    %4905 = vmatprep.subr.mxu0 0.0
    %4906 = vmatpush1.msra.mxu0 %v64
    %4907 = vmatprep.subr.mxu0 0.0
    %4908 = vmatpush1.msra.mxu0 %v65
    %4909 = vmatprep.subr.mxu0 0.0
    %4910 = vmatpush1.msra.mxu0 %v66
    %4911 = vmatprep.subr.mxu0 0.0
    %4912 = vmatpush1.msra.mxu0 %v67
    %4913 = vmatprep.subr.mxu0 0.0
    %4914 = vmatpush1.msra.mxu0 %v68
    %4915 = vmatprep.subr.mxu0 0.0
    %4916 = vmatpush1.msra.mxu0 %v69
    %4917 = vmatprep.subr.mxu0 0.0
    %4918 = vmatpush1.msra.mxu0 %v70
    %4919 = vmatprep.subr.mxu0 0.0
    %4920 = vmatpush1.msra.mxu0 %v71
    %4921 = vmatprep.subr.mxu0 0.0
    %4922 = vmatpush1.msra.mxu0 %v72
    %4923 = vmatprep.subr.mxu0 0.0
    %4924 = vmatpush1.msra.mxu0 %v73
    %4925 = vmatprep.subr.mxu0 0.0
    %4926 = vmatpush1.msra.mxu0 %v74
    %4927 = vmatprep.subr.mxu0 0.0
    %4928 = vmatpush1.msra.mxu0 %v75
    %4929 = vmatprep.subr.mxu0 0.0
    %4930 = vmatpush1.msra.mxu0 %v76
    %4931 = vmatprep.subr.mxu0 0.0
    %4932 = vmatpush1.msra.mxu0 %v77
    %4933 = vmatprep.subr.mxu0 0.0
    %4934 = vmatpush1.msra.mxu0 %v78
    %4935 = vmatprep.subr.mxu0 0.0
    %4936 = vmatpush1.msra.mxu0 %v79
    %4937 = vmatprep.subr.mxu0 0.0
    %4938 = vmatpush1.msra.mxu0 %v80
    %4939 = vmatprep.subr.mxu0 0.0
    %4940 = vmatpush1.msra.mxu0 %v81
    %4941 = vmatprep.subr.mxu0 0.0
    %4942 = vmatpush1.msra.mxu0 %v82
    %4943 = vmatprep.subr.mxu0 0.0
    %4944 = vmatpush1.msra.mxu0 %v83
    %4945 = vmatprep.subr.mxu0 0.0
    %4946 = vmatpush1.msra.mxu0 %v84
    %4947 = vmatprep.subr.mxu0 0.0
    %4948 = vmatpush1.msra.mxu0 %v85
    %4949 = vmatprep.subr.mxu0 0.0
    %4950 = vmatpush1.msra.mxu0 %v86
    %4951 = vmatprep.subr.mxu0 0.0
    %4952 = vmatpush1.msra.mxu0 %v87
    %4953 = vmatprep.subr.mxu0 0.0
    %4954 = vmatpush1.msra.mxu0 %v88
    %4955 = vmatprep.mubr.f32.mxu0 %v4888
    %4956 = vmatmul.mubr.f32.gmra.mrb[0].mxu0 %v4887
    %v4957 = vpop.f32.mrb[0].mxu0
    %v4958 = vadd.f32 %v2468, %v4957
    %v4959 = vpop.f32.mrb[0].mxu0
    %4960 = vdwg.mxu0
    %4961 = vmatprep.subr.mxu0 0.0
    %4962 = vmatpush1.msra.mxu0 %v89
    %4963 = vmatprep.subr.mxu0 0.0
    %4964 = vmatpush1.msra.mxu0 %v90
    %4965 = vmatprep.subr.mxu0 0.0
    %4966 = vmatpush1.msra.mxu0 %v91
    %4967 = vmatprep.subr.mxu0 0.0
    %4968 = vmatpush1.msra.mxu0 %v92
    %4969 = vmatprep.subr.mxu0 0.0
    %4970 = vmatpush1.msra.mxu0 %v93
    %4971 = vmatprep.subr.mxu0 0.0
    %4972 = vmatpush1.msra.mxu0 %v94
    %4973 = vmatprep.subr.mxu0 0.0
    %4974 = vmatpush1.msra.mxu0 %v95
    %4975 = vmatprep.subr.mxu0 0.0
    %4976 = vmatpush1.msra.mxu0 %v96
    %4977 = vmatprep.subr.mxu0 0.0
    %4978 = vmatpush1.msra.mxu0 %v97
    %4979 = vmatprep.subr.mxu0 0.0
    %4980 = vmatpush1.msra.mxu0 %v98
    %4981 = vmatprep.subr.mxu0 0.0
    %4982 = vmatpush1.msra.mxu0 %v99
    %4983 = vmatprep.subr.mxu0 0.0
    %4984 = vmatpush1.msra.mxu0 %v100
    %4985 = vmatprep.subr.mxu0 0.0
    %4986 = vmatpush1.msra.mxu0 %v101
    %4987 = vmatprep.subr.mxu0 0.0
    %4988 = vmatpush1.msra.mxu0 %v102
    %4989 = vmatprep.subr.mxu0 0.0
    %4990 = vmatpush1.msra.mxu0 %v103
    %4991 = vmatprep.subr.mxu0 0.0
    %4992 = vmatpush1.msra.mxu0 %v104
    %4993 = vmatprep.subr.mxu0 0.0
    %4994 = vmatpush1.msra.mxu0 %v105
    %4995 = vmatprep.subr.mxu0 0.0
    %4996 = vmatpush1.msra.mxu0 %v106
    %4997 = vmatprep.subr.mxu0 0.0
    %4998 = vmatpush1.msra.mxu0 %v107
    %4999 = vmatprep.subr.mxu0 0.0
    %5000 = vmatpush1.msra.mxu0 %v108
    %5001 = vmatprep.subr.mxu0 0.0
    %5002 = vmatpush1.msra.mxu0 %v109
    %5003 = vmatprep.subr.mxu0 0.0
    %5004 = vmatpush1.msra.mxu0 %v110
    %5005 = vmatprep.subr.mxu0 0.0
    %5006 = vmatpush1.msra.mxu0 %v111
    %5007 = vmatprep.subr.mxu0 0.0
    %5008 = vmatpush1.msra.mxu0 %v112
    %5009 = vmatprep.subr.mxu0 0.0
    %5010 = vmatpush1.msra.mxu0 %v113
    %5011 = vmatprep.subr.mxu0 0.0
    %5012 = vmatpush1.msra.mxu0 %v114
    %5013 = vmatprep.subr.mxu0 0.0
    %5014 = vmatpush1.msra.mxu0 %v115
    %5015 = vmatprep.subr.mxu0 0.0
    %5016 = vmatpush1.msra.mxu0 %v116
    %5017 = vmatprep.subr.mxu0 0.0
    %5018 = vmatpush1.msra.mxu0 %v117
    %5019 = vmatprep.subr.mxu0 0.0
    %5020 = vmatpush1.msra.mxu0 %v118
    %5021 = vmatprep.subr.mxu0 0.0
    %5022 = vmatpush1.msra.mxu0 %v119
    %5023 = vmatprep.subr.mxu0 0.0
    %5024 = vmatpush1.msra.mxu0 %v120
    %5025 = vmatprep.mubr.f32.mxu0 %v4890
    %5026 = vmatmul.mubr.f32.gmra.mrb[0].mxu0 %v4889
    %v5027 = vpop.f32.mrb[0].mxu0
    %v5028 = vadd.f32 %v4958, %v5027
    %v5029 = vpop.f32.mrb[0].mxu0
    %5030 = vdwg.mxu0
    %v5031 = vadd.f32 %v2610, %v5028
    %vm5032 = vcmask 91136
    %5033 = vst.msk [vmem:[#allocation5] sm:$0x3] %vm5032, %v5031
    // Predicated region
    $region46: #{tpu_custom_call.1} parent=1 // pred_check
      _
    $region47: #{tpu_custom_call.1} parent=1 // pred_check_branch
      %5035 = sbr.rel (0) target = $region49
    $region48: #{tpu_custom_call.1} parent=1 // pred_region
      %s5037 = ssub.s32 32, 32
      %5038 = vsyncadd [#allocation4], %s5037
      %s5040 = sshll.u32 [#allocation5], 4
      %s5041 = int_to_ptr.vmem [resolvable:$true] %s5040
      %5043 = dma.vmem_to_hbm [thread:$0]  %s5041, 32, %s10, [#allocation4]
    $region49: #{tpu_custom_call.1} parent=1 // pred_fallthru
      _
    // Predicated region
    $region50: #{tpu_custom_call.1} parent=1 // pred_check
      _
    $region51: #{tpu_custom_call.1} parent=1 // pred_check_branch
      %5045 = sbr.rel (0) target = $region53
    $region52: #{tpu_custom_call.1} parent=1 // pred_region
      %5046 = dma.done [#allocation4], 32
    $region53: #{tpu_custom_call.1} parent=1 // pred_fallthru
      _
    %5047 = vsyncpa [#allocation3], 1
    %5048 = vsyncpa [#allocation4], 1

</llo_original>
